<compile_context>
chip_gen: v7x
topology: tpu7x:2x2x1
jax: 0.10.0
libtpu: 0.0.40
codegen_flags: <defaults>
</compile_context>

<pallas_src>
import functools

import jax
import jax.numpy as jnp
from jax.experimental import pallas as pl
from jax.experimental.pallas import tpu as pltpu

_TILE_TARGET = 2048  # target rows of the flattened H*W dim per grid step


# -----------------------------------------------------------------------------
# Tiling / host-side layout helpers (pure data movement)
# -----------------------------------------------------------------------------
def _pick_tile(H, W):
    """Spatial tile (in flattened rows) = m*W with m an even divisor of H."""
    assert H % 2 == 0 and W % 4 == 0, "TODO(synk): odd H / W%4!=0 not supported"
    divs = [m for m in range(2, H + 1, 2) if H % m == 0]
    cands = [m for m in divs if m * W <= _TILE_TARGET]
    m = max(cands) if cands else min(divs)
    if m == H and len(divs) > 1:          # keep >=2 spatial tiles (megacore)
        m = max(d for d in divs if d < H)
    return m * W


def _prep(x):
    """(..., H, W, C) -> (..., (H+2)*W, 3C): zero-pad + horizontal 3-tap expand.

    Only the horizontal taps are expanded on the host (3x, bf16); the vertical
    taps become in-kernel row shifts of the flattened dim, so no 9x im2col
    tensor is materialized in HBM.
    """
    *lead, H, W, C = x.shape
    pad = [(0, 0)] * len(lead) + [(1, 1), (1, 1), (0, 0)]
    xp = jnp.pad(x, pad)                                   # (..., H+2, W+2, C)
    xh = jnp.concatenate([xp[..., :, dx:dx + W, :] for dx in range(3)], axis=-1)
    return xh.reshape(*lead, (H + 2) * W, 3 * C)           # (..., (H+2)*W, 3C)


def _taps(xm, xh, w_ref, W, TILE, widx=None):
    """3 vertical taps as row-shifted MXU dots, accumulated in f32."""
    x = jnp.concatenate([xm, xh], axis=0)                  # (TILE + 2W, 3Cin)

    def wget(dy):
        return w_ref[dy] if widx is None else w_ref[widx, dy]

    acc = jnp.dot(x[0:TILE], wget(0), preferred_element_type=jnp.float32)
    acc = acc + jnp.dot(x[W:W + TILE], wget(1), preferred_element_type=jnp.float32)
    acc = acc + jnp.dot(x[2 * W:2 * W + TILE], wget(2),
                        preferred_element_type=jnp.float32)
    return acc


# -----------------------------------------------------------------------------
# Pallas kernels
# -----------------------------------------------------------------------------
def _conv_kernel(xm_ref, xh_ref, w_ref, b_ref, o_ref, *, W, relu):
    # xm: (1,1,TILE,3Cin)  xh: (1,1,2W,3Cin)  w: (1,3,3Cin,Cout)  b: (1,1,Cout)
    TILE = o_ref.shape[-2]
    acc = _taps(xm_ref[0, 0], xh_ref[0, 0], w_ref[0], W, TILE) + b_ref[0]
    if relu:
        acc = jnp.maximum(acc, 0.0)
    o_ref[0, 0] = acc.astype(o_ref.dtype)


def _conv_fuse_kernel(xhm_ref, xhh_ref, xvm_ref, xvh_ref, res_ref, w_ref, b_ref,
                      o_ref, *, W):
    # fuse = out2h * out2v computed in-kernel; out = relu(conv(fuse)) + [out1h|out1v]
    TILE = o_ref.shape[-2]
    Cin = res_ref.shape[-1]
    xh = jnp.concatenate([xhm_ref[0], xhh_ref[0]], axis=0)
    xv = jnp.concatenate([xvm_ref[0], xvh_ref[0]], axis=0)
    x = xh * xv                                            # expanded(fuse)
    acc = jnp.dot(x[0:TILE], w_ref[0], preferred_element_type=jnp.float32)
    acc = acc + jnp.dot(x[W:W + TILE], w_ref[1], preferred_element_type=jnp.float32)
    acc = acc + jnp.dot(x[2 * W:2 * W + TILE], w_ref[2],
                        preferred_element_type=jnp.float32)
    acc = jnp.maximum(acc + b_ref[0], 0.0)
    res = jnp.concatenate([res_ref[0, 0], res_ref[1, 0]], axis=-1)
    acc = acc + res.astype(jnp.float32)                    # residual AFTER relu
    o_ref[0] = acc.astype(o_ref.dtype)
    del Cin


def _conv_head_kernel(xm_ref, xh_ref, w_ref, b_ref, wo_ref, bo_ref, o_ref, *, W):
    # conv5 (3x3, BN, no ReLU) + fused conv_out (1x1, 32->1, bias)
    TILE = o_ref.shape[-2]
    feat = _taps(xm_ref[0], xh_ref[0], w_ref, W, TILE) + b_ref[0]
    edge = jnp.sum(feat * wo_ref[...], axis=-1, keepdims=True) + bo_ref[...]
    o_ref[0] = edge.astype(o_ref.dtype)


# -----------------------------------------------------------------------------
# pallas_call wrappers
# -----------------------------------------------------------------------------
def conv3x3_bn(x, w3, b, *, relu=True):
    """x: (S,N,H,W,Cin) bf16; w3: (S,3,3Cin,Cout) bf16 (BN scale folded);
    b: (S,Cout) f32 -> (S,N,H,W,Cout) bf16."""
    S, N, H, W, Cin = x.shape
    Cout = w3.shape[-1]
    K3 = 3 * Cin
    TILE = _pick_tile(H, W)
    P = H * W
    n_tiles = P // TILE
    HALO = 2 * W
    step = TILE // HALO
    xf = _prep(x)                                          # (S,N,(H+2)*W,K3)
    b3 = b.reshape(S, 1, Cout).astype(jnp.float32)

    out = pl.pallas_call(
        functools.partial(_conv_kernel, W=W, relu=relu),
        out_shape=jax.ShapeDtypeStruct((S, N, P, Cout), x.dtype),
        grid=(S, N, n_tiles),
        in_specs=[
            pl.BlockSpec((1, 1, TILE, K3), lambda s, n, j: (s, n, j, 0)),
            pl.BlockSpec((1, 1, HALO, K3), lambda s, n, j: (s, n, (j + 1) * step, 0)),
            pl.BlockSpec((1, 3, K3, Cout), lambda s, n, j: (s, 0, 0, 0)),
            pl.BlockSpec((1, 1, Cout), lambda s, n, j: (s, 0, 0)),
        ],
        out_specs=pl.BlockSpec((1, 1, TILE, Cout), lambda s, n, j: (s, n, j, 0)),
        compiler_params=pltpu.CompilerParams(
            dimension_semantics=("parallel", "parallel", "parallel")),
    )(xf, xf, w3, b3)
    return out.reshape(S, N, H, W, Cout)


def conv3x3_fuse_residual(x2, x1, w3, b):
    """Stage 3: out3 = relu(conv3{h,v}(out2h*out2v)) + [out1h|out1v].
    x2, x1: (2,N,H,W,32) bf16; w3: (3,96,64) bf16; b: (64,) f32 -> (N,H,W,64)."""
    _, N, H, W, Cin = x2.shape
    Cout = w3.shape[-1]
    K3 = 3 * Cin
    TILE = _pick_tile(H, W)
    P = H * W
    n_tiles = P // TILE
    HALO = 2 * W
    step = TILE // HALO
    xfh = _prep(x2[0])                                     # (N,(H+2)*W,96)
    xfv = _prep(x2[1])
    x1f = x1.reshape(2, N, P, Cin)
    b3 = b.reshape(1, 1, Cout).astype(jnp.float32)
    hidx = lambda n, j: (n, (j + 1) * step, 0)

    out = pl.pallas_call(
        functools.partial(_conv_fuse_kernel, W=W),
        out_shape=jax.ShapeDtypeStruct((N, P, Cout), x2.dtype),
        grid=(N, n_tiles),
        in_specs=[
            pl.BlockSpec((1, TILE, K3), lambda n, j: (n, j, 0)),
            pl.BlockSpec((1, HALO, K3), hidx),
            pl.BlockSpec((1, TILE, K3), lambda n, j: (n, j, 0)),
            pl.BlockSpec((1, HALO, K3), hidx),
            pl.BlockSpec((2, 1, TILE, Cin), lambda n, j: (0, n, j, 0)),
            pl.BlockSpec((3, K3, Cout), lambda n, j: (0, 0, 0)),
            pl.BlockSpec((1, 1, Cout), lambda n, j: (0, 0, 0)),
        ],
        out_specs=pl.BlockSpec((1, TILE, Cout), lambda n, j: (n, j, 0)),
        compiler_params=pltpu.CompilerParams(
            dimension_semantics=("parallel", "parallel")),
    )(xfh, xfh, xfv, xfv, x1f, w3, b3)
    return out.reshape(N, H, W, Cout)


def conv3x3_head(x, w3, b, wo, bo):
    """conv5 (3x3, 64->32, BN, no ReLU) + fused conv_out (1x1, 32->1, bias).
    x: (N,H,W,64) bf16 -> (N, H*W, 1) f32."""
    N, H, W, Cin = x.shape
    C5 = w3.shape[-1]
    K3 = 3 * Cin
    TILE = _pick_tile(H, W)
    P = H * W
    n_tiles = P // TILE
    HALO = 2 * W
    step = TILE // HALO
    xf = _prep(x)
    b3 = b.reshape(1, 1, C5).astype(jnp.float32)

    return pl.pallas_call(
        functools.partial(_conv_head_kernel, W=W),
        out_shape=jax.ShapeDtypeStruct((N, P, 1), jnp.float32),
        grid=(N, n_tiles),
        in_specs=[
            pl.BlockSpec((1, TILE, K3), lambda n, j: (n, j, 0)),
            pl.BlockSpec((1, HALO, K3), lambda n, j: (n, (j + 1) * step, 0)),
            pl.BlockSpec((3, K3, C5), lambda n, j: (0, 0, 0)),
            pl.BlockSpec((1, 1, C5), lambda n, j: (0, 0, 0)),
            pl.BlockSpec((1, C5), lambda n, j: (0, 0)),
            pl.BlockSpec((1, 1), lambda n, j: (0, 0)),
        ],
        out_specs=pl.BlockSpec((1, TILE, 1), lambda n, j: (n, j, 0)),
        compiler_params=pltpu.CompilerParams(
            dimension_semantics=("parallel", "parallel")),
    )(xf, xf, w3, b3, wo, bo)


# -----------------------------------------------------------------------------
# Parameters (deterministic, inference-mode BN folded into weights/bias)
# -----------------------------------------------------------------------------
def _fold_bn_conv(key, cin, cout, eps=1e-5):
    kw, kg, kb = jax.random.split(key, 3)
    w = jax.random.normal(kw, (3, 3, cin, cout), jnp.float32) * 0.05  # (ky,kx,ci,co)
    gamma = 1.0 + 0.1 * jax.random.normal(kg, (cout,), jnp.float32)
    beta = 0.1 * jax.random.normal(kb, (cout,), jnp.float32)
    running_mean = jnp.zeros((cout,), jnp.float32)
    running_var = jnp.ones((cout,), jnp.float32)
    scale = gamma / jnp.sqrt(running_var + eps)
    bias = beta - running_mean * scale
    w3 = (w * scale).reshape(3, 3 * cin, cout)   # fold BN scale into weights
    return w3.astype(jnp.bfloat16), bias.astype(jnp.float32)


def init_sea_params(key):
    names_cin = [("conv1h", 32), ("conv2h", 32), ("conv3h", 32), ("conv4h", 32),
                 ("conv1v", 32), ("conv2v", 32), ("conv3v", 32), ("conv4v", 32),
                 ("conv5", 64)]
    keys = jax.random.split(key, len(names_cin) + 1)
    params = {name: _fold_bn_conv(k, cin, 32)
              for (name, cin), k in zip(names_cin, keys[:-1])}
    kw, kb = jax.random.split(keys[-1])
    params["conv_out"] = (
        (jax.random.normal(kw, (1, 32), jnp.float32) * 0.05),   # (1, Cin) row
        0.1 * jax.random.normal(kb, (1, 1), jnp.float32),
    )
    return params


# -----------------------------------------------------------------------------
# SEA forward
# -----------------------------------------------------------------------------
def sea_forward(params, left, down):
    """left, down: NCHW (N, 32, H, W) -> edge_out NCHW (N, 1, H, W)."""
    N, C, H, W = left.shape
    xl = jnp.transpose(left, (0, 2, 3, 1))                # NHWC
    xd = jnp.transpose(down, (0, 2, 3, 1))
    if down.shape[2:] != left.shape[2:]:
        # F.interpolate(mode='bilinear') equivalent (host glue).
        xd = jax.image.resize(xd, (N, H, W, C), method="bilinear")
    x0 = jnp.stack([xl, xd], axis=0).astype(jnp.bfloat16)  # (2,N,H,W,32): [h; v]

    # stage 1: conv1h | conv1v (weights selected per stream on the grid)
    w1 = jnp.stack([params["conv1h"][0], params["conv1v"][0]])
    b1 = jnp.stack([params["conv1h"][1], params["conv1v"][1]])
    out1 = conv3x3_bn(x0, w1, b1, relu=True)               # (2,N,H,W,32)

    # stage 2: conv2h | conv2v
    w2 = jnp.stack([params["conv2h"][0], params["conv2v"][0]])
    b2 = jnp.stack([params["conv2h"][1], params["conv2v"][1]])
    out2 = conv3x3_bn(out1, w2, b2, relu=True)             # (2,N,H,W,32)

    # stage 3: fuse = out2h*out2v (in-kernel), conv3h+conv3v widened to Cout=64,
    # residual adds of out1h/out1v fused in the epilogue.  `fuse` never stored.
    w3 = jnp.concatenate([params["conv3h"][0], params["conv3v"][0]], axis=-1)
    b3 = jnp.concatenate([params["conv3h"][1], params["conv3v"][1]], axis=-1)
    out3 = conv3x3_fuse_residual(out2, out1, w3, b3)       # (N,H,W,64)=[h|v]

    # stage 4: conv4h + conv4v as one block-diagonal (192 -> 64) conv
    w4h = params["conv4h"][0].reshape(3, 3, 32, 32)
    w4v = params["conv4v"][0].reshape(3, 3, 32, 32)
    z = jnp.zeros_like(w4h)
    w4 = jnp.concatenate([jnp.concatenate([w4h, z], axis=-1),
                          jnp.concatenate([z, w4v], axis=-1)], axis=-2)
    w4 = w4.reshape(1, 3, 3 * 64, 64)
    b4 = jnp.concatenate([params["conv4h"][1], params["conv4v"][1]], axis=-1)[None]
    out4 = conv3x3_bn(out3[None], w4, b4, relu=True)[0]    # (N,H,W,64)=[h|v]

    # stage 5: conv5 (no ReLU, matches torch) + fused conv_out 1x1
    wo, bo = params["conv_out"]
    edge = conv3x3_head(out4, params["conv5"][0], params["conv5"][1], wo, bo)
    return edge.reshape(N, H, W, 1).transpose(0, 3, 1, 2)  # NCHW (N,1,H,W)


# -----------------------------------------------------------------------------
if __name__ == "__main__":
    key = jax.random.PRNGKey(0)
    k_left, k_down, k_params = jax.random.split(key, 3)

    N, C, H, W = 2, 32, 16, 16
    left = jax.random.normal(k_left, (N, C, H, W), jnp.float32)
    down = jax.random.normal(k_down, (N, C, H, W), jnp.float32)
    params = init_sea_params(k_params)

    fwd = jax.jit(functools.partial(sea_forward, params))
    edge_out = fwd(left, down)
    jax.block_until_ready(edge_out)

    assert edge_out.shape == (N, 1, H, W), edge_out.shape
    assert bool(jnp.all(jnp.isfinite(edge_out)))
    print("KERNEL_OK")
</pallas_src>

<mosaic_0001>
module attributes {stable_mosaic.version = 11 : i64} {
  func.func @_conv_kernel(%arg0: i32, %arg1: i32, %arg2: i32, %arg3: memref<1x1x128x96xbf16, #tpu.memory_space<vmem>>, %arg4: memref<1x1x32x96xbf16, #tpu.memory_space<vmem>>, %arg5: memref<1x3x96x32xbf16, #tpu.memory_space<vmem>>, %arg6: memref<1x1x32xf32, #tpu.memory_space<vmem>>, %arg7: memref<1x1x128x32xbf16, #tpu.memory_space<vmem>>) attributes {dimension_semantics = [#tpu.dimension_semantics<parallel>, #tpu.dimension_semantics<parallel>, #tpu.dimension_semantics<parallel>], iteration_bounds = array<i64: 2, 2, 2>, scalar_prefetch = 0 : i64, scratch_operands = 0 : i64, tpu.core_type = #tpu.core_type<tc>, window_params = [{transform_indices = @transform_0, window_bounds = array<i64: 1, 1, 128, 96>}, {transform_indices = @transform_1, window_bounds = array<i64: 1, 1, 32, 96>}, {transform_indices = @transform_2, window_bounds = array<i64: 1, 3, 96, 32>}, {transform_indices = @transform_3, window_bounds = array<i64: 1, 1, 32>}, {transform_indices = @transform_4, window_bounds = array<i64: 1, 1, 128, 32>}]} {
    %c0 = arith.constant 0 : index
    %c0_0 = arith.constant 0 : index
    %c0_1 = arith.constant 0 : index
    %c0_2 = arith.constant 0 : index
    %0 = vector.load %arg3[%c0, %c0_0, %c0_1, %c0_2] : memref<1x1x128x96xbf16, #tpu.memory_space<vmem>>, vector<1x1x128x96xbf16>
    %1 = vector.shape_cast %0 : vector<1x1x128x96xbf16> to vector<128x96xbf16>
    %c0_3 = arith.constant 0 : index
    %c0_4 = arith.constant 0 : index
    %c0_5 = arith.constant 0 : index
    %c0_6 = arith.constant 0 : index
    %2 = vector.load %arg4[%c0_3, %c0_4, %c0_5, %c0_6] : memref<1x1x32x96xbf16, #tpu.memory_space<vmem>>, vector<1x1x32x96xbf16>
    %3 = vector.shape_cast %2 : vector<1x1x32x96xbf16> to vector<32x96xbf16>
    %c0_7 = arith.constant 0 : index
    %c0_8 = arith.constant 0 : index
    %c0_9 = arith.constant 0 : index
    %c0_10 = arith.constant 0 : index
    %4 = vector.load %arg5[%c0_7, %c0_8, %c0_9, %c0_10] : memref<1x3x96x32xbf16, #tpu.memory_space<vmem>>, vector<1x3x96x32xbf16>
    %5 = vector.shape_cast %4 : vector<1x3x96x32xbf16> to vector<3x96x32xbf16>
    %6 = tpu.concatenate %1, %3 in 0 : vector<128x96xbf16>, vector<32x96xbf16> -> vector<160x96xbf16>
    %7 = vector.extract_strided_slice %6 {offsets = [0, 0], sizes = [128, 96], strides = [1, 1]} : vector<160x96xbf16> to vector<128x96xbf16>
    %8 = vector.extract_strided_slice %5 {offsets = [0, 0, 0], sizes = [1, 96, 32], strides = [1, 1, 1]} : vector<3x96x32xbf16> to vector<1x96x32xbf16>
    %9 = vector.shape_cast %8 : vector<1x96x32xbf16> to vector<96x32xbf16>
    %cst = arith.constant dense<0.000000e+00> : vector<128x32xf32>
    %10 = tpu.matmul %7, %9, %cst {dimension_numbers = #tpu.dot_dimension_numbers<[1], [0], [0], [1], [0, 0, 1, 1], [], []>} : vector<128x96xbf16>, vector<96x32xbf16>, vector<128x32xf32> -> vector<128x32xf32>
    %11 = vector.extract_strided_slice %6 {offsets = [16, 0], sizes = [128, 96], strides = [1, 1]} : vector<160x96xbf16> to vector<128x96xbf16>
    %12 = vector.extract_strided_slice %5 {offsets = [1, 0, 0], sizes = [1, 96, 32], strides = [1, 1, 1]} : vector<3x96x32xbf16> to vector<1x96x32xbf16>
    %13 = vector.shape_cast %12 : vector<1x96x32xbf16> to vector<96x32xbf16>
    %cst_11 = arith.constant dense<0.000000e+00> : vector<128x32xf32>
    %14 = tpu.matmul %11, %13, %cst_11 {dimension_numbers = #tpu.dot_dimension_numbers<[1], [0], [0], [1], [0, 0, 1, 1], [], []>} : vector<128x96xbf16>, vector<96x32xbf16>, vector<128x32xf32> -> vector<128x32xf32>
    %15 = arith.addf %10, %14 : vector<128x32xf32>
    %16 = vector.extract_strided_slice %6 {offsets = [32, 0], sizes = [128, 96], strides = [1, 1]} : vector<160x96xbf16> to vector<128x96xbf16>
    %17 = vector.extract_strided_slice %5 {offsets = [2, 0, 0], sizes = [1, 96, 32], strides = [1, 1, 1]} : vector<3x96x32xbf16> to vector<1x96x32xbf16>
    %18 = vector.shape_cast %17 : vector<1x96x32xbf16> to vector<96x32xbf16>
    %cst_12 = arith.constant dense<0.000000e+00> : vector<128x32xf32>
    %19 = tpu.matmul %16, %18, %cst_12 {dimension_numbers = #tpu.dot_dimension_numbers<[1], [0], [0], [1], [0, 0, 1, 1], [], []>} : vector<128x96xbf16>, vector<96x32xbf16>, vector<128x32xf32> -> vector<128x32xf32>
    %20 = arith.addf %15, %19 : vector<128x32xf32>
    %c0_13 = arith.constant 0 : index
    %c0_14 = arith.constant 0 : index
    %c0_15 = arith.constant 0 : index
    %21 = vector.load %arg6[%c0_13, %c0_14, %c0_15] : memref<1x1x32xf32, #tpu.memory_space<vmem>>, vector<1x1x32xf32>
    %22 = vector.shape_cast %21 : vector<1x1x32xf32> to vector<1x32xf32>
    %23 = vector.broadcast %22 : vector<1x32xf32> to vector<128x32xf32>
    %24 = arith.addf %20, %23 : vector<128x32xf32>
    %cst_16 = arith.constant 0.000000e+00 : f32
    %25 = vector.broadcast %cst_16 : f32 to vector<128x32xf32>
    %26 = arith.maximumf %24, %25 : vector<128x32xf32>
    %27 = arith.truncf %26 : vector<128x32xf32> to vector<128x32xbf16>
    %c0_17 = arith.constant 0 : index
    %c0_18 = arith.constant 0 : index
    %c0_19 = arith.constant 0 : index
    %c0_20 = arith.constant 0 : index
    %28 = vector.load %arg7[%c0_17, %c0_18, %c0_19, %c0_20] : memref<1x1x128x32xbf16, #tpu.memory_space<vmem>>, vector<1x1x128x32xbf16>
    %29 = vector.shape_cast %28 : vector<1x1x128x32xbf16> to vector<128x32xbf16>
    %30 = vector.shape_cast %27 : vector<128x32xbf16> to vector<1x1x128x32xbf16>
    tpu.vector_store %arg7[%c0_17, %c0_18, %c0_19, %c0_20], %30 {strides = array<i32>} : memref<1x1x128x32xbf16, #tpu.memory_space<vmem>>, vector<1x1x128x32xbf16>,
    return
  }
  func.func @transform_0(%arg0: i32, %arg1: i32, %arg2: i32) -> (i32, i32, i32, i32) {
    %c0_i32 = arith.constant 0 : i32
    %c0_i32_0 = arith.constant 0 : i32
    return %arg0, %arg1, %arg2, %c0_i32 : i32, i32, i32, i32
  }
  func.func @transform_1(%arg0: i32, %arg1: i32, %arg2: i32) -> (i32, i32, i32, i32) {
    %c1_i32 = arith.constant 1 : i32
    %0 = arith.addi %arg2, %c1_i32 : i32
    %c4_i32 = arith.constant 4 : i32
    %1 = arith.muli %0, %c4_i32 : i32
    %c0_i32 = arith.constant 0 : i32
    %c0_i32_0 = arith.constant 0 : i32
    return %arg0, %arg1, %1, %c0_i32 : i32, i32, i32, i32
  }
  func.func @transform_2(%arg0: i32, %arg1: i32, %arg2: i32) -> (i32, i32, i32, i32) {
    %c0_i32 = arith.constant 0 : i32
    %c0_i32_0 = arith.constant 0 : i32
    %c0_i32_1 = arith.constant 0 : i32
    %c0_i32_2 = arith.constant 0 : i32
    return %arg0, %c0_i32, %c0_i32_0, %c0_i32_1 : i32, i32, i32, i32
  }
  func.func @transform_3(%arg0: i32, %arg1: i32, %arg2: i32) -> (i32, i32, i32) {
    %c0_i32 = arith.constant 0 : i32
    %c0_i32_0 = arith.constant 0 : i32
    %c0_i32_1 = arith.constant 0 : i32
    return %arg0, %c0_i32, %c0_i32_0 : i32, i32, i32
  }
  func.func @transform_4(%arg0: i32, %arg1: i32, %arg2: i32) -> (i32, i32, i32, i32) {
    %c0_i32 = arith.constant 0 : i32
    %c0_i32_0 = arith.constant 0 : i32
    return %arg0, %arg1, %arg2, %c0_i32 : i32, i32, i32, i32
  }
}

module attributes {stable_mosaic.version = 11 : i64} {
  func.func @_conv_fuse_kernel(%arg0: i32, %arg1: i32, %arg2: memref<1x128x96xbf16, #tpu.memory_space<vmem>>, %arg3: memref<1x32x96xbf16, #tpu.memory_space<vmem>>, %arg4: memref<1x128x96xbf16, #tpu.memory_space<vmem>>, %arg5: memref<1x32x96xbf16, #tpu.memory_space<vmem>>, %arg6: memref<2x1x128x32xbf16, #tpu.memory_space<vmem>>, %arg7: memref<3x96x64xbf16, #tpu.memory_space<vmem>>, %arg8: memref<1x1x64xf32, #tpu.memory_space<vmem>>, %arg9: memref<1x128x64xbf16, #tpu.memory_space<vmem>>) attributes {dimension_semantics = [#tpu.dimension_semantics<parallel>, #tpu.dimension_semantics<parallel>], iteration_bounds = array<i64: 2, 2>, scalar_prefetch = 0 : i64, scratch_operands = 0 : i64, tpu.core_type = #tpu.core_type<tc>, window_params = [{transform_indices = @transform_0, window_bounds = array<i64: 1, 128, 96>}, {transform_indices = @transform_1, window_bounds = array<i64: 1, 32, 96>}, {transform_indices = @transform_2, window_bounds = array<i64: 1, 128, 96>}, {transform_indices = @transform_3, window_bounds = array<i64: 1, 32, 96>}, {transform_indices = @transform_4, window_bounds = array<i64: 2, 1, 128, 32>}, {pipeline_mode = #tpu.pipeline_mode<synchronous>, transform_indices = @transform_5, window_bounds = array<i64: 3, 96, 64>}, {pipeline_mode = #tpu.pipeline_mode<synchronous>, transform_indices = @transform_6, window_bounds = array<i64: 1, 1, 64>}, {transform_indices = @transform_7, window_bounds = array<i64: 1, 128, 64>}]} {
    %c0 = arith.constant 0 : index
    %c0_0 = arith.constant 0 : index
    %c0_1 = arith.constant 0 : index
    %0 = vector.load %arg2[%c0, %c0_0, %c0_1] : memref<1x128x96xbf16, #tpu.memory_space<vmem>>, vector<1x128x96xbf16>
    %1 = vector.shape_cast %0 : vector<1x128x96xbf16> to vector<128x96xbf16>
    %c0_2 = arith.constant 0 : index
    %c0_3 = arith.constant 0 : index
    %c0_4 = arith.constant 0 : index
    %2 = vector.load %arg3[%c0_2, %c0_3, %c0_4] : memref<1x32x96xbf16, #tpu.memory_space<vmem>>, vector<1x32x96xbf16>
    %3 = vector.shape_cast %2 : vector<1x32x96xbf16> to vector<32x96xbf16>
    %4 = tpu.concatenate %1, %3 in 0 : vector<128x96xbf16>, vector<32x96xbf16> -> vector<160x96xbf16>
    %c0_5 = arith.constant 0 : index
    %c0_6 = arith.constant 0 : index
    %c0_7 = arith.constant 0 : index
    %5 = vector.load %arg4[%c0_5, %c0_6, %c0_7] : memref<1x128x96xbf16, #tpu.memory_space<vmem>>, vector<1x128x96xbf16>
    %6 = vector.shape_cast %5 : vector<1x128x96xbf16> to vector<128x96xbf16>
    %c0_8 = arith.constant 0 : index
    %c0_9 = arith.constant 0 : index
    %c0_10 = arith.constant 0 : index
    %7 = vector.load %arg5[%c0_8, %c0_9, %c0_10] : memref<1x32x96xbf16, #tpu.memory_space<vmem>>, vector<1x32x96xbf16>
    %8 = vector.shape_cast %7 : vector<1x32x96xbf16> to vector<32x96xbf16>
    %9 = tpu.concatenate %6, %8 in 0 : vector<128x96xbf16>, vector<32x96xbf16> -> vector<160x96xbf16>
    %10 = arith.mulf %4, %9 : vector<160x96xbf16>
    %11 = vector.extract_strided_slice %10 {offsets = [0, 0], sizes = [128, 96], strides = [1, 1]} : vector<160x96xbf16> to vector<128x96xbf16>
    %c0_11 = arith.constant 0 : index
    %c0_12 = arith.constant 0 : index
    %c0_13 = arith.constant 0 : index
    %12 = vector.load %arg7[%c0_11, %c0_12, %c0_13] : memref<3x96x64xbf16, #tpu.memory_space<vmem>>, vector<1x96x64xbf16>
    %13 = vector.shape_cast %12 : vector<1x96x64xbf16> to vector<96x64xbf16>
    %cst = arith.constant dense<0.000000e+00> : vector<128x64xf32>
    %14 = tpu.matmul %11, %13, %cst {dimension_numbers = #tpu.dot_dimension_numbers<[1], [0], [0], [1], [0, 0, 1, 1], [], []>} : vector<128x96xbf16>, vector<96x64xbf16>, vector<128x64xf32> -> vector<128x64xf32>
    %15 = vector.extract_strided_slice %10 {offsets = [16, 0], sizes = [128, 96], strides = [1, 1]} : vector<160x96xbf16> to vector<128x96xbf16>
    %c1 = arith.constant 1 : index
    %c0_14 = arith.constant 0 : index
    %c0_15 = arith.constant 0 : index
    %16 = vector.load %arg7[%c1, %c0_14, %c0_15] : memref<3x96x64xbf16, #tpu.memory_space<vmem>>, vector<1x96x64xbf16>
    %17 = vector.shape_cast %16 : vector<1x96x64xbf16> to vector<96x64xbf16>
    %cst_16 = arith.constant dense<0.000000e+00> : vector<128x64xf32>
    %18 = tpu.matmul %15, %17, %cst_16 {dimension_numbers = #tpu.dot_dimension_numbers<[1], [0], [0], [1], [0, 0, 1, 1], [], []>} : vector<128x96xbf16>, vector<96x64xbf16>, vector<128x64xf32> -> vector<128x64xf32>
    %19 = arith.addf %14, %18 : vector<128x64xf32>
    %20 = vector.extract_strided_slice %10 {offsets = [32, 0], sizes = [128, 96], strides = [1, 1]} : vector<160x96xbf16> to vector<128x96xbf16>
    %c2 = arith.constant 2 : index
    %c0_17 = arith.constant 0 : index
    %c0_18 = arith.constant 0 : index
    %21 = vector.load %arg7[%c2, %c0_17, %c0_18] : memref<3x96x64xbf16, #tpu.memory_space<vmem>>, vector<1x96x64xbf16>
    %22 = vector.shape_cast %21 : vector<1x96x64xbf16> to vector<96x64xbf16>
    %cst_19 = arith.constant dense<0.000000e+00> : vector<128x64xf32>
    %23 = tpu.matmul %20, %22, %cst_19 {dimension_numbers = #tpu.dot_dimension_numbers<[1], [0], [0], [1], [0, 0, 1, 1], [], []>} : vector<128x96xbf16>, vector<96x64xbf16>, vector<128x64xf32> -> vector<128x64xf32>
    %24 = arith.addf %19, %23 : vector<128x64xf32>
    %c0_20 = arith.constant 0 : index
    %c0_21 = arith.constant 0 : index
    %c0_22 = arith.constant 0 : index
    %25 = vector.load %arg8[%c0_20, %c0_21, %c0_22] : memref<1x1x64xf32, #tpu.memory_space<vmem>>, vector<1x1x64xf32>
    %26 = vector.shape_cast %25 : vector<1x1x64xf32> to vector<1x64xf32>
    %27 = vector.broadcast %26 : vector<1x64xf32> to vector<128x64xf32>
    %28 = arith.addf %24, %27 : vector<128x64xf32>
    %cst_23 = arith.constant 0.000000e+00 : f32
    %29 = vector.broadcast %cst_23 : f32 to vector<128x64xf32>
    %30 = arith.maximumf %28, %29 : vector<128x64xf32>
    %c0_24 = arith.constant 0 : index
    %c0_25 = arith.constant 0 : index
    %c0_26 = arith.constant 0 : index
    %c0_27 = arith.constant 0 : index
    %31 = vector.load %arg6[%c0_24, %c0_25, %c0_26, %c0_27] : memref<2x1x128x32xbf16, #tpu.memory_space<vmem>>, vector<1x1x128x32xbf16>
    %32 = vector.shape_cast %31 : vector<1x1x128x32xbf16> to vector<128x32xbf16>
    %c1_28 = arith.constant 1 : index
    %c0_29 = arith.constant 0 : index
    %c0_30 = arith.constant 0 : index
    %c0_31 = arith.constant 0 : index
    %33 = vector.load %arg6[%c1_28, %c0_29, %c0_30, %c0_31] : memref<2x1x128x32xbf16, #tpu.memory_space<vmem>>, vector<1x1x128x32xbf16>
    %34 = vector.shape_cast %33 : vector<1x1x128x32xbf16> to vector<128x32xbf16>
    %35 = tpu.concatenate %32, %34 in 1 : vector<128x32xbf16>, vector<128x32xbf16> -> vector<128x64xbf16>
    %36 = arith.extf %35 : vector<128x64xbf16> to vector<128x64xf32>
    %37 = arith.addf %30, %36 : vector<128x64xf32>
    %38 = arith.truncf %37 : vector<128x64xf32> to vector<128x64xbf16>
    %c0_32 = arith.constant 0 : index
    %c0_33 = arith.constant 0 : index
    %c0_34 = arith.constant 0 : index
    %39 = vector.load %arg9[%c0_32, %c0_33, %c0_34] : memref<1x128x64xbf16, #tpu.memory_space<vmem>>, vector<1x128x64xbf16>
    %40 = vector.shape_cast %39 : vector<1x128x64xbf16> to vector<128x64xbf16>
    %41 = vector.shape_cast %38 : vector<128x64xbf16> to vector<1x128x64xbf16>
    tpu.vector_store %arg9[%c0_32, %c0_33, %c0_34], %41 {strides = array<i32>} : memref<1x128x64xbf16, #tpu.memory_space<vmem>>, vector<1x128x64xbf16>,
    return
  }
  func.func @transform_0(%arg0: i32, %arg1: i32) -> (i32, i32, i32) {
    %c0_i32 = arith.constant 0 : i32
    %c0_i32_0 = arith.constant 0 : i32
    return %arg0, %arg1, %c0_i32 : i32, i32, i32
  }
  func.func @transform_1(%arg0: i32, %arg1: i32) -> (i32, i32, i32) {
    %c1_i32 = arith.constant 1 : i32
    %0 = arith.addi %arg1, %c1_i32 : i32
    %c4_i32 = arith.constant 4 : i32
    %1 = arith.muli %0, %c4_i32 : i32
    %c0_i32 = arith.constant 0 : i32
    %c0_i32_0 = arith.constant 0 : i32
    return %arg0, %1, %c0_i32 : i32, i32, i32
  }
  func.func @transform_2(%arg0: i32, %arg1: i32) -> (i32, i32, i32) {
    %c0_i32 = arith.constant 0 : i32
    %c0_i32_0 = arith.constant 0 : i32
    return %arg0, %arg1, %c0_i32 : i32, i32, i32
  }
  func.func @transform_3(%arg0: i32, %arg1: i32) -> (i32, i32, i32) {
    %c1_i32 = arith.constant 1 : i32
    %0 = arith.addi %arg1, %c1_i32 : i32
    %c4_i32 = arith.constant 4 : i32
    %1 = arith.muli %0, %c4_i32 : i32
    %c0_i32 = arith.constant 0 : i32
    %c0_i32_0 = arith.constant 0 : i32
    return %arg0, %1, %c0_i32 : i32, i32, i32
  }
  func.func @transform_4(%arg0: i32, %arg1: i32) -> (i32, i32, i32, i32) {
    %c0_i32 = arith.constant 0 : i32
    %c0_i32_0 = arith.constant 0 : i32
    %c0_i32_1 = arith.constant 0 : i32
    return %c0_i32, %arg0, %arg1, %c0_i32_0 : i32, i32, i32, i32
  }
  func.func @transform_5(%arg0: i32, %arg1: i32) -> (i32, i32, i32) {
    %c0_i32 = arith.constant 0 : i32
    %c0_i32_0 = arith.constant 0 : i32
    %c0_i32_1 = arith.constant 0 : i32
    %c0_i32_2 = arith.constant 0 : i32
    return %c0_i32, %c0_i32_0, %c0_i32_1 : i32, i32, i32
  }
  func.func @transform_6(%arg0: i32, %arg1: i32) -> (i32, i32, i32) {
    %c0_i32 = arith.constant 0 : i32
    %c0_i32_0 = arith.constant 0 : i32
    %c0_i32_1 = arith.constant 0 : i32
    %c0_i32_2 = arith.constant 0 : i32
    return %c0_i32, %c0_i32_0, %c0_i32_1 : i32, i32, i32
  }
  func.func @transform_7(%arg0: i32, %arg1: i32) -> (i32, i32, i32) {
    %c0_i32 = arith.constant 0 : i32
    %c0_i32_0 = arith.constant 0 : i32
    return %arg0, %arg1, %c0_i32 : i32, i32, i32
  }
}

module attributes {stable_mosaic.version = 11 : i64} {
  func.func @_conv_kernel(%arg0: i32, %arg1: i32, %arg2: i32, %arg3: memref<1x1x128x192xbf16, #tpu.memory_space<vmem>>, %arg4: memref<1x1x32x192xbf16, #tpu.memory_space<vmem>>, %arg5: memref<1x3x192x64xbf16, #tpu.memory_space<vmem>>, %arg6: memref<1x1x64xf32, #tpu.memory_space<vmem>>, %arg7: memref<1x1x128x64xbf16, #tpu.memory_space<vmem>>) attributes {dimension_semantics = [#tpu.dimension_semantics<parallel>, #tpu.dimension_semantics<parallel>, #tpu.dimension_semantics<parallel>], iteration_bounds = array<i64: 1, 2, 2>, scalar_prefetch = 0 : i64, scratch_operands = 0 : i64, tpu.core_type = #tpu.core_type<tc>, window_params = [{transform_indices = @transform_0, window_bounds = array<i64: 1, 1, 128, 192>}, {transform_indices = @transform_1, window_bounds = array<i64: 1, 1, 32, 192>}, {transform_indices = @transform_2, window_bounds = array<i64: 1, 3, 192, 64>}, {transform_indices = @transform_3, window_bounds = array<i64: 1, 1, 64>}, {transform_indices = @transform_4, window_bounds = array<i64: 1, 1, 128, 64>}]} {
    %c0 = arith.constant 0 : index
    %c0_0 = arith.constant 0 : index
    %c0_1 = arith.constant 0 : index
    %c0_2 = arith.constant 0 : index
    %0 = vector.load %arg3[%c0, %c0_0, %c0_1, %c0_2] : memref<1x1x128x192xbf16, #tpu.memory_space<vmem>>, vector<1x1x128x192xbf16>
    %1 = vector.shape_cast %0 : vector<1x1x128x192xbf16> to vector<128x192xbf16>
    %c0_3 = arith.constant 0 : index
    %c0_4 = arith.constant 0 : index
    %c0_5 = arith.constant 0 : index
    %c0_6 = arith.constant 0 : index
    %2 = vector.load %arg4[%c0_3, %c0_4, %c0_5, %c0_6] : memref<1x1x32x192xbf16, #tpu.memory_space<vmem>>, vector<1x1x32x192xbf16>
    %3 = vector.shape_cast %2 : vector<1x1x32x192xbf16> to vector<32x192xbf16>
    %c0_7 = arith.constant 0 : index
    %c0_8 = arith.constant 0 : index
    %c0_9 = arith.constant 0 : index
    %c0_10 = arith.constant 0 : index
    %4 = vector.load %arg5[%c0_7, %c0_8, %c0_9, %c0_10] : memref<1x3x192x64xbf16, #tpu.memory_space<vmem>>, vector<1x3x192x64xbf16>
    %5 = vector.shape_cast %4 : vector<1x3x192x64xbf16> to vector<3x192x64xbf16>
    %6 = tpu.concatenate %1, %3 in 0 : vector<128x192xbf16>, vector<32x192xbf16> -> vector<160x192xbf16>
    %7 = vector.extract_strided_slice %6 {offsets = [0, 0], sizes = [128, 192], strides = [1, 1]} : vector<160x192xbf16> to vector<128x192xbf16>
    %8 = vector.extract_strided_slice %5 {offsets = [0, 0, 0], sizes = [1, 192, 64], strides = [1, 1, 1]} : vector<3x192x64xbf16> to vector<1x192x64xbf16>
    %9 = vector.shape_cast %8 : vector<1x192x64xbf16> to vector<192x64xbf16>
    %cst = arith.constant dense<0.000000e+00> : vector<128x64xf32>
    %10 = tpu.matmul %7, %9, %cst {dimension_numbers = #tpu.dot_dimension_numbers<[1], [0], [0], [1], [0, 0, 1, 1], [], []>} : vector<128x192xbf16>, vector<192x64xbf16>, vector<128x64xf32> -> vector<128x64xf32>
    %11 = vector.extract_strided_slice %6 {offsets = [16, 0], sizes = [128, 192], strides = [1, 1]} : vector<160x192xbf16> to vector<128x192xbf16>
    %12 = vector.extract_strided_slice %5 {offsets = [1, 0, 0], sizes = [1, 192, 64], strides = [1, 1, 1]} : vector<3x192x64xbf16> to vector<1x192x64xbf16>
    %13 = vector.shape_cast %12 : vector<1x192x64xbf16> to vector<192x64xbf16>
    %cst_11 = arith.constant dense<0.000000e+00> : vector<128x64xf32>
    %14 = tpu.matmul %11, %13, %cst_11 {dimension_numbers = #tpu.dot_dimension_numbers<[1], [0], [0], [1], [0, 0, 1, 1], [], []>} : vector<128x192xbf16>, vector<192x64xbf16>, vector<128x64xf32> -> vector<128x64xf32>
    %15 = arith.addf %10, %14 : vector<128x64xf32>
    %16 = vector.extract_strided_slice %6 {offsets = [32, 0], sizes = [128, 192], strides = [1, 1]} : vector<160x192xbf16> to vector<128x192xbf16>
    %17 = vector.extract_strided_slice %5 {offsets = [2, 0, 0], sizes = [1, 192, 64], strides = [1, 1, 1]} : vector<3x192x64xbf16> to vector<1x192x64xbf16>
    %18 = vector.shape_cast %17 : vector<1x192x64xbf16> to vector<192x64xbf16>
    %cst_12 = arith.constant dense<0.000000e+00> : vector<128x64xf32>
    %19 = tpu.matmul %16, %18, %cst_12 {dimension_numbers = #tpu.dot_dimension_numbers<[1], [0], [0], [1], [0, 0, 1, 1], [], []>} : vector<128x192xbf16>, vector<192x64xbf16>, vector<128x64xf32> -> vector<128x64xf32>
    %20 = arith.addf %15, %19 : vector<128x64xf32>
    %c0_13 = arith.constant 0 : index
    %c0_14 = arith.constant 0 : index
    %c0_15 = arith.constant 0 : index
    %21 = vector.load %arg6[%c0_13, %c0_14, %c0_15] : memref<1x1x64xf32, #tpu.memory_space<vmem>>, vector<1x1x64xf32>
    %22 = vector.shape_cast %21 : vector<1x1x64xf32> to vector<1x64xf32>
    %23 = vector.broadcast %22 : vector<1x64xf32> to vector<128x64xf32>
    %24 = arith.addf %20, %23 : vector<128x64xf32>
    %cst_16 = arith.constant 0.000000e+00 : f32
    %25 = vector.broadcast %cst_16 : f32 to vector<128x64xf32>
    %26 = arith.maximumf %24, %25 : vector<128x64xf32>
    %27 = arith.truncf %26 : vector<128x64xf32> to vector<128x64xbf16>
    %c0_17 = arith.constant 0 : index
    %c0_18 = arith.constant 0 : index
    %c0_19 = arith.constant 0 : index
    %c0_20 = arith.constant 0 : index
    %28 = vector.load %arg7[%c0_17, %c0_18, %c0_19, %c0_20] : memref<1x1x128x64xbf16, #tpu.memory_space<vmem>>, vector<1x1x128x64xbf16>
    %29 = vector.shape_cast %28 : vector<1x1x128x64xbf16> to vector<128x64xbf16>
    %30 = vector.shape_cast %27 : vector<128x64xbf16> to vector<1x1x128x64xbf16>
    tpu.vector_store %arg7[%c0_17, %c0_18, %c0_19, %c0_20], %30 {strides = array<i32>} : memref<1x1x128x64xbf16, #tpu.memory_space<vmem>>, vector<1x1x128x64xbf16>,
    return
  }
  func.func @transform_0(%arg0: i32, %arg1: i32, %arg2: i32) -> (i32, i32, i32, i32) {
    %c0_i32 = arith.constant 0 : i32
    %c0_i32_0 = arith.constant 0 : i32
    return %arg0, %arg1, %arg2, %c0_i32 : i32, i32, i32, i32
  }
  func.func @transform_1(%arg0: i32, %arg1: i32, %arg2: i32) -> (i32, i32, i32, i32) {
    %c1_i32 = arith.constant 1 : i32
    %0 = arith.addi %arg2, %c1_i32 : i32
    %c4_i32 = arith.constant 4 : i32
    %1 = arith.muli %0, %c4_i32 : i32
    %c0_i32 = arith.constant 0 : i32
    %c0_i32_0 = arith.constant 0 : i32
    return %arg0, %arg1, %1, %c0_i32 : i32, i32, i32, i32
  }
  func.func @transform_2(%arg0: i32, %arg1: i32, %arg2: i32) -> (i32, i32, i32, i32) {
    %c0_i32 = arith.constant 0 : i32
    %c0_i32_0 = arith.constant 0 : i32
    %c0_i32_1 = arith.constant 0 : i32
    %c0_i32_2 = arith.constant 0 : i32
    return %arg0, %c0_i32, %c0_i32_0, %c0_i32_1 : i32, i32, i32, i32
  }
  func.func @transform_3(%arg0: i32, %arg1: i32, %arg2: i32) -> (i32, i32, i32) {
    %c0_i32 = arith.constant 0 : i32
    %c0_i32_0 = arith.constant 0 : i32
    %c0_i32_1 = arith.constant 0 : i32
    return %arg0, %c0_i32, %c0_i32_0 : i32, i32, i32
  }
  func.func @transform_4(%arg0: i32, %arg1: i32, %arg2: i32) -> (i32, i32, i32, i32) {
    %c0_i32 = arith.constant 0 : i32
    %c0_i32_0 = arith.constant 0 : i32
    return %arg0, %arg1, %arg2, %c0_i32 : i32, i32, i32, i32
  }
}

module attributes {stable_mosaic.version = 11 : i64} {
  func.func @_conv_head_kernel(%arg0: i32, %arg1: i32, %arg2: memref<1x128x192xbf16, #tpu.memory_space<vmem>>, %arg3: memref<1x32x192xbf16, #tpu.memory_space<vmem>>, %arg4: memref<3x192x32xbf16, #tpu.memory_space<vmem>>, %arg5: memref<1x1x32xf32, #tpu.memory_space<vmem>>, %arg6: memref<1x32xf32, #tpu.memory_space<vmem>>, %arg7: memref<1x1xf32, #tpu.memory_space<vmem>>, %arg8: memref<1x128x1xf32, #tpu.memory_space<vmem>>) attributes {dimension_semantics = [#tpu.dimension_semantics<parallel>, #tpu.dimension_semantics<parallel>], iteration_bounds = array<i64: 2, 2>, scalar_prefetch = 0 : i64, scratch_operands = 0 : i64, tpu.core_type = #tpu.core_type<tc>, window_params = [{transform_indices = @transform_0, window_bounds = array<i64: 1, 128, 192>}, {transform_indices = @transform_1, window_bounds = array<i64: 1, 32, 192>}, {pipeline_mode = #tpu.pipeline_mode<synchronous>, transform_indices = @transform_2, window_bounds = array<i64: 3, 192, 32>}, {pipeline_mode = #tpu.pipeline_mode<synchronous>, transform_indices = @transform_3, window_bounds = array<i64: 1, 1, 32>}, {pipeline_mode = #tpu.pipeline_mode<synchronous>, transform_indices = @transform_4, window_bounds = array<i64: 1, 32>}, {pipeline_mode = #tpu.pipeline_mode<synchronous>, transform_indices = @transform_5, window_bounds = array<i64: 1, 1>}, {transform_indices = @transform_6, window_bounds = array<i64: 1, 128, 1>}]} {
    %c0 = arith.constant 0 : index
    %c0_0 = arith.constant 0 : index
    %c0_1 = arith.constant 0 : index
    %0 = vector.load %arg2[%c0, %c0_0, %c0_1] : memref<1x128x192xbf16, #tpu.memory_space<vmem>>, vector<1x128x192xbf16>
    %1 = vector.shape_cast %0 : vector<1x128x192xbf16> to vector<128x192xbf16>
    %c0_2 = arith.constant 0 : index
    %c0_3 = arith.constant 0 : index
    %c0_4 = arith.constant 0 : index
    %2 = vector.load %arg3[%c0_2, %c0_3, %c0_4] : memref<1x32x192xbf16, #tpu.memory_space<vmem>>, vector<1x32x192xbf16>
    %3 = vector.shape_cast %2 : vector<1x32x192xbf16> to vector<32x192xbf16>
    %4 = tpu.concatenate %1, %3 in 0 : vector<128x192xbf16>, vector<32x192xbf16> -> vector<160x192xbf16>
    %5 = vector.extract_strided_slice %4 {offsets = [0, 0], sizes = [128, 192], strides = [1, 1]} : vector<160x192xbf16> to vector<128x192xbf16>
    %c0_5 = arith.constant 0 : index
    %c0_6 = arith.constant 0 : index
    %c0_7 = arith.constant 0 : index
    %6 = vector.load %arg4[%c0_5, %c0_6, %c0_7] : memref<3x192x32xbf16, #tpu.memory_space<vmem>>, vector<1x192x32xbf16>
    %7 = vector.shape_cast %6 : vector<1x192x32xbf16> to vector<192x32xbf16>
    %cst = arith.constant dense<0.000000e+00> : vector<128x32xf32>
    %8 = tpu.matmul %5, %7, %cst {dimension_numbers = #tpu.dot_dimension_numbers<[1], [0], [0], [1], [0, 0, 1, 1], [], []>} : vector<128x192xbf16>, vector<192x32xbf16>, vector<128x32xf32> -> vector<128x32xf32>
    %9 = vector.extract_strided_slice %4 {offsets = [16, 0], sizes = [128, 192], strides = [1, 1]} : vector<160x192xbf16> to vector<128x192xbf16>
    %c1 = arith.constant 1 : index
    %c0_8 = arith.constant 0 : index
    %c0_9 = arith.constant 0 : index
    %10 = vector.load %arg4[%c1, %c0_8, %c0_9] : memref<3x192x32xbf16, #tpu.memory_space<vmem>>, vector<1x192x32xbf16>
    %11 = vector.shape_cast %10 : vector<1x192x32xbf16> to vector<192x32xbf16>
    %cst_10 = arith.constant dense<0.000000e+00> : vector<128x32xf32>
    %12 = tpu.matmul %9, %11, %cst_10 {dimension_numbers = #tpu.dot_dimension_numbers<[1], [0], [0], [1], [0, 0, 1, 1], [], []>} : vector<128x192xbf16>, vector<192x32xbf16>, vector<128x32xf32> -> vector<128x32xf32>
    %13 = arith.addf %8, %12 : vector<128x32xf32>
    %14 = vector.extract_strided_slice %4 {offsets = [32, 0], sizes = [128, 192], strides = [1, 1]} : vector<160x192xbf16> to vector<128x192xbf16>
    %c2 = arith.constant 2 : index
    %c0_11 = arith.constant 0 : index
    %c0_12 = arith.constant 0 : index
    %15 = vector.load %arg4[%c2, %c0_11, %c0_12] : memref<3x192x32xbf16, #tpu.memory_space<vmem>>, vector<1x192x32xbf16>
    %16 = vector.shape_cast %15 : vector<1x192x32xbf16> to vector<192x32xbf16>
    %cst_13 = arith.constant dense<0.000000e+00> : vector<128x32xf32>
    %17 = tpu.matmul %14, %16, %cst_13 {dimension_numbers = #tpu.dot_dimension_numbers<[1], [0], [0], [1], [0, 0, 1, 1], [], []>} : vector<128x192xbf16>, vector<192x32xbf16>, vector<128x32xf32> -> vector<128x32xf32>
    %18 = arith.addf %13, %17 : vector<128x32xf32>
    %c0_14 = arith.constant 0 : index
    %c0_15 = arith.constant 0 : index
    %c0_16 = arith.constant 0 : index
    %19 = vector.load %arg5[%c0_14, %c0_15, %c0_16] : memref<1x1x32xf32, #tpu.memory_space<vmem>>, vector<1x1x32xf32>
    %20 = vector.shape_cast %19 : vector<1x1x32xf32> to vector<1x32xf32>
    %21 = vector.broadcast %20 : vector<1x32xf32> to vector<128x32xf32>
    %22 = arith.addf %18, %21 : vector<128x32xf32>
    %c0_17 = arith.constant 0 : index
    %c0_18 = arith.constant 0 : index
    %23 = vector.load %arg6[%c0_17, %c0_18] : memref<1x32xf32, #tpu.memory_space<vmem>>, vector<1x32xf32>
    %24 = vector.broadcast %23 : vector<1x32xf32> to vector<128x32xf32>
    %25 = arith.mulf %22, %24 : vector<128x32xf32>
    %cst_19 = arith.constant dense<0.000000e+00> : vector<128xf32>
    %26 = vector.multi_reduction <add>, %25, %cst_19 [1] : vector<128x32xf32> to vector<128xf32>
    %27 = vector.shape_cast %26 : vector<128xf32> to vector<128x1xf32>
    %c0_20 = arith.constant 0 : index
    %c0_21 = arith.constant 0 : index
    %28 = vector.load %arg7[%c0_20, %c0_21] : memref<1x1xf32, #tpu.memory_space<vmem>>, vector<1x1xf32>
    %29 = vector.broadcast %28 : vector<1x1xf32> to vector<128x1xf32>
    %30 = arith.addf %27, %29 : vector<128x1xf32>
    %c0_22 = arith.constant 0 : index
    %c0_23 = arith.constant 0 : index
    %c0_24 = arith.constant 0 : index
    %31 = vector.load %arg8[%c0_22, %c0_23, %c0_24] : memref<1x128x1xf32, #tpu.memory_space<vmem>>, vector<1x128x1xf32>
    %32 = vector.shape_cast %31 : vector<1x128x1xf32> to vector<128x1xf32>
    %33 = vector.shape_cast %30 : vector<128x1xf32> to vector<1x128x1xf32>
    tpu.vector_store %arg8[%c0_22, %c0_23, %c0_24], %33 {strides = array<i32>} : memref<1x128x1xf32, #tpu.memory_space<vmem>>, vector<1x128x1xf32>,
    return
  }
  func.func @transform_0(%arg0: i32, %arg1: i32) -> (i32, i32, i32) {
    %c0_i32 = arith.constant 0 : i32
    %c0_i32_0 = arith.constant 0 : i32
    return %arg0, %arg1, %c0_i32 : i32, i32, i32
  }
  func.func @transform_1(%arg0: i32, %arg1: i32) -> (i32, i32, i32) {
    %c1_i32 = arith.constant 1 : i32
    %0 = arith.addi %arg1, %c1_i32 : i32
    %c4_i32 = arith.constant 4 : i32
    %1 = arith.muli %0, %c4_i32 : i32
    %c0_i32 = arith.constant 0 : i32
    %c0_i32_0 = arith.constant 0 : i32
    return %arg0, %1, %c0_i32 : i32, i32, i32
  }
  func.func @transform_2(%arg0: i32, %arg1: i32) -> (i32, i32, i32) {
    %c0_i32 = arith.constant 0 : i32
    %c0_i32_0 = arith.constant 0 : i32
    %c0_i32_1 = arith.constant 0 : i32
    %c0_i32_2 = arith.constant 0 : i32
    return %c0_i32, %c0_i32_0, %c0_i32_1 : i32, i32, i32
  }
  func.func @transform_3(%arg0: i32, %arg1: i32) -> (i32, i32, i32) {
    %c0_i32 = arith.constant 0 : i32
    %c0_i32_0 = arith.constant 0 : i32
    %c0_i32_1 = arith.constant 0 : i32
    %c0_i32_2 = arith.constant 0 : i32
    return %c0_i32, %c0_i32_0, %c0_i32_1 : i32, i32, i32
  }
  func.func @transform_4(%arg0: i32, %arg1: i32) -> (i32, i32) {
    %c0_i32 = arith.constant 0 : i32
    %c0_i32_0 = arith.constant 0 : i32
    %c0_i32_1 = arith.constant 0 : i32
    return %c0_i32, %c0_i32_0 : i32, i32
  }
  func.func @transform_5(%arg0: i32, %arg1: i32) -> (i32, i32) {
    %c0_i32 = arith.constant 0 : i32
    %c0_i32_0 = arith.constant 0 : i32
    %c0_i32_1 = arith.constant 0 : i32
    return %c0_i32, %c0_i32_0 : i32, i32
  }
  func.func @transform_6(%arg0: i32, %arg1: i32) -> (i32, i32, i32) {
    %c0_i32 = arith.constant 0 : i32
    %c0_i32_0 = arith.constant 0 : i32
    return %arg0, %arg1, %c0_i32 : i32, i32, i32
  }
}

</mosaic_0001>

<llo_original>
// kernel: sea_forward.5
$region0: #{sea_forward.5}
  #allocation0 [shape = 'u32[]', space=smem, size = 0x4, offset = 0x4, fixed_abs, tag = 'smem constant byte address 0x4 - core index']
  #allocation1 [shape = 'u32[144,128]{1,0:T(1,128)}', space=vmem, size = 0x12000, scoped, tag = 'internal scratch']
  %s0 = inlined_call_operand.vmem [shape: bf16[2,2,288,96], index: 0, kind: input, shape index: {}, may-alias: {0,1}]
  %s1 = inlined_call_operand.vmem [shape: bf16[2,2,288,96], index: 1, kind: input, shape index: {}, may-alias: {0,1}]
  %s2 = inlined_call_operand.vmem [shape: bf16[2,3,96,32], index: 2, kind: input, shape index: {}]
  %s3 = inlined_call_operand.vmem [shape: f32[2,1,32], index: 3, kind: input, shape index: {}]
  %s4 = inlined_call_operand.vmem [shape: bf16[2,2,256,32], index: 4, kind: output, shape index: {}]
  %s5 = sld [smem:[#allocation0]]
  $region49: #{sea_forward.5} parent=0
    _
  %s7 = ssub.s32 1, %s5
  %s8 = scalar_select 0, %s7, %s5
  loop: start=0, step=1, limit=10
  $region2: #{sea_forward.5} parent=0 // loop_pre_header
    _
  $region3: #{sea_forward.5} parent=0 // loop_header
    %s10 = sphi 0, %s14
    %p11 = scmp.ge.s32.totalorder %s10, 10
    %s17 = sphi 0, %s36
    %s18 = sphi 0, %s32
    %s19 = sphi 0, %s28
    %s20 = sphi 0, %s17
    %s21 = sphi 0, %s18
    %s22 = sphi 0, %s19
    %s23 = sphi 0, %s20
    %s24 = sphi 0, %s21
    %s25 = sphi 0, %s22
    %s43 = sphi 0, %s45
    %s46 = sphi 0, %s43
    %s47 = sphi 0, %s46
    %s63 = sphi 0, %s47
    %s77 = sphi 0, %s79
    %s80 = sphi 0, %s77
    %s81 = sphi 0, %s80
    %s97 = sphi 0, %s81
    %s103 = sphi 0, %s105
    %s106 = sphi 0, %s103
    %s107 = sphi 0, %s106
    %s123 = sphi 0, %s107
    %s129 = sphi 0, %s131
    %s132 = sphi 0, %s129
    %s133 = sphi 0, %s132
    %s149 = sphi 0, %s133
    %s159 = sphi 0, %s161
    %s162 = sphi 0, %s159
    %s163 = sphi 0, %s162
    %s179 = sphi 0, %s163
  $region4: #{sea_forward.5} parent=0 // loop_header_branch
    %13 = sbr.rel (%p11) target = $region8
  $region5: #{sea_forward.5} parent=0 // loop_body
    %s15 = ssub.s32 %s10, 1
    %s16 = ssub.s32 %s10, 2
    %s26 = sadd.s32 1, %s19
    %p27 = scmp.ge.s32.totalorder %s26, 2
    %s28 = scalar_select %p27, 0, %s26
    %s29 = sadd.s32 1, %s18
    %s30 = scalar_select %p27, %s29, %s18
    %p31 = scmp.ge.s32.totalorder %s30, 2
    %s32 = scalar_select %p31, 0, %s30
    %s33 = sadd.s32 1, %s17
    %s34 = scalar_select %p31, %s33, %s17
    %p35 = scmp.ge.s32.totalorder %s34, 2
    %s36 = scalar_select %p35, 0, %s34
    %s37 = ssub.s32 %s17, %s36
    %s38 = ssub.s32 %s18, %s32
    %s39 = sor.u32 %s37, %s38
    %s40 = ssub.s32 %s19, %s28
    %s41 = sor.u32 %s39, %s40
    %p42 = scmp.eq.s32.totalorder %s41, 0
    %s44 = sadd.s32 %s43, 1
    %s45 = scalar_select %p42, %s43, %s44
    %p48 = pneg %p42
    %p49 = scmp.eq.s32.totalorder %s10, 7
    %p50 = por %p48, %p49
    %p51 = scmp.ne.s32.totalorder %s43, %s46
    %p52 = scmp.eq.s32.totalorder %s10, 0
    %p53 = por %p51, %p52
    %p54 = scmp.ne.s32.totalorder %s43, %s46
    %p55 = scmp.eq.s32.totalorder %s15, 7
    %p56 = por %p54, %p55
    %p57 = scmp.ne.s32.totalorder %s46, %s47
    %p58 = scmp.eq.s32.totalorder %s15, 0
    %p59 = por %p57, %p58
    %p60 = scmp.ne.s32.totalorder %s46, %s47
    %p61 = scmp.eq.s32.totalorder %s16, 7
    %p62 = por %p60, %p61
    %p64 = scmp.ne.s32.totalorder %s47, %s63
    %p65 = scmp.eq.s32.totalorder %s16, 0
    %p66 = por %p64, %p65
    %s67 = sadd.s32 %s19, 1
    %s68 = smul.u32 %s67, 4
    %s69 = sadd.s32 %s28, 1
    %s70 = smul.u32 %s69, 4
    %s71 = ssub.s32 %s17, %s36
    %s72 = ssub.s32 %s18, %s32
    %s73 = sor.u32 %s71, %s72
    %s74 = ssub.s32 %s68, %s70
    %s75 = sor.u32 %s73, %s74
    %p76 = scmp.eq.s32.totalorder %s75, 0
    %s78 = sadd.s32 %s77, 1
    %s79 = scalar_select %p76, %s77, %s78
    %p82 = pneg %p76
    %p83 = scmp.eq.s32.totalorder %s10, 7
    %p84 = por %p82, %p83
    %p85 = scmp.ne.s32.totalorder %s77, %s80
    %p86 = scmp.eq.s32.totalorder %s10, 0
    %p87 = por %p85, %p86
    %p88 = scmp.ne.s32.totalorder %s77, %s80
    %p89 = scmp.eq.s32.totalorder %s15, 7
    %p90 = por %p88, %p89
    %p91 = scmp.ne.s32.totalorder %s80, %s81
    %p92 = scmp.eq.s32.totalorder %s15, 0
    %p93 = por %p91, %p92
    %p94 = scmp.ne.s32.totalorder %s80, %s81
    %p95 = scmp.eq.s32.totalorder %s16, 7
    %p96 = por %p94, %p95
    %p98 = scmp.ne.s32.totalorder %s81, %s97
    %p99 = scmp.eq.s32.totalorder %s16, 0
    %p100 = por %p98, %p99
    %s101 = ssub.s32 %s17, %s36
    %p102 = scmp.eq.s32.totalorder %s101, 0
    %s104 = sadd.s32 %s103, 1
    %s105 = scalar_select %p102, %s103, %s104
    %p108 = pneg %p102
    %p109 = scmp.eq.s32.totalorder %s10, 7
    %p110 = por %p108, %p109
    %p111 = scmp.ne.s32.totalorder %s103, %s106
    %p112 = scmp.eq.s32.totalorder %s10, 0
    %p113 = por %p111, %p112
    %p114 = scmp.ne.s32.totalorder %s103, %s106
    %p115 = scmp.eq.s32.totalorder %s15, 7
    %p116 = por %p114, %p115
    %p117 = scmp.ne.s32.totalorder %s106, %s107
    %p118 = scmp.eq.s32.totalorder %s15, 0
    %p119 = por %p117, %p118
    %p120 = scmp.ne.s32.totalorder %s106, %s107
    %p121 = scmp.eq.s32.totalorder %s16, 7
    %p122 = por %p120, %p121
    %p124 = scmp.ne.s32.totalorder %s107, %s123
    %p125 = scmp.eq.s32.totalorder %s16, 0
    %p126 = por %p124, %p125
    %s127 = ssub.s32 %s17, %s36
    %p128 = scmp.eq.s32.totalorder %s127, 0
    %s130 = sadd.s32 %s129, 1
    %s131 = scalar_select %p128, %s129, %s130
    %p134 = pneg %p128
    %p135 = scmp.eq.s32.totalorder %s10, 7
    %p136 = por %p134, %p135
    %p137 = scmp.ne.s32.totalorder %s129, %s132
    %p138 = scmp.eq.s32.totalorder %s10, 0
    %p139 = por %p137, %p138
    %p140 = scmp.ne.s32.totalorder %s129, %s132
    %p141 = scmp.eq.s32.totalorder %s15, 7
    %p142 = por %p140, %p141
    %p143 = scmp.ne.s32.totalorder %s132, %s133
    %p144 = scmp.eq.s32.totalorder %s15, 0
    %p145 = por %p143, %p144
    %p146 = scmp.ne.s32.totalorder %s132, %s133
    %p147 = scmp.eq.s32.totalorder %s16, 7
    %p148 = por %p146, %p147
    %p150 = scmp.ne.s32.totalorder %s133, %s149
    %p151 = scmp.eq.s32.totalorder %s16, 0
    %p152 = por %p150, %p151
    %s153 = ssub.s32 %s17, %s36
    %s154 = ssub.s32 %s18, %s32
    %s155 = sor.u32 %s153, %s154
    %s156 = ssub.s32 %s19, %s28
    %s157 = sor.u32 %s155, %s156
    %p158 = scmp.eq.s32.totalorder %s157, 0
    %s160 = sadd.s32 %s159, 1
    %s161 = scalar_select %p158, %s159, %s160
    %p164 = pneg %p158
    %p165 = scmp.eq.s32.totalorder %s10, 7
    %p166 = por %p164, %p165
    %p167 = scmp.ne.s32.totalorder %s159, %s162
    %p168 = scmp.eq.s32.totalorder %s10, 0
    %p169 = por %p167, %p168
    %p170 = scmp.ne.s32.totalorder %s159, %s162
    %p171 = scmp.eq.s32.totalorder %s15, 7
    %p172 = por %p170, %p171
    %p173 = scmp.ne.s32.totalorder %s162, %s163
    %p174 = scmp.eq.s32.totalorder %s15, 0
    %p175 = por %p173, %p174
    %p176 = scmp.ne.s32.totalorder %s162, %s163
    %p177 = scmp.eq.s32.totalorder %s16, 7
    %p178 = por %p176, %p177
    %p180 = scmp.ne.s32.totalorder %s163, %s179
    %p181 = scmp.eq.s32.totalorder %s16, 0
    %p182 = por %p180, %p181
    %p183 = scmp.le.s32.totalorder 1, %s10
    %p184 = scmp.lt.s32.totalorder %s10, 9
    %p185 = pnand %p183, %p184
    %p186 = pneg %p185
    // Predicated region
    $region9: #{sea_forward.5} parent=5 // pred_check
      _
    $region10: #{sea_forward.5} parent=5 // pred_check_branch
      %188 = sbr.rel (%p185) target = $region12
    $region11: #{sea_forward.5} parent=5 // pred_region
      %s189 = ssub.s32 %s10, 1
    $region12: #{sea_forward.5} parent=5 // pred_fallthru
      _
    %p190 = scmp.lt.s32.totalorder %s10, 8
    // Predicated region
    $region13: #{sea_forward.5} parent=5 // pred_check
      %p191 = pneg %p190
    $region14: #{sea_forward.5} parent=5 // pred_check_branch
      %193 = sbr.rel (%p191) target = $region16
    $region15: #{sea_forward.5} parent=5 // pred_region
      // Predicated region
      $region17: #{sea_forward.5} parent=15 // pred_check
        %p194 = pneg %p53
      $region18: #{sea_forward.5} parent=15 // pred_check_branch
        %196 = sbr.rel (%p194) target = $region20
      $region19: #{sea_forward.5} parent=15 // pred_region
        %s197 = smul.u32 16, %s19
        %s198 = ssub.s32 36, %s197
        %p199 = scmp.lt.s32.totalorder %s198, 16
        %s200 = scalar_select %p199, %s198, 16
        %s201 = smul.u32 64, %s200
        %p202 = scmp.lt.s32.totalorder %s17, 1
        %s203 = scalar_select %p202, %s17, 1
        %p204 = scmp.lt.s32.totalorder %s18, 1
        %s205 = scalar_select %p204, %s18, 1
        %p206 = scmp.lt.s32.totalorder %s197, 35
        %s207 = scalar_select %p206, %s197, 35
        %s208 = smul.addr %s205, 36
        %s209 = sadd.s32 %s207, %s208
        %s210 = smul.addr %s203, 72
        %s211 = sadd.s32 %s209, %s210
        %s212 = smul.addr %s211, 4
        %s213 = scalar_lea.vmem %s0, %s212
        %s214 = smul.u32 16, %s19
        %s215 = ssub.s32 36, %s214
        %p216 = scmp.lt.s32.totalorder %s215, 16
        %s217 = scalar_select %p216, %s215, 16
        %s218 = smul.u32 64, %s217
      $region20: #{sea_forward.5} parent=15 // pred_fallthru
        _
      // Predicated region
      $region21: #{sea_forward.5} parent=15 // pred_check
        %p219 = pneg %p87
      $region22: #{sea_forward.5} parent=15 // pred_check_branch
        %221 = sbr.rel (%p219) target = $region24
      $region23: #{sea_forward.5} parent=15 // pred_region
        %s222 = sadd.s32 %s19, 1
        %s223 = smul.u32 %s222, 4
        %s224 = smul.u32 4, %s223
        %p225 = scmp.lt.s32.totalorder %s17, 1
        %s226 = scalar_select %p225, %s17, 1
        %p227 = scmp.lt.s32.totalorder %s18, 1
        %s228 = scalar_select %p227, %s18, 1
        %p229 = scmp.lt.s32.totalorder %s224, 35
        %s230 = scalar_select %p229, %s224, 35
        %s231 = smul.addr %s228, 36
        %s232 = sadd.s32 %s230, %s231
        %s233 = smul.addr %s226, 72
        %s234 = sadd.s32 %s232, %s233
        %s235 = smul.addr %s234, 4
        %s236 = scalar_lea.vmem %s1, %s235
        %s237 = sadd.s32 %s19, 1
        %s238 = smul.u32 %s237, 4
        %s239 = smul.u32 4, %s238
      $region24: #{sea_forward.5} parent=15 // pred_fallthru
        _
      // Predicated region
      $region25: #{sea_forward.5} parent=15 // pred_check
        %p240 = pneg %p113
      $region26: #{sea_forward.5} parent=15 // pred_check_branch
        %242 = sbr.rel (%p240) target = $region28
      $region27: #{sea_forward.5} parent=15 // pred_region
        %p243 = scmp.lt.s32.totalorder %s17, 1
        %s244 = scalar_select %p243, %s17, 1
        %s245 = smul.addr %s244, 36
        %s246 = smul.addr %s245, 4
        %s247 = scalar_lea.vmem %s2, %s246
      $region28: #{sea_forward.5} parent=15 // pred_fallthru
        _
      // Predicated region
      $region29: #{sea_forward.5} parent=15 // pred_check
        %p248 = pneg %p139
      $region30: #{sea_forward.5} parent=15 // pred_check_branch
        %250 = sbr.rel (%p248) target = $region32
      $region31: #{sea_forward.5} parent=15 // pred_region
        %p251 = scmp.lt.s32.totalorder %s17, 1
        %s252 = scalar_select %p251, %s17, 1
        %s253 = scalar_lea.vmem %s3, %s252
      $region32: #{sea_forward.5} parent=15 // pred_fallthru
        _
    $region16: #{sea_forward.5} parent=5 // pred_fallthru
      _
    %p254 = scmp.le.s32.totalorder 1, %s10
    %p255 = scmp.lt.s32.totalorder %s10, 9
    %p256 = pnand %p254, %p255
    %p257 = pneg %p256
    // Predicated region
    $region33: #{sea_forward.5} parent=5 // pred_check
      _
    $region34: #{sea_forward.5} parent=5 // pred_check_branch
      %259 = sbr.rel (%p256) target = $region36
    $region35: #{sea_forward.5} parent=5 // pred_region
      %s260 = ssub.s32 %s10, 1
      %s261 = smul.u32 16, %s22
      %s262 = ssub.s32 36, %s261
      %p263 = scmp.lt.s32.totalorder %s262, 16
      %s264 = scalar_select %p263, %s262, 16
      %s265 = smul.u32 64, %s264
      %p266 = scmp.lt.s32.totalorder %s20, 1
      %s267 = scalar_select %p266, %s20, 1
      %p268 = scmp.lt.s32.totalorder %s21, 1
      %s269 = scalar_select %p268, %s21, 1
      %p270 = scmp.lt.s32.totalorder %s261, 35
      %s271 = scalar_select %p270, %s261, 35
      %s272 = smul.addr %s269, 36
      %s273 = sadd.s32 %s271, %s272
      %s274 = smul.addr %s267, 72
      %s275 = sadd.s32 %s273, %s274
      %s276 = smul.addr %s275, 4
      %s277 = scalar_lea.vmem %s0, %s276
      %p278 = pneg %p59
      %p279 = pneg %p56
      %s280 = sadd.s32 %s22, 1
      %s281 = smul.u32 %s280, 4
      %s282 = smul.u32 4, %s281
      %p283 = scmp.lt.s32.totalorder %s20, 1
      %s284 = scalar_select %p283, %s20, 1
      %p285 = scmp.lt.s32.totalorder %s21, 1
      %s286 = scalar_select %p285, %s21, 1
      %p287 = scmp.lt.s32.totalorder %s282, 35
      %s288 = scalar_select %p287, %s282, 35
      %s289 = smul.addr %s286, 36
      %s290 = sadd.s32 %s288, %s289
      %s291 = smul.addr %s284, 72
      %s292 = sadd.s32 %s290, %s291
      %s293 = smul.addr %s292, 4
      %s294 = scalar_lea.vmem %s1, %s293
      %p295 = pneg %p93
      %p296 = pneg %p90
      %p297 = scmp.lt.s32.totalorder %s20, 1
      %s298 = scalar_select %p297, %s20, 1
      %s299 = smul.addr %s298, 36
      %s300 = smul.addr %s299, 4
      %s301 = scalar_lea.vmem %s2, %s300
      %p302 = pneg %p119
      %p303 = pneg %p116
      %p304 = scmp.lt.s32.totalorder %s20, 1
      %s305 = scalar_select %p304, %s20, 1
      %s306 = scalar_lea.vmem %s3, %s305
      %p307 = pneg %p145
      %p308 = pneg %p142
      %p309 = pneg %p175
      %p310 = pneg %p172
      %s311 = smul.u32 16, %s22
      %p312 = scmp.lt.s32.totalorder %s20, 1
      %s313 = scalar_select %p312, %s20, 1
      %p314 = scmp.lt.s32.totalorder %s21, 1
      %s315 = scalar_select %p314, %s21, 1
      %p316 = scmp.lt.s32.totalorder %s311, 31
      %s317 = scalar_select %p316, %s311, 31
      %s318 = smul.addr %s315, 32
      %s319 = sadd.s32 %s317, %s318
      %s320 = smul.addr %s313, 64
      %s321 = sadd.s32 %s319, %s320
      %s322 = smul.addr %s321, 4
      %s323 = scalar_lea.vmem %s4, %s322
      %s324 = smul.u32 16, %s22
      %s325 = ssub.s32 36, %s324
      %p326 = scmp.lt.s32.totalorder %s325, 16
      %s327 = scalar_select %p326, %s325, 16
      %s328 = smul.u32 64, %s327
      %p329 = scmp.lt.s32.totalorder %s20, 1
      %s330 = scalar_select %p329, %s20, 1
      %p331 = scmp.lt.s32.totalorder %s21, 1
      %s332 = scalar_select %p331, %s21, 1
      %p333 = scmp.lt.s32.totalorder %s324, 35
      %s334 = scalar_select %p333, %s324, 35
      %s335 = smul.addr %s332, 36
      %s336 = sadd.s32 %s334, %s335
      %s337 = smul.addr %s330, 72
      %s338 = sadd.s32 %s336, %s337
      %s339 = smul.addr %s338, 4
      %s340 = scalar_lea.vmem %s0, %s339
      %s341 = smul.u32 16, %s22
      %s342 = ssub.s32 36, %s341
      %p343 = scmp.lt.s32.totalorder %s342, 16
      %s344 = scalar_select %p343, %s342, 16
      %s345 = smul.u32 64, %s344
      %s346 = sadd.s32 %s22, 1
      %s347 = smul.u32 %s346, 4
      %s348 = smul.u32 4, %s347
      %p349 = scmp.lt.s32.totalorder %s20, 1
      %s350 = scalar_select %p349, %s20, 1
      %p351 = scmp.lt.s32.totalorder %s21, 1
      %s352 = scalar_select %p351, %s21, 1
      %p353 = scmp.lt.s32.totalorder %s348, 35
      %s354 = scalar_select %p353, %s348, 35
      %s355 = smul.addr %s352, 36
      %s356 = sadd.s32 %s354, %s355
      %s357 = smul.addr %s350, 72
      %s358 = sadd.s32 %s356, %s357
      %s359 = smul.addr %s358, 4
      %s360 = scalar_lea.vmem %s1, %s359
      %s361 = sadd.s32 %s22, 1
      %s362 = smul.u32 %s361, 4
      %s363 = smul.u32 4, %s362
      %p364 = scmp.lt.s32.totalorder %s20, 1
      %s365 = scalar_select %p364, %s20, 1
      %s366 = smul.addr %s365, 36
      %s367 = smul.addr %s366, 4
      %s368 = scalar_lea.vmem %s2, %s367
      %p369 = scmp.lt.s32.totalorder %s20, 1
      %s370 = scalar_select %p369, %s20, 1
      %s371 = scalar_lea.vmem %s3, %s370
      %s372 = smul.u32 16, %s22
      %p373 = scmp.lt.s32.totalorder %s20, 1
      %s374 = scalar_select %p373, %s20, 1
      %p375 = scmp.lt.s32.totalorder %s21, 1
      %s376 = scalar_select %p375, %s21, 1
      %p377 = scmp.lt.s32.totalorder %s372, 31
      %s378 = scalar_select %p377, %s372, 31
      %s379 = smul.addr %s376, 32
      %s380 = sadd.s32 %s378, %s379
      %s381 = smul.addr %s374, 64
      %s382 = sadd.s32 %s380, %s381
      %s383 = smul.addr %s382, 4
      %s384 = scalar_lea.vmem %s4, %s383
      %s385 = smul.u32 16, %s22
      %v387 = vld [vmem:[%s340] sm:$0xf]
      %v388 = vld [vmem:[%s340 + $0x4] sm:$0xf]
      %v389 = vld [vmem:[%s340 + $0x8] sm:$0xf]
      %v390 = vld [vmem:[%s340 + $0xc] sm:$0xf]
      %v391 = vld [vmem:[%s340 + $0x10] sm:$0xf]
      %v392 = vld [vmem:[%s340 + $0x14] sm:$0xf]
      %v393 = vld [vmem:[%s340 + $0x18] sm:$0xf]
      %v394 = vld [vmem:[%s340 + $0x1c] sm:$0xf]
      %v395 = vld [vmem:[%s340 + $0x20] sm:$0xf]
      %v396 = vld [vmem:[%s340 + $0x24] sm:$0xf]
      %v397 = vld [vmem:[%s340 + $0x28] sm:$0xf]
      %v398 = vld [vmem:[%s340 + $0x2c] sm:$0xf]
      %v399 = vld [vmem:[%s340 + $0x30] sm:$0xf]
      %v400 = vld [vmem:[%s340 + $0x34] sm:$0xf]
      %v401 = vld [vmem:[%s340 + $0x38] sm:$0xf]
      %v402 = vld [vmem:[%s340 + $0x3c] sm:$0xf]
      %v403 = vld [vmem:[%s360] sm:$0xf]
      %v404 = vld [vmem:[%s360 + $0x4] sm:$0xf]
      %v405 = vld [vmem:[%s360 + $0x8] sm:$0xf]
      %v406 = vld [vmem:[%s360 + $0xc] sm:$0xf]
      %v407 = vld [vmem:[%s368] sm:$0xf]
      %v408 = vld [vmem:[%s368 + $0x4] sm:$0xf]
      %v409 = vld [vmem:[%s368 + $0x8] sm:$0xf]
      %v410 = vld [vmem:[%s368 + $0xc] sm:$0xf]
      %v411 = vld [vmem:[%s368 + $0x10] sm:$0xf]
      %v412 = vld [vmem:[%s368 + $0x14] sm:$0xf]
      %v413 = vld [vmem:[%s368 + $0x18] sm:$0xf]
      %v414 = vld [vmem:[%s368 + $0x1c] sm:$0xf]
      %v415 = vld [vmem:[%s368 + $0x20] sm:$0xf]
      %v416 = vld [vmem:[%s368 + $0x24] sm:$0xf]
      %v417 = vld [vmem:[%s368 + $0x28] sm:$0xf]
      %v418 = vld [vmem:[%s368 + $0x2c] sm:$0xf]
      %v419 = vld [vmem:[%s368 + $0x30] sm:$0xf]
      %v420 = vld [vmem:[%s368 + $0x34] sm:$0xf]
      %v421 = vld [vmem:[%s368 + $0x38] sm:$0xf]
      %v422 = vld [vmem:[%s368 + $0x3c] sm:$0xf]
      %v423 = vld [vmem:[%s368 + $0x40] sm:$0xf]
      %v424 = vld [vmem:[%s368 + $0x44] sm:$0xf]
      %v425 = vld [vmem:[%s368 + $0x48] sm:$0xf]
      %v426 = vld [vmem:[%s368 + $0x4c] sm:$0xf]
      %v427 = vld [vmem:[%s368 + $0x50] sm:$0xf]
      %v428 = vld [vmem:[%s368 + $0x54] sm:$0xf]
      %v429 = vld [vmem:[%s368 + $0x58] sm:$0xf]
      %v430 = vld [vmem:[%s368 + $0x5c] sm:$0xf]
      %v431 = vld [vmem:[%s368 + $0x60] sm:$0xf]
      %v432 = vld [vmem:[%s368 + $0x64] sm:$0xf]
      %v433 = vld [vmem:[%s368 + $0x68] sm:$0xf]
      %v434 = vld [vmem:[%s368 + $0x6c] sm:$0xf]
      %v435 = vld [vmem:[%s368 + $0x70] sm:$0xf]
      %v436 = vld [vmem:[%s368 + $0x74] sm:$0xf]
      %v437 = vld [vmem:[%s368 + $0x78] sm:$0xf]
      %v438 = vld [vmem:[%s368 + $0x7c] sm:$0xf]
      %v439 = vld [vmem:[%s368 + $0x80] sm:$0xf]
      %v440 = vld [vmem:[%s368 + $0x84] sm:$0xf]
      %v441 = vld [vmem:[%s368 + $0x88] sm:$0xf]
      %v442 = vld [vmem:[%s368 + $0x8c] sm:$0xf]
      %v459 = vunpack.c.l.b16 %v387
      %v460 = vunpack.c.l.b16 %v388
      %v461 = vunpack.c.l.b16 %v389
      %v462 = vunpack.c.l.b16 %v390
      %v463 = vunpack.c.l.b16 %v391
      %v464 = vunpack.c.l.b16 %v392
      %v465 = vunpack.c.l.b16 %v393
      %v466 = vunpack.c.l.b16 %v394
      %v467 = vunpack.c.l.b16 %v395
      %v468 = vunpack.c.l.b16 %v396
      %v469 = vunpack.c.l.b16 %v397
      %v470 = vunpack.c.l.b16 %v398
      %v471 = vunpack.c.l.b16 %v399
      %v472 = vunpack.c.l.b16 %v400
      %v473 = vunpack.c.l.b16 %v401
      %v474 = vunpack.c.l.b16 %v402
      %v475 = vpack.c.b16 %v460, %v459
      %v476 = vpack.c.b16 %v462, %v461
      %v477 = vpack.c.b16 %v464, %v463
      %v478 = vpack.c.b16 %v466, %v465
      %v479 = vpack.c.b16 %v468, %v467
      %v480 = vpack.c.b16 %v470, %v469
      %v481 = vpack.c.b16 %v472, %v471
      %v482 = vpack.c.b16 %v474, %v473
      %v487 = vunpack.c.l.b16 %v403
      %v488 = vunpack.c.l.b16 %v404
      %v489 = vunpack.c.l.b16 %v405
      %v490 = vunpack.c.l.b16 %v406
      %v491 = vpack.c.b16 %v488, %v487
      %v492 = vpack.c.b16 %v490, %v489
      %v505 = vunpack.c.l.b16 %v419
      %v506 = vunpack.c.l.b16 %v420
      %v507 = vunpack.c.l.b16 %v421
      %v508 = vunpack.c.l.b16 %v422
      %v509 = vunpack.c.l.b16 %v423
      %v510 = vunpack.c.l.b16 %v424
      %v511 = vunpack.c.l.b16 %v425
      %v512 = vunpack.c.l.b16 %v426
      %v513 = vunpack.c.l.b16 %v427
      %v514 = vunpack.c.l.b16 %v428
      %v515 = vunpack.c.l.b16 %v429
      %v516 = vunpack.c.l.b16 %v430
      %v517 = vpack.c.b16 %v506, %v505
      %v518 = vpack.c.b16 %v508, %v507
      %v519 = vpack.c.b16 %v510, %v509
      %v520 = vpack.c.b16 %v512, %v511
      %v521 = vpack.c.b16 %v514, %v513
      %v522 = vpack.c.b16 %v516, %v515
      %vm529 = vcmask 785408
      %v531 = vsel %vm529, %v476, 0
      %v534 = vsel %vm529, %v477, 0
      %v537 = vsel %vm529, %v478, 0
      %v540 = vsel %vm529, %v479, 0
      %v543 = vsel %vm529, %v480, 0
      %v546 = vsel %vm529, %v481, 0
      %v549 = vsel %vm529, %v482, 0
      %v552 = vsel %vm529, %v491, 0
      %554 = vmatprep.subr.bf16.mxu0 0
      %555 = vmatpush1.bf16.msra.mxu0 %v517
      %556 = vmatprep.subr.bf16.mxu0 0
      %557 = vmatpush1.bf16.msra.mxu0 %v518
      %558 = vmatprep.subr.bf16.mxu0 0
      %559 = vmatpush1.bf16.msra.mxu0 %v519
      %560 = vmatprep.subr.bf16.mxu0 0
      %561 = vmatpush1.bf16.msra.mxu0 %v520
      %562 = vmatprep.subr.bf16.mxu0 0
      %563 = vmatpush1.bf16.msra.mxu0 %v521
      %564 = vmatprep.subr.bf16.mxu0 0
      %565 = vmatpush1.bf16.msra.mxu0 %v522
      %566 = vmatprep.subr.bf16.mxu0 0
      %567 = vmatpush1.bf16.msra.mxu0 0
      %568 = vmatprep.subr.bf16.mxu0 0
      %569 = vmatpush1.bf16.msra.mxu0 0
      %570 = vmatprep.subr.bf16.mxu0 0
      %571 = vmatpush1.bf16.msra.mxu0 0
      %572 = vmatprep.subr.bf16.mxu0 0
      %573 = vmatpush1.bf16.msra.mxu0 0
      %574 = vmatprep.subr.bf16.mxu0 0
      %575 = vmatpush1.bf16.msra.mxu0 0
      %576 = vmatprep.subr.bf16.mxu0 0
      %577 = vmatpush1.bf16.msra.mxu0 0
      %578 = vmatprep.subr.bf16.mxu0 0
      %579 = vmatpush1.bf16.msra.mxu0 0
      %580 = vmatprep.subr.bf16.mxu0 0
      %581 = vmatpush1.bf16.msra.mxu0 0
      %582 = vmatprep.subr.bf16.mxu0 0
      %583 = vmatpush1.bf16.msra.mxu0 0
      %584 = vmatprep.subr.bf16.mxu0 0
      %585 = vmatpush1.bf16.msra.mxu0 0
      %586 = vmatprep.mubr.bf16.mxu0 0
      %587 = vmatmul.mubr.bf16.gmra.mrb[0].mxu0 %v531
      %v588 = vpop.f32.mrb[0].mxu0
      %v589 = vadd.f32 0.0, %v588
      %v590 = vpop.f32.mrb[0].mxu0
      %v591 = vpop.f32.mrb[0].mxu0
      %v592 = vadd.f32 0.0, %v591
      %v593 = vpop.f32.mrb[0].mxu0
      %594 = vmatprep.mubr.bf16.mxu0 0
      %595 = vmatmul.mubr.bf16.gmra.mrb[0].mxu0 %v534
      %v596 = vpop.f32.mrb[0].mxu0
      %v597 = vadd.f32 0.0, %v596
      %v598 = vpop.f32.mrb[0].mxu0
      %v599 = vpop.f32.mrb[0].mxu0
      %v600 = vadd.f32 0.0, %v599
      %v601 = vpop.f32.mrb[0].mxu0
      %602 = vmatprep.mubr.bf16.mxu0 0
      %603 = vmatmul.mubr.bf16.gmra.mrb[0].mxu0 %v537
      %v604 = vpop.f32.mrb[0].mxu0
      %v605 = vadd.f32 0.0, %v604
      %v606 = vpop.f32.mrb[0].mxu0
      %v607 = vpop.f32.mrb[0].mxu0
      %v608 = vadd.f32 0.0, %v607
      %v609 = vpop.f32.mrb[0].mxu0
      %610 = vmatprep.mubr.bf16.mxu0 0
      %611 = vmatmul.mubr.bf16.gmra.mrb[0].mxu0 %v540
      %v612 = vpop.f32.mrb[0].mxu0
      %v613 = vadd.f32 0.0, %v612
      %v614 = vpop.f32.mrb[0].mxu0
      %v615 = vpop.f32.mrb[0].mxu0
      %v616 = vadd.f32 0.0, %v615
      %v617 = vpop.f32.mrb[0].mxu0
      %618 = vmatprep.mubr.bf16.mxu0 0
      %619 = vmatmul.mubr.bf16.gmra.mrb[0].mxu0 %v543
      %v620 = vpop.f32.mrb[0].mxu0
      %v621 = vadd.f32 0.0, %v620
      %v622 = vpop.f32.mrb[0].mxu0
      %v623 = vpop.f32.mrb[0].mxu0
      %v624 = vadd.f32 0.0, %v623
      %v625 = vpop.f32.mrb[0].mxu0
      %626 = vmatprep.mubr.bf16.mxu0 0
      %627 = vmatmul.mubr.bf16.gmra.mrb[0].mxu0 %v546
      %v628 = vpop.f32.mrb[0].mxu0
      %v629 = vadd.f32 0.0, %v628
      %v630 = vpop.f32.mrb[0].mxu0
      %v631 = vpop.f32.mrb[0].mxu0
      %v632 = vadd.f32 0.0, %v631
      %v633 = vpop.f32.mrb[0].mxu0
      %634 = vmatprep.mubr.bf16.mxu0 0
      %635 = vmatmul.mubr.bf16.gmra.mrb[0].mxu0 %v549
      %v636 = vpop.f32.mrb[0].mxu0
      %v637 = vadd.f32 0.0, %v636
      %v638 = vpop.f32.mrb[0].mxu0
      %v639 = vpop.f32.mrb[0].mxu0
      %v640 = vadd.f32 0.0, %v639
      %v641 = vpop.f32.mrb[0].mxu0
      %642 = vmatprep.mubr.bf16.mxu0 0
      %643 = vmatmul.mubr.bf16.gmra.mrb[0].mxu0 %v552
      %v644 = vpop.f32.mrb[0].mxu0
      %v645 = vadd.f32 0.0, %v644
      %v646 = vpop.f32.mrb[0].mxu0
      %v647 = vpop.f32.mrb[0].mxu0
      %v648 = vadd.f32 0.0, %v647
      %v649 = vpop.f32.mrb[0].mxu0
      %650 = vdwg.mxu0
      %v663 = vunpack.c.l.b16 %v407
      %v664 = vunpack.c.l.b16 %v408
      %v665 = vunpack.c.l.b16 %v409
      %v666 = vunpack.c.l.b16 %v410
      %v667 = vunpack.c.l.b16 %v411
      %v668 = vunpack.c.l.b16 %v412
      %v669 = vunpack.c.l.b16 %v413
      %v670 = vunpack.c.l.b16 %v414
      %v671 = vunpack.c.l.b16 %v415
      %v672 = vunpack.c.l.b16 %v416
      %v673 = vunpack.c.l.b16 %v417
      %v674 = vunpack.c.l.b16 %v418
      %v675 = vpack.c.b16 %v664, %v663
      %v676 = vpack.c.b16 %v666, %v665
      %v677 = vpack.c.b16 %v668, %v667
      %v678 = vpack.c.b16 %v670, %v669
      %v679 = vpack.c.b16 %v672, %v671
      %v680 = vpack.c.b16 %v674, %v673
      %v688 = vsel %vm529, %v475, 0
      %690 = vmatprep.subr.bf16.mxu0 0
      %691 = vmatpush1.bf16.msra.mxu0 %v675
      %692 = vmatprep.subr.bf16.mxu0 0
      %693 = vmatpush1.bf16.msra.mxu0 %v676
      %694 = vmatprep.subr.bf16.mxu0 0
      %695 = vmatpush1.bf16.msra.mxu0 %v677
      %696 = vmatprep.subr.bf16.mxu0 0
      %697 = vmatpush1.bf16.msra.mxu0 %v678
      %698 = vmatprep.subr.bf16.mxu0 0
      %699 = vmatpush1.bf16.msra.mxu0 %v679
      %700 = vmatprep.subr.bf16.mxu0 0
      %701 = vmatpush1.bf16.msra.mxu0 %v680
      %702 = vmatprep.subr.bf16.mxu0 0
      %703 = vmatpush1.bf16.msra.mxu0 0
      %704 = vmatprep.subr.bf16.mxu0 0
      %705 = vmatpush1.bf16.msra.mxu0 0
      %706 = vmatprep.subr.bf16.mxu0 0
      %707 = vmatpush1.bf16.msra.mxu0 0
      %708 = vmatprep.subr.bf16.mxu0 0
      %709 = vmatpush1.bf16.msra.mxu0 0
      %710 = vmatprep.subr.bf16.mxu0 0
      %711 = vmatpush1.bf16.msra.mxu0 0
      %712 = vmatprep.subr.bf16.mxu0 0
      %713 = vmatpush1.bf16.msra.mxu0 0
      %714 = vmatprep.subr.bf16.mxu0 0
      %715 = vmatpush1.bf16.msra.mxu0 0
      %716 = vmatprep.subr.bf16.mxu0 0
      %717 = vmatpush1.bf16.msra.mxu0 0
      %718 = vmatprep.subr.bf16.mxu0 0
      %719 = vmatpush1.bf16.msra.mxu0 0
      %720 = vmatprep.subr.bf16.mxu0 0
      %721 = vmatpush1.bf16.msra.mxu0 0
      %722 = vmatprep.mubr.bf16.mxu0 0
      %723 = vmatmul.mubr.bf16.gmra.mrb[0].mxu0 %v688
      %v724 = vpop.f32.mrb[0].mxu0
      %v725 = vadd.f32 %v589, %v724
      %v726 = vpop.f32.mrb[0].mxu0
      %v727 = vpop.f32.mrb[0].mxu0
      %v728 = vadd.f32 %v592, %v727
      %v729 = vpop.f32.mrb[0].mxu0
      %730 = vmatprep.mubr.bf16.mxu0 0
      %731 = vmatmul.mubr.bf16.gmra.mrb[0].mxu0 %v531
      %v732 = vpop.f32.mrb[0].mxu0
      %v733 = vadd.f32 %v597, %v732
      %v734 = vpop.f32.mrb[0].mxu0
      %v735 = vpop.f32.mrb[0].mxu0
      %v736 = vadd.f32 %v600, %v735
      %v737 = vpop.f32.mrb[0].mxu0
      %738 = vmatprep.mubr.bf16.mxu0 0
      %739 = vmatmul.mubr.bf16.gmra.mrb[0].mxu0 %v534
      %v740 = vpop.f32.mrb[0].mxu0
      %v741 = vadd.f32 %v605, %v740
      %v742 = vpop.f32.mrb[0].mxu0
      %v743 = vpop.f32.mrb[0].mxu0
      %v744 = vadd.f32 %v608, %v743
      %v745 = vpop.f32.mrb[0].mxu0
      %746 = vmatprep.mubr.bf16.mxu0 0
      %747 = vmatmul.mubr.bf16.gmra.mrb[0].mxu0 %v537
      %v748 = vpop.f32.mrb[0].mxu0
      %v749 = vadd.f32 %v613, %v748
      %v750 = vpop.f32.mrb[0].mxu0
      %v751 = vpop.f32.mrb[0].mxu0
      %v752 = vadd.f32 %v616, %v751
      %v753 = vpop.f32.mrb[0].mxu0
      %754 = vmatprep.mubr.bf16.mxu0 0
      %755 = vmatmul.mubr.bf16.gmra.mrb[0].mxu0 %v540
      %v756 = vpop.f32.mrb[0].mxu0
      %v757 = vadd.f32 %v621, %v756
      %v758 = vpop.f32.mrb[0].mxu0
      %v759 = vpop.f32.mrb[0].mxu0
      %v760 = vadd.f32 %v624, %v759
      %v761 = vpop.f32.mrb[0].mxu0
      %762 = vmatprep.mubr.bf16.mxu0 0
      %763 = vmatmul.mubr.bf16.gmra.mrb[0].mxu0 %v543
      %v764 = vpop.f32.mrb[0].mxu0
      %v765 = vadd.f32 %v629, %v764
      %v766 = vpop.f32.mrb[0].mxu0
      %v767 = vpop.f32.mrb[0].mxu0
      %v768 = vadd.f32 %v632, %v767
      %v769 = vpop.f32.mrb[0].mxu0
      %770 = vmatprep.mubr.bf16.mxu0 0
      %771 = vmatmul.mubr.bf16.gmra.mrb[0].mxu0 %v546
      %v772 = vpop.f32.mrb[0].mxu0
      %v773 = vadd.f32 %v637, %v772
      %v774 = vpop.f32.mrb[0].mxu0
      %v775 = vpop.f32.mrb[0].mxu0
      %v776 = vadd.f32 %v640, %v775
      %v777 = vpop.f32.mrb[0].mxu0
      %778 = vmatprep.mubr.bf16.mxu0 0
      %779 = vmatmul.mubr.bf16.gmra.mrb[0].mxu0 %v549
      %v780 = vpop.f32.mrb[0].mxu0
      %v781 = vadd.f32 %v645, %v780
      %v782 = vpop.f32.mrb[0].mxu0
      %v783 = vpop.f32.mrb[0].mxu0
      %v784 = vadd.f32 %v648, %v783
      %v785 = vpop.f32.mrb[0].mxu0
      %786 = vdwg.mxu0
      %v799 = vunpack.c.l.b16 %v431
      %v800 = vunpack.c.l.b16 %v432
      %v801 = vunpack.c.l.b16 %v433
      %v802 = vunpack.c.l.b16 %v434
      %v803 = vunpack.c.l.b16 %v435
      %v804 = vunpack.c.l.b16 %v436
      %v805 = vunpack.c.l.b16 %v437
      %v806 = vunpack.c.l.b16 %v438
      %v807 = vunpack.c.l.b16 %v439
      %v808 = vunpack.c.l.b16 %v440
      %v809 = vunpack.c.l.b16 %v441
      %v810 = vunpack.c.l.b16 %v442
      %v811 = vpack.c.b16 %v800, %v799
      %v812 = vpack.c.b16 %v802, %v801
      %v813 = vpack.c.b16 %v804, %v803
      %v814 = vpack.c.b16 %v806, %v805
      %v815 = vpack.c.b16 %v808, %v807
      %v816 = vpack.c.b16 %v810, %v809
      %v824 = vsel %vm529, %v492, 0
      %826 = vmatprep.subr.bf16.mxu0 0
      %827 = vmatpush1.bf16.msra.mxu0 %v811
      %828 = vmatprep.subr.bf16.mxu0 0
      %829 = vmatpush1.bf16.msra.mxu0 %v812
      %830 = vmatprep.subr.bf16.mxu0 0
      %831 = vmatpush1.bf16.msra.mxu0 %v813
      %832 = vmatprep.subr.bf16.mxu0 0
      %833 = vmatpush1.bf16.msra.mxu0 %v814
      %834 = vmatprep.subr.bf16.mxu0 0
      %835 = vmatpush1.bf16.msra.mxu0 %v815
      %836 = vmatprep.subr.bf16.mxu0 0
      %837 = vmatpush1.bf16.msra.mxu0 %v816
      %838 = vmatprep.subr.bf16.mxu0 0
      %839 = vmatpush1.bf16.msra.mxu0 0
      %840 = vmatprep.subr.bf16.mxu0 0
      %841 = vmatpush1.bf16.msra.mxu0 0
      %842 = vmatprep.subr.bf16.mxu0 0
      %843 = vmatpush1.bf16.msra.mxu0 0
      %844 = vmatprep.subr.bf16.mxu0 0
      %845 = vmatpush1.bf16.msra.mxu0 0
      %846 = vmatprep.subr.bf16.mxu0 0
      %847 = vmatpush1.bf16.msra.mxu0 0
      %848 = vmatprep.subr.bf16.mxu0 0
      %849 = vmatpush1.bf16.msra.mxu0 0
      %850 = vmatprep.subr.bf16.mxu0 0
      %851 = vmatpush1.bf16.msra.mxu0 0
      %852 = vmatprep.subr.bf16.mxu0 0
      %853 = vmatpush1.bf16.msra.mxu0 0
      %854 = vmatprep.subr.bf16.mxu0 0
      %855 = vmatpush1.bf16.msra.mxu0 0
      %856 = vmatprep.subr.bf16.mxu0 0
      %857 = vmatpush1.bf16.msra.mxu0 0
      %858 = vmatprep.mubr.bf16.mxu0 0
      %859 = vmatmul.mubr.bf16.gmra.mrb[0].mxu0 %v534
      %v860 = vpop.f32.mrb[0].mxu0
      %v861 = vadd.f32 0.0, %v860
      %v862 = vpop.f32.mrb[0].mxu0
      %v863 = vpop.f32.mrb[0].mxu0
      %v864 = vadd.f32 0.0, %v863
      %v865 = vpop.f32.mrb[0].mxu0
      %866 = vmatprep.mubr.bf16.mxu0 0
      %867 = vmatmul.mubr.bf16.gmra.mrb[0].mxu0 %v537
      %v868 = vpop.f32.mrb[0].mxu0
      %v869 = vadd.f32 0.0, %v868
      %v870 = vpop.f32.mrb[0].mxu0
      %v871 = vpop.f32.mrb[0].mxu0
      %v872 = vadd.f32 0.0, %v871
      %v873 = vpop.f32.mrb[0].mxu0
      %874 = vmatprep.mubr.bf16.mxu0 0
      %875 = vmatmul.mubr.bf16.gmra.mrb[0].mxu0 %v540
      %v876 = vpop.f32.mrb[0].mxu0
      %v877 = vadd.f32 0.0, %v876
      %v878 = vpop.f32.mrb[0].mxu0
      %v879 = vpop.f32.mrb[0].mxu0
      %v880 = vadd.f32 0.0, %v879
      %v881 = vpop.f32.mrb[0].mxu0
      %882 = vmatprep.mubr.bf16.mxu0 0
      %883 = vmatmul.mubr.bf16.gmra.mrb[0].mxu0 %v543
      %v884 = vpop.f32.mrb[0].mxu0
      %v885 = vadd.f32 0.0, %v884
      %v886 = vpop.f32.mrb[0].mxu0
      %v887 = vpop.f32.mrb[0].mxu0
      %v888 = vadd.f32 0.0, %v887
      %v889 = vpop.f32.mrb[0].mxu0
      %890 = vmatprep.mubr.bf16.mxu0 0
      %891 = vmatmul.mubr.bf16.gmra.mrb[0].mxu0 %v546
      %v892 = vpop.f32.mrb[0].mxu0
      %v893 = vadd.f32 0.0, %v892
      %v894 = vpop.f32.mrb[0].mxu0
      %v895 = vpop.f32.mrb[0].mxu0
      %v896 = vadd.f32 0.0, %v895
      %v897 = vpop.f32.mrb[0].mxu0
      %898 = vmatprep.mubr.bf16.mxu0 0
      %899 = vmatmul.mubr.bf16.gmra.mrb[0].mxu0 %v549
      %v900 = vpop.f32.mrb[0].mxu0
      %v901 = vadd.f32 0.0, %v900
      %v902 = vpop.f32.mrb[0].mxu0
      %v903 = vpop.f32.mrb[0].mxu0
      %v904 = vadd.f32 0.0, %v903
      %v905 = vpop.f32.mrb[0].mxu0
      %906 = vmatprep.mubr.bf16.mxu0 0
      %907 = vmatmul.mubr.bf16.gmra.mrb[0].mxu0 %v552
      %v908 = vpop.f32.mrb[0].mxu0
      %v909 = vadd.f32 0.0, %v908
      %v910 = vpop.f32.mrb[0].mxu0
      %v911 = vpop.f32.mrb[0].mxu0
      %v912 = vadd.f32 0.0, %v911
      %v913 = vpop.f32.mrb[0].mxu0
      %914 = vmatprep.mubr.bf16.mxu0 0
      %915 = vmatmul.mubr.bf16.gmra.mrb[0].mxu0 %v824
      %v916 = vpop.f32.mrb[0].mxu0
      %v917 = vadd.f32 0.0, %v916
      %v918 = vpop.f32.mrb[0].mxu0
      %v919 = vpop.f32.mrb[0].mxu0
      %v920 = vadd.f32 0.0, %v919
      %v921 = vpop.f32.mrb[0].mxu0
      %922 = vdwg.mxu0
      %v923 = vadd.f32 %v725, %v861
      %v924 = vadd.f32 %v728, %v864
      %v925 = vadd.f32 %v733, %v869
      %v926 = vadd.f32 %v736, %v872
      %v927 = vadd.f32 %v741, %v877
      %v928 = vadd.f32 %v744, %v880
      %v929 = vadd.f32 %v749, %v885
      %v930 = vadd.f32 %v752, %v888
      %v931 = vadd.f32 %v757, %v893
      %v932 = vadd.f32 %v760, %v896
      %v933 = vadd.f32 %v765, %v901
      %v934 = vadd.f32 %v768, %v904
      %v935 = vadd.f32 %v773, %v909
      %v936 = vadd.f32 %v776, %v912
      %v937 = vadd.f32 %v781, %v917
      %v938 = vadd.f32 %v784, %v920
      %v939 = vld [vmem:[%s371] sm:$0x1]
      %v941 = vlaneseq
      %v942 = vshrl.u32 %v941, 7
      %v943 = vsub.s32 0, %v942
      %v944 = vrot.slane %v939, %v943
      %v946 = vadd.f32 %v923, %v944
      %v947 = vadd.f32 %v924, %v944
      %v948 = vadd.f32 %v925, %v944
      %v949 = vadd.f32 %v926, %v944
      %v950 = vadd.f32 %v927, %v944
      %v951 = vadd.f32 %v928, %v944
      %v952 = vadd.f32 %v929, %v944
      %v953 = vadd.f32 %v930, %v944
      %v954 = vadd.f32 %v931, %v944
      %v955 = vadd.f32 %v932, %v944
      %v956 = vadd.f32 %v933, %v944
      %v957 = vadd.f32 %v934, %v944
      %v958 = vadd.f32 %v935, %v944
      %v959 = vadd.f32 %v936, %v944
      %v960 = vadd.f32 %v937, %v944
      %v961 = vadd.f32 %v938, %v944
      %v962 = vmax.f32 %v946, 0.0
      %v963 = vmax.f32 %v947, 0.0
      %v964 = vmax.f32 %v948, 0.0
      %v965 = vmax.f32 %v949, 0.0
      %v966 = vmax.f32 %v950, 0.0
      %v967 = vmax.f32 %v951, 0.0
      %v968 = vmax.f32 %v952, 0.0
      %v969 = vmax.f32 %v953, 0.0
      %v970 = vmax.f32 %v954, 0.0
      %v971 = vmax.f32 %v955, 0.0
      %v972 = vmax.f32 %v956, 0.0
      %v973 = vmax.f32 %v957, 0.0
      %v974 = vmax.f32 %v958, 0.0
      %v975 = vmax.f32 %v959, 0.0
      %v976 = vmax.f32 %v960, 0.0
      %v977 = vmax.f32 %v961, 0.0
      %v978 = vpack.c.bf16 %v963, %v962
      %v979 = vpack.c.bf16 %v965, %v964
      %v980 = vpack.c.bf16 %v967, %v966
      %v981 = vpack.c.bf16 %v969, %v968
      %v982 = vpack.c.bf16 %v971, %v970
      %v983 = vpack.c.bf16 %v973, %v972
      %v984 = vpack.c.bf16 %v975, %v974
      %v985 = vpack.c.bf16 %v977, %v976
      %v994 = vunpack.c.l.b16 %v978
      %v995 = vunpack.c.h.b16 %v978
      %v996 = vunpack.c.l.b16 %v979
      %v997 = vunpack.c.h.b16 %v979
      %v998 = vunpack.c.l.b16 %v980
      %v999 = vunpack.c.h.b16 %v980
      %v1000 = vunpack.c.l.b16 %v981
      %v1001 = vunpack.c.h.b16 %v981
      %v1002 = vunpack.c.l.b16 %v982
      %v1003 = vunpack.c.h.b16 %v982
      %v1004 = vunpack.c.l.b16 %v983
      %v1005 = vunpack.c.h.b16 %v983
      %v1006 = vunpack.c.l.b16 %v984
      %v1007 = vunpack.c.h.b16 %v984
      %v1008 = vunpack.c.l.b16 %v985
      %v1009 = vunpack.c.h.b16 %v985
      %v1010 = vpack.c.b16 %v994, %v994
      %v1011 = vpack.c.b16 %v995, %v995
      %v1012 = vpack.c.b16 %v996, %v996
      %v1013 = vpack.c.b16 %v997, %v997
      %v1014 = vpack.c.b16 %v998, %v998
      %v1015 = vpack.c.b16 %v999, %v999
      %v1016 = vpack.c.b16 %v1000, %v1000
      %v1017 = vpack.c.b16 %v1001, %v1001
      %v1018 = vpack.c.b16 %v1002, %v1002
      %v1019 = vpack.c.b16 %v1003, %v1003
      %v1020 = vpack.c.b16 %v1004, %v1004
      %v1021 = vpack.c.b16 %v1005, %v1005
      %v1022 = vpack.c.b16 %v1006, %v1006
      %v1023 = vpack.c.b16 %v1007, %v1007
      %v1024 = vpack.c.b16 %v1008, %v1008
      %v1025 = vpack.c.b16 %v1009, %v1009
      %vm1042 = vcmask 257024
      %1043 = vst.msk [vmem:[%s384] sm:$0xf] %vm1042, %v1010
      %1044 = vst.msk [vmem:[%s384 + $0x4] sm:$0xf] %vm1042, %v1011
      %1045 = vst.msk [vmem:[%s384 + $0x8] sm:$0xf] %vm1042, %v1012
      %1046 = vst.msk [vmem:[%s384 + $0xc] sm:$0xf] %vm1042, %v1013
      %1047 = vst.msk [vmem:[%s384 + $0x10] sm:$0xf] %vm1042, %v1014
      %1048 = vst.msk [vmem:[%s384 + $0x14] sm:$0xf] %vm1042, %v1015
      %1049 = vst.msk [vmem:[%s384 + $0x18] sm:$0xf] %vm1042, %v1016
      %1050 = vst.msk [vmem:[%s384 + $0x1c] sm:$0xf] %vm1042, %v1017
      %1051 = vst.msk [vmem:[%s384 + $0x20] sm:$0xf] %vm1042, %v1018
      %1052 = vst.msk [vmem:[%s384 + $0x24] sm:$0xf] %vm1042, %v1019
      %1053 = vst.msk [vmem:[%s384 + $0x28] sm:$0xf] %vm1042, %v1020
      %1054 = vst.msk [vmem:[%s384 + $0x2c] sm:$0xf] %vm1042, %v1021
      %1055 = vst.msk [vmem:[%s384 + $0x30] sm:$0xf] %vm1042, %v1022
      %1056 = vst.msk [vmem:[%s384 + $0x34] sm:$0xf] %vm1042, %v1023
      %1057 = vst.msk [vmem:[%s384 + $0x38] sm:$0xf] %vm1042, %v1024
      %1058 = vst.msk [vmem:[%s384 + $0x3c] sm:$0xf] %vm1042, %v1025
      %s1059 = smul.u32 16, %s22
      %p1060 = scmp.lt.s32.totalorder %s20, 1
      %s1061 = scalar_select %p1060, %s20, 1
      %p1062 = scmp.lt.s32.totalorder %s21, 1
      %s1063 = scalar_select %p1062, %s21, 1
      %p1064 = scmp.lt.s32.totalorder %s1059, 31
      %s1065 = scalar_select %p1064, %s1059, 31
      %s1066 = smul.addr %s1063, 32
      %s1067 = sadd.s32 %s1065, %s1066
      %s1068 = smul.addr %s1061, 64
      %s1069 = sadd.s32 %s1067, %s1068
      %s1070 = smul.addr %s1069, 4
      %s1071 = scalar_lea.vmem %s4, %s1070
      // Predicated region
      $region37: #{sea_forward.5} parent=35 // pred_check
        %p1072 = pneg %p172
      $region38: #{sea_forward.5} parent=35 // pred_check_branch
        %1074 = sbr.rel (%p1072) target = $region40
      $region39: #{sea_forward.5} parent=35 // pred_region
        %s1075 = smul.u32 16, %s22
      $region40: #{sea_forward.5} parent=35 // pred_fallthru
        _
    $region36: #{sea_forward.5} parent=5 // pred_fallthru
      _
    %p1076 = scmp.le.s32.totalorder 2, %s10
    // Predicated region
    $region41: #{sea_forward.5} parent=5 // pred_check
      %p1077 = pneg %p1076
    $region42: #{sea_forward.5} parent=5 // pred_check_branch
      %1079 = sbr.rel (%p1077) target = $region44
    $region43: #{sea_forward.5} parent=5 // pred_region
      %s1080 = ssub.s32 %s10, 2
      // Predicated region
      $region45: #{sea_forward.5} parent=43 // pred_check
        %p1081 = pneg %p178
      $region46: #{sea_forward.5} parent=43 // pred_check_branch
        %1083 = sbr.rel (%p1081) target = $region48
      $region47: #{sea_forward.5} parent=43 // pred_region
        %s1084 = smul.u32 16, %s25
        %p1085 = scmp.lt.s32.totalorder %s23, 1
        %s1086 = scalar_select %p1085, %s23, 1
        %p1087 = scmp.lt.s32.totalorder %s24, 1
        %s1088 = scalar_select %p1087, %s24, 1
        %p1089 = scmp.lt.s32.totalorder %s1084, 31
        %s1090 = scalar_select %p1089, %s1084, 31
        %s1091 = smul.addr %s1088, 32
        %s1092 = sadd.s32 %s1090, %s1091
        %s1093 = smul.addr %s1086, 64
        %s1094 = sadd.s32 %s1092, %s1093
        %s1095 = smul.addr %s1094, 4
        %s1096 = scalar_lea.vmem %s4, %s1095
      $region48: #{sea_forward.5} parent=43 // pred_fallthru
        _
    $region44: #{sea_forward.5} parent=5 // pred_fallthru
      _
  $region6: #{sea_forward.5} parent=0 // loop_footer
    %s14 = sadd.s32 1, %s10
  $region7: #{sea_forward.5} parent=0 // loop_footer_branch
    %9 = sbr.rel target = $region3
  $region8: #{sea_forward.5} parent=0 // loop_exit
    _

// kernel: sea_forward.7
$region0: #{sea_forward.7}
  #allocation0 [shape = 'u32[]', space=smem, size = 0x4, offset = 0x4, fixed_abs, tag = 'smem constant byte address 0x4 - core index']
  #allocation1 [shape = 'u32[144,128]{1,0:T(1,128)}', space=vmem, size = 0x12000, scoped, tag = 'internal scratch']
  %s0 = inlined_call_operand.vmem [shape: bf16[2,288,96], index: 0, kind: input, shape index: {}, may-alias: {0,1}]
  %s1 = inlined_call_operand.vmem [shape: bf16[2,288,96], index: 1, kind: input, shape index: {}, may-alias: {0,1}]
  %s2 = inlined_call_operand.vmem [shape: bf16[2,288,96], index: 2, kind: input, shape index: {}, may-alias: {2,3}]
  %s3 = inlined_call_operand.vmem [shape: bf16[2,288,96], index: 3, kind: input, shape index: {}, may-alias: {2,3}]
  %s4 = inlined_call_operand.vmem [shape: bf16[2,2,256,32], index: 4, kind: input, shape index: {}]
  %s5 = inlined_call_operand.vmem [shape: bf16[3,96,64], index: 5, kind: input, shape index: {}]
  %s6 = inlined_call_operand.vmem [shape: f32[1,1,64], index: 6, kind: input, shape index: {}]
  %s7 = inlined_call_operand.vmem [shape: bf16[2,256,64], index: 7, kind: output, shape index: {}]
  %s8 = sld [smem:[#allocation0]]
  $region102: #{sea_forward.7} parent=0
    _
  %s10 = ssub.s32 1, %s8
  %s11 = scalar_select 0, %s10, %s8
  $region1: #{sea_forward.7} parent=0
    #allocation2 [shape = 'u8[131072]{0}', space=vmem, size = 0x20000, scoped, tag = 'input window, operand 4']
    loop: start=0, step=1, limit=6
    $region2: #{sea_forward.7} parent=1 // loop_pre_header
      _
    $region3: #{sea_forward.7} parent=1 // loop_header
      %s13 = sphi 0, %s17
      %p14 = scmp.ge.s32.totalorder %s13, 6
      %s20 = sphi 0, %s32
      %s21 = sphi 0, %s28
      %s22 = sphi 0, %s20
      %s23 = sphi 0, %s21
      %s24 = sphi 0, %s22
      %s25 = sphi 0, %s23
      %s37 = sphi 0, %s39
      %s40 = sphi 0, %s37
      %s41 = sphi 0, %s40
      %s57 = sphi 0, %s41
      %s69 = sphi 0, %s71
      %s72 = sphi 0, %s69
      %s73 = sphi 0, %s72
      %s89 = sphi 0, %s73
      %s97 = sphi 0, %s99
      %s100 = sphi 0, %s97
      %s101 = sphi 0, %s100
      %s117 = sphi 0, %s101
      %s129 = sphi 0, %s131
      %s132 = sphi 0, %s129
      %s133 = sphi 0, %s132
      %s149 = sphi 0, %s133
      %s157 = sphi 0, %s159
      %s160 = sphi 0, %s157
      %s161 = sphi 0, %s160
      %s177 = sphi 0, %s161
      %s181 = sphi 0, %s181
      %s183 = sphi 0, %s181
      %s184 = sphi 0, %s183
      %s198 = sphi 0, %s184
      %s202 = sphi 0, %s202
      %s204 = sphi 0, %s202
      %s205 = sphi 0, %s204
      %s219 = sphi 0, %s205
      %s227 = sphi 0, %s229
      %s230 = sphi 0, %s227
      %s231 = sphi 0, %s230
      %s247 = sphi 0, %s231
    $region4: #{sea_forward.7} parent=1 // loop_header_branch
      %16 = sbr.rel (%p14) target = $region8
    $region5: #{sea_forward.7} parent=1 // loop_body
      %s18 = ssub.s32 %s13, 1
      %s19 = ssub.s32 %s13, 2
      %s26 = sadd.s32 1, %s21
      %p27 = scmp.ge.s32.totalorder %s26, 2
      %s28 = scalar_select %p27, 0, %s26
      %s29 = sadd.s32 1, %s20
      %s30 = scalar_select %p27, %s29, %s20
      %p31 = scmp.ge.s32.totalorder %s30, 2
      %s32 = scalar_select %p31, 0, %s30
      %s33 = ssub.s32 %s20, %s32
      %s34 = ssub.s32 %s21, %s28
      %s35 = sor.u32 %s33, %s34
      %p36 = scmp.eq.s32.totalorder %s35, 0
      %s38 = sadd.s32 %s37, 1
      %s39 = scalar_select %p36, %s37, %s38
      %p42 = pneg %p36
      %p43 = scmp.eq.s32.totalorder %s13, 3
      %p44 = por %p42, %p43
      %p45 = scmp.ne.s32.totalorder %s37, %s40
      %p46 = scmp.eq.s32.totalorder %s13, 0
      %p47 = por %p45, %p46
      %p48 = scmp.ne.s32.totalorder %s37, %s40
      %p49 = scmp.eq.s32.totalorder %s18, 3
      %p50 = por %p48, %p49
      %p51 = scmp.ne.s32.totalorder %s40, %s41
      %p52 = scmp.eq.s32.totalorder %s18, 0
      %p53 = por %p51, %p52
      %p54 = scmp.ne.s32.totalorder %s40, %s41
      %p55 = scmp.eq.s32.totalorder %s19, 3
      %p56 = por %p54, %p55
      %p58 = scmp.ne.s32.totalorder %s41, %s57
      %p59 = scmp.eq.s32.totalorder %s19, 0
      %p60 = por %p58, %p59
      %s61 = sadd.s32 %s21, 1
      %s62 = smul.u32 %s61, 4
      %s63 = sadd.s32 %s28, 1
      %s64 = smul.u32 %s63, 4
      %s65 = ssub.s32 %s20, %s32
      %s66 = ssub.s32 %s62, %s64
      %s67 = sor.u32 %s65, %s66
      %p68 = scmp.eq.s32.totalorder %s67, 0
      %s70 = sadd.s32 %s69, 1
      %s71 = scalar_select %p68, %s69, %s70
      %p74 = pneg %p68
      %p75 = scmp.eq.s32.totalorder %s13, 3
      %p76 = por %p74, %p75
      %p77 = scmp.ne.s32.totalorder %s69, %s72
      %p78 = scmp.eq.s32.totalorder %s13, 0
      %p79 = por %p77, %p78
      %p80 = scmp.ne.s32.totalorder %s69, %s72
      %p81 = scmp.eq.s32.totalorder %s18, 3
      %p82 = por %p80, %p81
      %p83 = scmp.ne.s32.totalorder %s72, %s73
      %p84 = scmp.eq.s32.totalorder %s18, 0
      %p85 = por %p83, %p84
      %p86 = scmp.ne.s32.totalorder %s72, %s73
      %p87 = scmp.eq.s32.totalorder %s19, 3
      %p88 = por %p86, %p87
      %p90 = scmp.ne.s32.totalorder %s73, %s89
      %p91 = scmp.eq.s32.totalorder %s19, 0
      %p92 = por %p90, %p91
      %s93 = ssub.s32 %s20, %s32
      %s94 = ssub.s32 %s21, %s28
      %s95 = sor.u32 %s93, %s94
      %p96 = scmp.eq.s32.totalorder %s95, 0
      %s98 = sadd.s32 %s97, 1
      %s99 = scalar_select %p96, %s97, %s98
      %p102 = pneg %p96
      %p103 = scmp.eq.s32.totalorder %s13, 3
      %p104 = por %p102, %p103
      %p105 = scmp.ne.s32.totalorder %s97, %s100
      %p106 = scmp.eq.s32.totalorder %s13, 0
      %p107 = por %p105, %p106
      %p108 = scmp.ne.s32.totalorder %s97, %s100
      %p109 = scmp.eq.s32.totalorder %s18, 3
      %p110 = por %p108, %p109
      %p111 = scmp.ne.s32.totalorder %s100, %s101
      %p112 = scmp.eq.s32.totalorder %s18, 0
      %p113 = por %p111, %p112
      %p114 = scmp.ne.s32.totalorder %s100, %s101
      %p115 = scmp.eq.s32.totalorder %s19, 3
      %p116 = por %p114, %p115
      %p118 = scmp.ne.s32.totalorder %s101, %s117
      %p119 = scmp.eq.s32.totalorder %s19, 0
      %p120 = por %p118, %p119
      %s121 = sadd.s32 %s21, 1
      %s122 = smul.u32 %s121, 4
      %s123 = sadd.s32 %s28, 1
      %s124 = smul.u32 %s123, 4
      %s125 = ssub.s32 %s20, %s32
      %s126 = ssub.s32 %s122, %s124
      %s127 = sor.u32 %s125, %s126
      %p128 = scmp.eq.s32.totalorder %s127, 0
      %s130 = sadd.s32 %s129, 1
      %s131 = scalar_select %p128, %s129, %s130
      %p134 = pneg %p128
      %p135 = scmp.eq.s32.totalorder %s13, 3
      %p136 = por %p134, %p135
      %p137 = scmp.ne.s32.totalorder %s129, %s132
      %p138 = scmp.eq.s32.totalorder %s13, 0
      %p139 = por %p137, %p138
      %p140 = scmp.ne.s32.totalorder %s129, %s132
      %p141 = scmp.eq.s32.totalorder %s18, 3
      %p142 = por %p140, %p141
      %p143 = scmp.ne.s32.totalorder %s132, %s133
      %p144 = scmp.eq.s32.totalorder %s18, 0
      %p145 = por %p143, %p144
      %p146 = scmp.ne.s32.totalorder %s132, %s133
      %p147 = scmp.eq.s32.totalorder %s19, 3
      %p148 = por %p146, %p147
      %p150 = scmp.ne.s32.totalorder %s133, %s149
      %p151 = scmp.eq.s32.totalorder %s19, 0
      %p152 = por %p150, %p151
      %s153 = ssub.s32 %s20, %s32
      %s154 = ssub.s32 %s21, %s28
      %s155 = sor.u32 %s153, %s154
      %p156 = scmp.eq.s32.totalorder %s155, 0
      %s158 = sadd.s32 %s157, 1
      %s159 = scalar_select %p156, %s157, %s158
      %p162 = pneg %p156
      %p163 = scmp.eq.s32.totalorder %s13, 3
      %p164 = por %p162, %p163
      %p165 = scmp.ne.s32.totalorder %s157, %s160
      %p166 = scmp.eq.s32.totalorder %s13, 0
      %p167 = por %p165, %p166
      %p168 = scmp.ne.s32.totalorder %s157, %s160
      %p169 = scmp.eq.s32.totalorder %s18, 3
      %p170 = por %p168, %p169
      %p171 = scmp.ne.s32.totalorder %s160, %s161
      %p172 = scmp.eq.s32.totalorder %s18, 0
      %p173 = por %p171, %p172
      %p174 = scmp.ne.s32.totalorder %s160, %s161
      %p175 = scmp.eq.s32.totalorder %s19, 3
      %p176 = por %p174, %p175
      %p178 = scmp.ne.s32.totalorder %s161, %s177
      %p179 = scmp.eq.s32.totalorder %s19, 0
      %p180 = por %p178, %p179
      %s182 = sadd.s32 %s181, 1
      %p185 = scmp.eq.s32.totalorder %s13, 3
      %p186 = scmp.ne.s32.totalorder %s181, %s183
      %p187 = scmp.eq.s32.totalorder %s13, 0
      %p188 = por %p186, %p187
      %p189 = scmp.ne.s32.totalorder %s181, %s183
      %p190 = scmp.eq.s32.totalorder %s18, 3
      %p191 = por %p189, %p190
      %p192 = scmp.ne.s32.totalorder %s183, %s184
      %p193 = scmp.eq.s32.totalorder %s18, 0
      %p194 = por %p192, %p193
      %p195 = scmp.ne.s32.totalorder %s183, %s184
      %p196 = scmp.eq.s32.totalorder %s19, 3
      %p197 = por %p195, %p196
      %p199 = scmp.ne.s32.totalorder %s184, %s198
      %p200 = scmp.eq.s32.totalorder %s19, 0
      %p201 = por %p199, %p200
      %s203 = sadd.s32 %s202, 1
      %p206 = scmp.eq.s32.totalorder %s13, 3
      %p207 = scmp.ne.s32.totalorder %s202, %s204
      %p208 = scmp.eq.s32.totalorder %s13, 0
      %p209 = por %p207, %p208
      %p210 = scmp.ne.s32.totalorder %s202, %s204
      %p211 = scmp.eq.s32.totalorder %s18, 3
      %p212 = por %p210, %p211
      %p213 = scmp.ne.s32.totalorder %s204, %s205
      %p214 = scmp.eq.s32.totalorder %s18, 0
      %p215 = por %p213, %p214
      %p216 = scmp.ne.s32.totalorder %s204, %s205
      %p217 = scmp.eq.s32.totalorder %s19, 3
      %p218 = por %p216, %p217
      %p220 = scmp.ne.s32.totalorder %s205, %s219
      %p221 = scmp.eq.s32.totalorder %s19, 0
      %p222 = por %p220, %p221
      %s223 = ssub.s32 %s20, %s32
      %s224 = ssub.s32 %s21, %s28
      %s225 = sor.u32 %s223, %s224
      %p226 = scmp.eq.s32.totalorder %s225, 0
      %s228 = sadd.s32 %s227, 1
      %s229 = scalar_select %p226, %s227, %s228
      %p232 = pneg %p226
      %p233 = scmp.eq.s32.totalorder %s13, 3
      %p234 = por %p232, %p233
      %p235 = scmp.ne.s32.totalorder %s227, %s230
      %p236 = scmp.eq.s32.totalorder %s13, 0
      %p237 = por %p235, %p236
      %p238 = scmp.ne.s32.totalorder %s227, %s230
      %p239 = scmp.eq.s32.totalorder %s18, 3
      %p240 = por %p238, %p239
      %p241 = scmp.ne.s32.totalorder %s230, %s231
      %p242 = scmp.eq.s32.totalorder %s18, 0
      %p243 = por %p241, %p242
      %p244 = scmp.ne.s32.totalorder %s230, %s231
      %p245 = scmp.eq.s32.totalorder %s19, 3
      %p246 = por %p244, %p245
      %p248 = scmp.ne.s32.totalorder %s231, %s247
      %p249 = scmp.eq.s32.totalorder %s19, 0
      %p250 = por %p248, %p249
      %p251 = scmp.le.s32.totalorder 1, %s13
      %p252 = scmp.lt.s32.totalorder %s13, 5
      %p253 = pnand %p251, %p252
      %p254 = pneg %p253
      // Predicated region
      $region9: #{sea_forward.7} parent=5 // pred_check
        _
      $region10: #{sea_forward.7} parent=5 // pred_check_branch
        %256 = sbr.rel (%p253) target = $region12
      $region11: #{sea_forward.7} parent=5 // pred_region
        %s257 = ssub.s32 %s13, 1
        // Predicated region
        $region13: #{sea_forward.7} parent=11 // pred_check
          %p258 = pneg %p194
        $region14: #{sea_forward.7} parent=11 // pred_check_branch
          %260 = sbr.rel (%p258) target = $region16
        $region15: #{sea_forward.7} parent=11 // pred_region
          _
        $region16: #{sea_forward.7} parent=11 // pred_fallthru
          _
        // Predicated region
        $region17: #{sea_forward.7} parent=11 // pred_check
          %p261 = pneg %p215
        $region18: #{sea_forward.7} parent=11 // pred_check_branch
          %263 = sbr.rel (%p261) target = $region20
        $region19: #{sea_forward.7} parent=11 // pred_region
          _
        $region20: #{sea_forward.7} parent=11 // pred_fallthru
          _
      $region12: #{sea_forward.7} parent=5 // pred_fallthru
        _
      %p264 = scmp.lt.s32.totalorder %s13, 4
      // Predicated region
      $region21: #{sea_forward.7} parent=5 // pred_check
        %p265 = pneg %p264
      $region22: #{sea_forward.7} parent=5 // pred_check_branch
        %267 = sbr.rel (%p265) target = $region24
      $region23: #{sea_forward.7} parent=5 // pred_region
        // Predicated region
        $region25: #{sea_forward.7} parent=23 // pred_check
          %p268 = pneg %p47
        $region26: #{sea_forward.7} parent=23 // pred_check_branch
          %270 = sbr.rel (%p268) target = $region28
        $region27: #{sea_forward.7} parent=23 // pred_region
          %s271 = smul.u32 16, %s21
          %s272 = ssub.s32 36, %s271
          %p273 = scmp.lt.s32.totalorder %s272, 16
          %s274 = scalar_select %p273, %s272, 16
          %s275 = smul.u32 64, %s274
          %p276 = scmp.lt.s32.totalorder %s20, 1
          %s277 = scalar_select %p276, %s20, 1
          %p278 = scmp.lt.s32.totalorder %s271, 35
          %s279 = scalar_select %p278, %s271, 35
          %s280 = smul.addr %s277, 36
          %s281 = sadd.s32 %s279, %s280
          %s282 = smul.addr %s281, 4
          %s283 = scalar_lea.vmem %s0, %s282
          %s284 = smul.u32 16, %s21
          %s285 = ssub.s32 36, %s284
          %p286 = scmp.lt.s32.totalorder %s285, 16
          %s287 = scalar_select %p286, %s285, 16
          %s288 = smul.u32 64, %s287
        $region28: #{sea_forward.7} parent=23 // pred_fallthru
          _
        // Predicated region
        $region29: #{sea_forward.7} parent=23 // pred_check
          %p289 = pneg %p79
        $region30: #{sea_forward.7} parent=23 // pred_check_branch
          %291 = sbr.rel (%p289) target = $region32
        $region31: #{sea_forward.7} parent=23 // pred_region
          %s292 = sadd.s32 %s21, 1
          %s293 = smul.u32 %s292, 4
          %s294 = smul.u32 4, %s293
          %p295 = scmp.lt.s32.totalorder %s20, 1
          %s296 = scalar_select %p295, %s20, 1
          %p297 = scmp.lt.s32.totalorder %s294, 35
          %s298 = scalar_select %p297, %s294, 35
          %s299 = smul.addr %s296, 36
          %s300 = sadd.s32 %s298, %s299
          %s301 = smul.addr %s300, 4
          %s302 = scalar_lea.vmem %s1, %s301
          %s303 = sadd.s32 %s21, 1
          %s304 = smul.u32 %s303, 4
          %s305 = smul.u32 4, %s304
        $region32: #{sea_forward.7} parent=23 // pred_fallthru
          _
        // Predicated region
        $region33: #{sea_forward.7} parent=23 // pred_check
          %p306 = pneg %p107
        $region34: #{sea_forward.7} parent=23 // pred_check_branch
          %308 = sbr.rel (%p306) target = $region36
        $region35: #{sea_forward.7} parent=23 // pred_region
          %s309 = smul.u32 16, %s21
          %s310 = ssub.s32 36, %s309
          %p311 = scmp.lt.s32.totalorder %s310, 16
          %s312 = scalar_select %p311, %s310, 16
          %s313 = smul.u32 64, %s312
          %p314 = scmp.lt.s32.totalorder %s20, 1
          %s315 = scalar_select %p314, %s20, 1
          %p316 = scmp.lt.s32.totalorder %s309, 35
          %s317 = scalar_select %p316, %s309, 35
          %s318 = smul.addr %s315, 36
          %s319 = sadd.s32 %s317, %s318
          %s320 = smul.addr %s319, 4
          %s321 = scalar_lea.vmem %s2, %s320
          %s322 = smul.u32 16, %s21
          %s323 = ssub.s32 36, %s322
          %p324 = scmp.lt.s32.totalorder %s323, 16
          %s325 = scalar_select %p324, %s323, 16
          %s326 = smul.u32 64, %s325
        $region36: #{sea_forward.7} parent=23 // pred_fallthru
          _
        // Predicated region
        $region37: #{sea_forward.7} parent=23 // pred_check
          %p327 = pneg %p139
        $region38: #{sea_forward.7} parent=23 // pred_check_branch
          %329 = sbr.rel (%p327) target = $region40
        $region39: #{sea_forward.7} parent=23 // pred_region
          %s330 = sadd.s32 %s21, 1
          %s331 = smul.u32 %s330, 4
          %s332 = smul.u32 4, %s331
          %p333 = scmp.lt.s32.totalorder %s20, 1
          %s334 = scalar_select %p333, %s20, 1
          %p335 = scmp.lt.s32.totalorder %s332, 35
          %s336 = scalar_select %p335, %s332, 35
          %s337 = smul.addr %s334, 36
          %s338 = sadd.s32 %s336, %s337
          %s339 = smul.addr %s338, 4
          %s340 = scalar_lea.vmem %s3, %s339
          %s341 = sadd.s32 %s21, 1
          %s342 = smul.u32 %s341, 4
          %s343 = smul.u32 4, %s342
        $region40: #{sea_forward.7} parent=23 // pred_fallthru
          _
        // Predicated region
        $region41: #{sea_forward.7} parent=23 // pred_check
          %p344 = pneg %p167
        $region42: #{sea_forward.7} parent=23 // pred_check_branch
          %346 = sbr.rel (%p344) target = $region44
        $region43: #{sea_forward.7} parent=23 // pred_region
          %s347 = sand.u32 %s157, 1
          %s348 = sand.u32 %s157, 1
          %s349 = smul.addr %s348, 128
          %s350 = scalar_lea.vmem [#allocation2], %s349
          %s351 = smul.u32 16, %s21
          %s352 = smul.addr %s20, 32
          %s353 = sadd.s32 %s351, %s352
          %s354 = smul.addr %s353, 4
          %s355 = scalar_lea.vmem %s4, %s354
          // Predicated region
          $region45: #{sea_forward.7} parent=43 // pred_check
            _
          $region46: #{sea_forward.7} parent=43 // pred_check_branch
            %357 = sbr.rel (0) target = $region48
          $region47: #{sea_forward.7} parent=43 // pred_region
            // Predicated region
            $region49: #{sea_forward.7} parent=47 // pred_check
              _
            $region50: #{sea_forward.7} parent=47 // pred_check_branch
              %359 = sbr.rel target = $region52
            $region51: #{sea_forward.7} parent=47 // pred_region
              // Predicated region
              $region64: #{sea_forward.7} parent=51 // pred_check
                _
              $region65: #{sea_forward.7} parent=51 // pred_check_branch
                %436 = sbr.rel (0) target = $region67
              $region66: #{sea_forward.7} parent=51 // pred_region
                loop: start=0, step=1, limit=1
                $region68: #{sea_forward.7} parent=66 // loop_pre_header
                  _
                $region69: #{sea_forward.7} parent=66 // loop_header
                  %s438 = sphi 0, %s442
                  %p439 = scmp.ge.s32.totalorder %s438, 1
                  %s443 = sphi %s355, %s355
                  %s444 = sphi %s350, %s350
                $region70: #{sea_forward.7} parent=66 // loop_header_branch
                  %441 = sbr.rel (%p439) target = $region74
                $region71: #{sea_forward.7} parent=66 // loop_body
                  _
                $region72: #{sea_forward.7} parent=66 // loop_footer
                  %s442 = sadd.s32 1, %s438
                $region73: #{sea_forward.7} parent=66 // loop_footer_branch
                  %437 = sbr.rel target = $region69
                $region74: #{sea_forward.7} parent=66 // loop_exit
                  _
                loop: start=0, step=1, limit=1
                $region75: #{sea_forward.7} parent=66 // loop_pre_header
                  _
                $region76: #{sea_forward.7} parent=66 // loop_header
                  %s447 = sphi 0, %s451
                  %p448 = scmp.ge.s32.totalorder %s447, 1
                  %s452 = sphi %s355, %s355
                  %s453 = sphi %s350, %s350
                $region77: #{sea_forward.7} parent=66 // loop_header_branch
                  %450 = sbr.rel (%p448) target = $region81
                $region78: #{sea_forward.7} parent=66 // loop_body
                  %v454 = vld [vmem:[%s452] sm:$0xf]
                  %455 = vst [vmem:[%s453] sm:$0xf] %v454
                  %v456 = vld [vmem:[%s452 + $0x4] sm:$0xf]
                  %457 = vst [vmem:[%s453 + $0x4] sm:$0xf] %v456
                  %v458 = vld [vmem:[%s452 + $0x8] sm:$0xf]
                  %459 = vst [vmem:[%s453 + $0x8] sm:$0xf] %v458
                  %v460 = vld [vmem:[%s452 + $0xc] sm:$0xf]
                  %461 = vst [vmem:[%s453 + $0xc] sm:$0xf] %v460
                  %v462 = vld [vmem:[%s452 + $0x10] sm:$0xf]
                  %463 = vst [vmem:[%s453 + $0x10] sm:$0xf] %v462
                  %v464 = vld [vmem:[%s452 + $0x14] sm:$0xf]
                  %465 = vst [vmem:[%s453 + $0x14] sm:$0xf] %v464
                  %v466 = vld [vmem:[%s452 + $0x18] sm:$0xf]
                  %467 = vst [vmem:[%s453 + $0x18] sm:$0xf] %v466
                  %v468 = vld [vmem:[%s452 + $0x1c] sm:$0xf]
                  %469 = vst [vmem:[%s453 + $0x1c] sm:$0xf] %v468
                  %v470 = vld [vmem:[%s452 + $0x20] sm:$0xf]
                  %471 = vst [vmem:[%s453 + $0x20] sm:$0xf] %v470
                  %v472 = vld [vmem:[%s452 + $0x24] sm:$0xf]
                  %473 = vst [vmem:[%s453 + $0x24] sm:$0xf] %v472
                  %v474 = vld [vmem:[%s452 + $0x28] sm:$0xf]
                  %475 = vst [vmem:[%s453 + $0x28] sm:$0xf] %v474
                  %v476 = vld [vmem:[%s452 + $0x2c] sm:$0xf]
                  %477 = vst [vmem:[%s453 + $0x2c] sm:$0xf] %v476
                  %v478 = vld [vmem:[%s452 + $0x30] sm:$0xf]
                  %479 = vst [vmem:[%s453 + $0x30] sm:$0xf] %v478
                  %v480 = vld [vmem:[%s452 + $0x34] sm:$0xf]
                  %481 = vst [vmem:[%s453 + $0x34] sm:$0xf] %v480
                  %v482 = vld [vmem:[%s452 + $0x38] sm:$0xf]
                  %483 = vst [vmem:[%s453 + $0x38] sm:$0xf] %v482
                  %v484 = vld [vmem:[%s452 + $0x3c] sm:$0xf]
                  %485 = vst [vmem:[%s453 + $0x3c] sm:$0xf] %v484
                  %v486 = vld [vmem:[%s452 + $0x100] sm:$0xf]
                  %487 = vst [vmem:[%s453 + $0x40] sm:$0xf] %v486
                  %v488 = vld [vmem:[%s452 + $0x104] sm:$0xf]
                  %489 = vst [vmem:[%s453 + $0x44] sm:$0xf] %v488
                  %v490 = vld [vmem:[%s452 + $0x108] sm:$0xf]
                  %491 = vst [vmem:[%s453 + $0x48] sm:$0xf] %v490
                  %v492 = vld [vmem:[%s452 + $0x10c] sm:$0xf]
                  %493 = vst [vmem:[%s453 + $0x4c] sm:$0xf] %v492
                  %v494 = vld [vmem:[%s452 + $0x110] sm:$0xf]
                  %495 = vst [vmem:[%s453 + $0x50] sm:$0xf] %v494
                  %v496 = vld [vmem:[%s452 + $0x114] sm:$0xf]
                  %497 = vst [vmem:[%s453 + $0x54] sm:$0xf] %v496
                  %v498 = vld [vmem:[%s452 + $0x118] sm:$0xf]
                  %499 = vst [vmem:[%s453 + $0x58] sm:$0xf] %v498
                  %v500 = vld [vmem:[%s452 + $0x11c] sm:$0xf]
                  %501 = vst [vmem:[%s453 + $0x5c] sm:$0xf] %v500
                  %v502 = vld [vmem:[%s452 + $0x120] sm:$0xf]
                  %503 = vst [vmem:[%s453 + $0x60] sm:$0xf] %v502
                  %v504 = vld [vmem:[%s452 + $0x124] sm:$0xf]
                  %505 = vst [vmem:[%s453 + $0x64] sm:$0xf] %v504
                  %v506 = vld [vmem:[%s452 + $0x128] sm:$0xf]
                  %507 = vst [vmem:[%s453 + $0x68] sm:$0xf] %v506
                  %v508 = vld [vmem:[%s452 + $0x12c] sm:$0xf]
                  %509 = vst [vmem:[%s453 + $0x6c] sm:$0xf] %v508
                  %v510 = vld [vmem:[%s452 + $0x130] sm:$0xf]
                  %511 = vst [vmem:[%s453 + $0x70] sm:$0xf] %v510
                  %v512 = vld [vmem:[%s452 + $0x134] sm:$0xf]
                  %513 = vst [vmem:[%s453 + $0x74] sm:$0xf] %v512
                  %v514 = vld [vmem:[%s452 + $0x138] sm:$0xf]
                  %515 = vst [vmem:[%s453 + $0x78] sm:$0xf] %v514
                  %v516 = vld [vmem:[%s452 + $0x13c] sm:$0xf]
                  %517 = vst [vmem:[%s453 + $0x7c] sm:$0xf] %v516
                $region79: #{sea_forward.7} parent=66 // loop_footer
                  %s451 = sadd.s32 1, %s447
                $region80: #{sea_forward.7} parent=66 // loop_footer_branch
                  %446 = sbr.rel target = $region76
                $region81: #{sea_forward.7} parent=66 // loop_exit
                  _
              $region67: #{sea_forward.7} parent=51 // pred_fallthru
                _
            $region52: #{sea_forward.7} parent=47 // pred_fallthru
              _
            // Predicated region
            $region53: #{sea_forward.7} parent=47 // pred_check
              _
            $region54: #{sea_forward.7} parent=47 // pred_check_branch
              %361 = sbr.rel (0) target = $region56
            $region55: #{sea_forward.7} parent=47 // pred_region
              loop: start=0, step=1, limit=1
              $region57: #{sea_forward.7} parent=55 // loop_pre_header
                _
              $region58: #{sea_forward.7} parent=55 // loop_header
                %s364 = sphi 0, %s368
                %p365 = scmp.ge.s32.totalorder %s364, 1
                %s369 = sphi %s355, %s355
                %s370 = sphi %s350, %s350
              $region59: #{sea_forward.7} parent=55 // loop_header_branch
                %367 = sbr.rel (%p365) target = $region63
              $region60: #{sea_forward.7} parent=55 // loop_body
                %v371 = vld [vmem:[%s369] sm:$0xf]
                %372 = vst [vmem:[%s370] sm:$0xf] %v371
                %v373 = vld [vmem:[%s369 + $0x4] sm:$0xf]
                %374 = vst [vmem:[%s370 + $0x4] sm:$0xf] %v373
                %v375 = vld [vmem:[%s369 + $0x8] sm:$0xf]
                %376 = vst [vmem:[%s370 + $0x8] sm:$0xf] %v375
                %v377 = vld [vmem:[%s369 + $0xc] sm:$0xf]
                %378 = vst [vmem:[%s370 + $0xc] sm:$0xf] %v377
                %v379 = vld [vmem:[%s369 + $0x10] sm:$0xf]
                %380 = vst [vmem:[%s370 + $0x10] sm:$0xf] %v379
                %v381 = vld [vmem:[%s369 + $0x14] sm:$0xf]
                %382 = vst [vmem:[%s370 + $0x14] sm:$0xf] %v381
                %v383 = vld [vmem:[%s369 + $0x18] sm:$0xf]
                %384 = vst [vmem:[%s370 + $0x18] sm:$0xf] %v383
                %v385 = vld [vmem:[%s369 + $0x1c] sm:$0xf]
                %386 = vst [vmem:[%s370 + $0x1c] sm:$0xf] %v385
                %v387 = vld [vmem:[%s369 + $0x20] sm:$0xf]
                %388 = vst [vmem:[%s370 + $0x20] sm:$0xf] %v387
                %v389 = vld [vmem:[%s369 + $0x24] sm:$0xf]
                %390 = vst [vmem:[%s370 + $0x24] sm:$0xf] %v389
                %v391 = vld [vmem:[%s369 + $0x28] sm:$0xf]
                %392 = vst [vmem:[%s370 + $0x28] sm:$0xf] %v391
                %v393 = vld [vmem:[%s369 + $0x2c] sm:$0xf]
                %394 = vst [vmem:[%s370 + $0x2c] sm:$0xf] %v393
                %v395 = vld [vmem:[%s369 + $0x30] sm:$0xf]
                %396 = vst [vmem:[%s370 + $0x30] sm:$0xf] %v395
                %v397 = vld [vmem:[%s369 + $0x34] sm:$0xf]
                %398 = vst [vmem:[%s370 + $0x34] sm:$0xf] %v397
                %v399 = vld [vmem:[%s369 + $0x38] sm:$0xf]
                %400 = vst [vmem:[%s370 + $0x38] sm:$0xf] %v399
                %v401 = vld [vmem:[%s369 + $0x3c] sm:$0xf]
                %402 = vst [vmem:[%s370 + $0x3c] sm:$0xf] %v401
                %v403 = vld [vmem:[%s369 + $0x100] sm:$0xf]
                %404 = vst [vmem:[%s370 + $0x40] sm:$0xf] %v403
                %v405 = vld [vmem:[%s369 + $0x104] sm:$0xf]
                %406 = vst [vmem:[%s370 + $0x44] sm:$0xf] %v405
                %v407 = vld [vmem:[%s369 + $0x108] sm:$0xf]
                %408 = vst [vmem:[%s370 + $0x48] sm:$0xf] %v407
                %v409 = vld [vmem:[%s369 + $0x10c] sm:$0xf]
                %410 = vst [vmem:[%s370 + $0x4c] sm:$0xf] %v409
                %v411 = vld [vmem:[%s369 + $0x110] sm:$0xf]
                %412 = vst [vmem:[%s370 + $0x50] sm:$0xf] %v411
                %v413 = vld [vmem:[%s369 + $0x114] sm:$0xf]
                %414 = vst [vmem:[%s370 + $0x54] sm:$0xf] %v413
                %v415 = vld [vmem:[%s369 + $0x118] sm:$0xf]
                %416 = vst [vmem:[%s370 + $0x58] sm:$0xf] %v415
                %v417 = vld [vmem:[%s369 + $0x11c] sm:$0xf]
                %418 = vst [vmem:[%s370 + $0x5c] sm:$0xf] %v417
                %v419 = vld [vmem:[%s369 + $0x120] sm:$0xf]
                %420 = vst [vmem:[%s370 + $0x60] sm:$0xf] %v419
                %v421 = vld [vmem:[%s369 + $0x124] sm:$0xf]
                %422 = vst [vmem:[%s370 + $0x64] sm:$0xf] %v421
                %v423 = vld [vmem:[%s369 + $0x128] sm:$0xf]
                %424 = vst [vmem:[%s370 + $0x68] sm:$0xf] %v423
                %v425 = vld [vmem:[%s369 + $0x12c] sm:$0xf]
                %426 = vst [vmem:[%s370 + $0x6c] sm:$0xf] %v425
                %v427 = vld [vmem:[%s369 + $0x130] sm:$0xf]
                %428 = vst [vmem:[%s370 + $0x70] sm:$0xf] %v427
                %v429 = vld [vmem:[%s369 + $0x134] sm:$0xf]
                %430 = vst [vmem:[%s370 + $0x74] sm:$0xf] %v429
                %v431 = vld [vmem:[%s369 + $0x138] sm:$0xf]
                %432 = vst [vmem:[%s370 + $0x78] sm:$0xf] %v431
                %v433 = vld [vmem:[%s369 + $0x13c] sm:$0xf]
                %434 = vst [vmem:[%s370 + $0x7c] sm:$0xf] %v433
              $region61: #{sea_forward.7} parent=55 // loop_footer
                %s368 = sadd.s32 1, %s364
              $region62: #{sea_forward.7} parent=55 // loop_footer_branch
                %363 = sbr.rel target = $region58
              $region63: #{sea_forward.7} parent=55 // loop_exit
                _
            $region56: #{sea_forward.7} parent=47 // pred_fallthru
              _
          $region48: #{sea_forward.7} parent=43 // pred_fallthru
            _
          %518 = vnop
        $region44: #{sea_forward.7} parent=23 // pred_fallthru
          _
      $region24: #{sea_forward.7} parent=5 // pred_fallthru
        _
      %p519 = scmp.le.s32.totalorder 1, %s13
      %p520 = scmp.lt.s32.totalorder %s13, 5
      %p521 = pnand %p519, %p520
      %p522 = pneg %p521
      // Predicated region
      $region82: #{sea_forward.7} parent=5 // pred_check
        _
      $region83: #{sea_forward.7} parent=5 // pred_check_branch
        %524 = sbr.rel (%p521) target = $region85
      $region84: #{sea_forward.7} parent=5 // pred_region
        %s525 = ssub.s32 %s13, 1
        %s526 = sand.u32 %s160, 1
        %s527 = sand.u32 %s160, 1
        %s528 = smul.addr %s527, 128
        %s529 = scalar_lea.vmem [#allocation2], %s528
        // Predicated region
        $region86: #{sea_forward.7} parent=84 // pred_check
          %p530 = pneg %p173
        $region87: #{sea_forward.7} parent=84 // pred_check_branch
          %532 = sbr.rel (%p530) target = $region89
        $region88: #{sea_forward.7} parent=84 // pred_region
          _
        $region89: #{sea_forward.7} parent=84 // pred_fallthru
          _
        %s533 = smul.u32 16, %s23
        %s534 = ssub.s32 36, %s533
        %p535 = scmp.lt.s32.totalorder %s534, 16
        %s536 = scalar_select %p535, %s534, 16
        %s537 = smul.u32 64, %s536
        %p538 = scmp.lt.s32.totalorder %s22, 1
        %s539 = scalar_select %p538, %s22, 1
        %p540 = scmp.lt.s32.totalorder %s533, 35
        %s541 = scalar_select %p540, %s533, 35
        %s542 = smul.addr %s539, 36
        %s543 = sadd.s32 %s541, %s542
        %s544 = smul.addr %s543, 4
        %s545 = scalar_lea.vmem %s0, %s544
        %p546 = pneg %p53
        %p547 = pneg %p50
        %s548 = sadd.s32 %s23, 1
        %s549 = smul.u32 %s548, 4
        %s550 = smul.u32 4, %s549
        %p551 = scmp.lt.s32.totalorder %s22, 1
        %s552 = scalar_select %p551, %s22, 1
        %p553 = scmp.lt.s32.totalorder %s550, 35
        %s554 = scalar_select %p553, %s550, 35
        %s555 = smul.addr %s552, 36
        %s556 = sadd.s32 %s554, %s555
        %s557 = smul.addr %s556, 4
        %s558 = scalar_lea.vmem %s1, %s557
        %p559 = pneg %p85
        %p560 = pneg %p82
        %s561 = smul.u32 16, %s23
        %s562 = ssub.s32 36, %s561
        %p563 = scmp.lt.s32.totalorder %s562, 16
        %s564 = scalar_select %p563, %s562, 16
        %s565 = smul.u32 64, %s564
        %p566 = scmp.lt.s32.totalorder %s22, 1
        %s567 = scalar_select %p566, %s22, 1
        %p568 = scmp.lt.s32.totalorder %s561, 35
        %s569 = scalar_select %p568, %s561, 35
        %s570 = smul.addr %s567, 36
        %s571 = sadd.s32 %s569, %s570
        %s572 = smul.addr %s571, 4
        %s573 = scalar_lea.vmem %s2, %s572
        %p574 = pneg %p113
        %p575 = pneg %p110
        %s576 = sadd.s32 %s23, 1
        %s577 = smul.u32 %s576, 4
        %s578 = smul.u32 4, %s577
        %p579 = scmp.lt.s32.totalorder %s22, 1
        %s580 = scalar_select %p579, %s22, 1
        %p581 = scmp.lt.s32.totalorder %s578, 35
        %s582 = scalar_select %p581, %s578, 35
        %s583 = smul.addr %s580, 36
        %s584 = sadd.s32 %s582, %s583
        %s585 = smul.addr %s584, 4
        %s586 = scalar_lea.vmem %s3, %s585
        %p587 = pneg %p145
        %p588 = pneg %p142
        %s589 = sand.u32 %s160, 1
        %s590 = sand.u32 %s160, 1
        %s591 = smul.addr %s590, 128
        %s592 = scalar_lea.vmem [#allocation2], %s591
        %p593 = pneg %p173
        %p594 = pneg %p170
        %p595 = pneg %p194
        %p596 = pneg %p191
        %p597 = pneg %p215
        %p598 = pneg %p212
        %p599 = pneg %p243
        %p600 = pneg %p240
        %s601 = smul.u32 16, %s23
        %p602 = scmp.lt.s32.totalorder %s22, 1
        %s603 = scalar_select %p602, %s22, 1
        %p604 = scmp.lt.s32.totalorder %s601, 31
        %s605 = scalar_select %p604, %s601, 31
        %s606 = smul.addr %s603, 32
        %s607 = sadd.s32 %s605, %s606
        %s608 = smul.addr %s607, 4
        %s609 = scalar_lea.vmem %s7, %s608
        %s610 = smul.u32 16, %s23
        %s611 = ssub.s32 36, %s610
        %p612 = scmp.lt.s32.totalorder %s611, 16
        %s613 = scalar_select %p612, %s611, 16
        %s614 = smul.u32 64, %s613
        %p615 = scmp.lt.s32.totalorder %s22, 1
        %s616 = scalar_select %p615, %s22, 1
        %p617 = scmp.lt.s32.totalorder %s610, 35
        %s618 = scalar_select %p617, %s610, 35
        %s619 = smul.addr %s616, 36
        %s620 = sadd.s32 %s618, %s619
        %s621 = smul.addr %s620, 4
        %s622 = scalar_lea.vmem %s0, %s621
        %s623 = smul.u32 16, %s23
        %s624 = ssub.s32 36, %s623
        %p625 = scmp.lt.s32.totalorder %s624, 16
        %s626 = scalar_select %p625, %s624, 16
        %s627 = smul.u32 64, %s626
        %s628 = sadd.s32 %s23, 1
        %s629 = smul.u32 %s628, 4
        %s630 = smul.u32 4, %s629
        %p631 = scmp.lt.s32.totalorder %s22, 1
        %s632 = scalar_select %p631, %s22, 1
        %p633 = scmp.lt.s32.totalorder %s630, 35
        %s634 = scalar_select %p633, %s630, 35
        %s635 = smul.addr %s632, 36
        %s636 = sadd.s32 %s634, %s635
        %s637 = smul.addr %s636, 4
        %s638 = scalar_lea.vmem %s1, %s637
        %s639 = sadd.s32 %s23, 1
        %s640 = smul.u32 %s639, 4
        %s641 = smul.u32 4, %s640
        %s642 = smul.u32 16, %s23
        %s643 = ssub.s32 36, %s642
        %p644 = scmp.lt.s32.totalorder %s643, 16
        %s645 = scalar_select %p644, %s643, 16
        %s646 = smul.u32 64, %s645
        %p647 = scmp.lt.s32.totalorder %s22, 1
        %s648 = scalar_select %p647, %s22, 1
        %p649 = scmp.lt.s32.totalorder %s642, 35
        %s650 = scalar_select %p649, %s642, 35
        %s651 = smul.addr %s648, 36
        %s652 = sadd.s32 %s650, %s651
        %s653 = smul.addr %s652, 4
        %s654 = scalar_lea.vmem %s2, %s653
        %s655 = smul.u32 16, %s23
        %s656 = ssub.s32 36, %s655
        %p657 = scmp.lt.s32.totalorder %s656, 16
        %s658 = scalar_select %p657, %s656, 16
        %s659 = smul.u32 64, %s658
        %s660 = sadd.s32 %s23, 1
        %s661 = smul.u32 %s660, 4
        %s662 = smul.u32 4, %s661
        %p663 = scmp.lt.s32.totalorder %s22, 1
        %s664 = scalar_select %p663, %s22, 1
        %p665 = scmp.lt.s32.totalorder %s662, 35
        %s666 = scalar_select %p665, %s662, 35
        %s667 = smul.addr %s664, 36
        %s668 = sadd.s32 %s666, %s667
        %s669 = smul.addr %s668, 4
        %s670 = scalar_lea.vmem %s3, %s669
        %s671 = sadd.s32 %s23, 1
        %s672 = smul.u32 %s671, 4
        %s673 = smul.u32 4, %s672
        %s674 = smul.u32 16, %s23
        %s675 = smul.u32 16, %s23
        %p676 = scmp.lt.s32.totalorder %s22, 1
        %s677 = scalar_select %p676, %s22, 1
        %p678 = scmp.lt.s32.totalorder %s675, 31
        %s679 = scalar_select %p678, %s675, 31
        %s680 = smul.addr %s677, 32
        %s681 = sadd.s32 %s679, %s680
        %s682 = smul.addr %s681, 4
        %s683 = scalar_lea.vmem %s7, %s682
        %s684 = smul.u32 16, %s23
        %v686 = vld [vmem:[%s622] sm:$0xf]
        %v687 = vld [vmem:[%s622 + $0x4] sm:$0xf]
        %v688 = vld [vmem:[%s622 + $0x8] sm:$0xf]
        %v689 = vld [vmem:[%s622 + $0xc] sm:$0xf]
        %v690 = vld [vmem:[%s622 + $0x10] sm:$0xf]
        %v691 = vld [vmem:[%s622 + $0x14] sm:$0xf]
        %v692 = vld [vmem:[%s622 + $0x18] sm:$0xf]
        %v693 = vld [vmem:[%s622 + $0x1c] sm:$0xf]
        %v694 = vld [vmem:[%s622 + $0x20] sm:$0xf]
        %v695 = vld [vmem:[%s622 + $0x24] sm:$0xf]
        %v696 = vld [vmem:[%s622 + $0x28] sm:$0xf]
        %v697 = vld [vmem:[%s622 + $0x2c] sm:$0xf]
        %v698 = vld [vmem:[%s622 + $0x30] sm:$0xf]
        %v699 = vld [vmem:[%s622 + $0x34] sm:$0xf]
        %v700 = vld [vmem:[%s622 + $0x38] sm:$0xf]
        %v701 = vld [vmem:[%s622 + $0x3c] sm:$0xf]
        %v702 = vld [vmem:[%s638] sm:$0xf]
        %v703 = vld [vmem:[%s638 + $0x4] sm:$0xf]
        %v704 = vld [vmem:[%s638 + $0x8] sm:$0xf]
        %v705 = vld [vmem:[%s638 + $0xc] sm:$0xf]
        %v722 = vunpack.c.l.b16 %v686
        %v723 = vunpack.c.l.b16 %v687
        %v724 = vunpack.c.l.b16 %v688
        %v725 = vunpack.c.l.b16 %v689
        %v726 = vunpack.c.l.b16 %v690
        %v727 = vunpack.c.l.b16 %v691
        %v728 = vunpack.c.l.b16 %v692
        %v729 = vunpack.c.l.b16 %v693
        %v730 = vunpack.c.l.b16 %v694
        %v731 = vunpack.c.l.b16 %v695
        %v732 = vunpack.c.l.b16 %v696
        %v733 = vunpack.c.l.b16 %v697
        %v734 = vunpack.c.l.b16 %v698
        %v735 = vunpack.c.l.b16 %v699
        %v736 = vunpack.c.l.b16 %v700
        %v737 = vunpack.c.l.b16 %v701
        %v738 = vpack.c.b16 %v723, %v722
        %v739 = vpack.c.b16 %v725, %v724
        %v740 = vpack.c.b16 %v727, %v726
        %v741 = vpack.c.b16 %v729, %v728
        %v742 = vpack.c.b16 %v731, %v730
        %v743 = vpack.c.b16 %v733, %v732
        %v744 = vpack.c.b16 %v735, %v734
        %v745 = vpack.c.b16 %v737, %v736
        %v758 = vunpack.c.l.b16 %v702
        %v759 = vunpack.c.l.b16 %v703
        %v760 = vunpack.c.l.b16 %v704
        %v761 = vunpack.c.l.b16 %v705
        %v762 = vpack.c.b16 %v759, %v758
        %v763 = vpack.c.b16 %v761, %v760
        %v766 = vld [vmem:[%s654] sm:$0xf]
        %v767 = vld [vmem:[%s654 + $0x4] sm:$0xf]
        %v768 = vld [vmem:[%s654 + $0x8] sm:$0xf]
        %v769 = vld [vmem:[%s654 + $0xc] sm:$0xf]
        %v770 = vld [vmem:[%s654 + $0x10] sm:$0xf]
        %v771 = vld [vmem:[%s654 + $0x14] sm:$0xf]
        %v772 = vld [vmem:[%s654 + $0x18] sm:$0xf]
        %v773 = vld [vmem:[%s654 + $0x1c] sm:$0xf]
        %v774 = vld [vmem:[%s654 + $0x20] sm:$0xf]
        %v775 = vld [vmem:[%s654 + $0x24] sm:$0xf]
        %v776 = vld [vmem:[%s654 + $0x28] sm:$0xf]
        %v777 = vld [vmem:[%s654 + $0x2c] sm:$0xf]
        %v778 = vld [vmem:[%s654 + $0x30] sm:$0xf]
        %v779 = vld [vmem:[%s654 + $0x34] sm:$0xf]
        %v780 = vld [vmem:[%s654 + $0x38] sm:$0xf]
        %v781 = vld [vmem:[%s654 + $0x3c] sm:$0xf]
        %v782 = vld [vmem:[%s670] sm:$0xf]
        %v783 = vld [vmem:[%s670 + $0x4] sm:$0xf]
        %v784 = vld [vmem:[%s670 + $0x8] sm:$0xf]
        %v785 = vld [vmem:[%s670 + $0xc] sm:$0xf]
        %v802 = vunpack.c.l.b16 %v766
        %v803 = vunpack.c.l.b16 %v767
        %v804 = vunpack.c.l.b16 %v768
        %v805 = vunpack.c.l.b16 %v769
        %v806 = vunpack.c.l.b16 %v770
        %v807 = vunpack.c.l.b16 %v771
        %v808 = vunpack.c.l.b16 %v772
        %v809 = vunpack.c.l.b16 %v773
        %v810 = vunpack.c.l.b16 %v774
        %v811 = vunpack.c.l.b16 %v775
        %v812 = vunpack.c.l.b16 %v776
        %v813 = vunpack.c.l.b16 %v777
        %v814 = vunpack.c.l.b16 %v778
        %v815 = vunpack.c.l.b16 %v779
        %v816 = vunpack.c.l.b16 %v780
        %v817 = vunpack.c.l.b16 %v781
        %v818 = vpack.c.b16 %v803, %v802
        %v819 = vpack.c.b16 %v805, %v804
        %v820 = vpack.c.b16 %v807, %v806
        %v821 = vpack.c.b16 %v809, %v808
        %v822 = vpack.c.b16 %v811, %v810
        %v823 = vpack.c.b16 %v813, %v812
        %v824 = vpack.c.b16 %v815, %v814
        %v825 = vpack.c.b16 %v817, %v816
        %v838 = vunpack.c.l.b16 %v782
        %v839 = vunpack.c.l.b16 %v783
        %v840 = vunpack.c.l.b16 %v784
        %v841 = vunpack.c.l.b16 %v785
        %v842 = vpack.c.b16 %v839, %v838
        %v843 = vpack.c.b16 %v841, %v840
        %v846 = vmul.bf16 %v738, %v818
        %v847 = vmul.bf16 %v739, %v819
        %v848 = vmul.bf16 %v740, %v820
        %v849 = vmul.bf16 %v741, %v821
        %v850 = vmul.bf16 %v742, %v822
        %v851 = vmul.bf16 %v743, %v823
        %v852 = vmul.bf16 %v744, %v824
        %v853 = vmul.bf16 %v745, %v825
        %v854 = vmul.bf16 %v762, %v842
        %v855 = vmul.bf16 %v763, %v843
        %v856 = vld [vmem:[%s5] sm:$0xf]
        %v857 = vld [vmem:[%s5 + $0x4] sm:$0xf]
        %v858 = vld [vmem:[%s5 + $0x8] sm:$0xf]
        %v859 = vld [vmem:[%s5 + $0xc] sm:$0xf]
        %v860 = vld [vmem:[%s5 + $0x10] sm:$0xf]
        %v861 = vld [vmem:[%s5 + $0x14] sm:$0xf]
        %v862 = vld [vmem:[%s5 + $0x18] sm:$0xf]
        %v863 = vld [vmem:[%s5 + $0x1c] sm:$0xf]
        %v864 = vld [vmem:[%s5 + $0x20] sm:$0xf]
        %v865 = vld [vmem:[%s5 + $0x24] sm:$0xf]
        %v866 = vld [vmem:[%s5 + $0x28] sm:$0xf]
        %v867 = vld [vmem:[%s5 + $0x2c] sm:$0xf]
        %s868 = scalar_lea.vmem %s5, 48
        %v869 = vld [vmem:[%s868] sm:$0xf]
        %v870 = vld [vmem:[%s868 + $0x4] sm:$0xf]
        %v871 = vld [vmem:[%s868 + $0x8] sm:$0xf]
        %v872 = vld [vmem:[%s868 + $0xc] sm:$0xf]
        %v873 = vld [vmem:[%s868 + $0x10] sm:$0xf]
        %v874 = vld [vmem:[%s868 + $0x14] sm:$0xf]
        %v875 = vld [vmem:[%s868 + $0x18] sm:$0xf]
        %v876 = vld [vmem:[%s868 + $0x1c] sm:$0xf]
        %v877 = vld [vmem:[%s868 + $0x20] sm:$0xf]
        %v878 = vld [vmem:[%s868 + $0x24] sm:$0xf]
        %v879 = vld [vmem:[%s868 + $0x28] sm:$0xf]
        %v880 = vld [vmem:[%s868 + $0x2c] sm:$0xf]
        %v893 = vunpack.c.l.b16 %v869
        %v894 = vunpack.c.l.b16 %v870
        %v895 = vunpack.c.l.b16 %v871
        %v896 = vunpack.c.l.b16 %v872
        %v897 = vunpack.c.l.b16 %v873
        %v898 = vunpack.c.l.b16 %v874
        %v899 = vunpack.c.l.b16 %v875
        %v900 = vunpack.c.l.b16 %v876
        %v901 = vunpack.c.l.b16 %v877
        %v902 = vunpack.c.l.b16 %v878
        %v903 = vunpack.c.l.b16 %v879
        %v904 = vunpack.c.l.b16 %v880
        %v905 = vpack.c.b16 %v894, %v893
        %v906 = vpack.c.b16 %v896, %v895
        %v907 = vpack.c.b16 %v898, %v897
        %v908 = vpack.c.b16 %v900, %v899
        %v909 = vpack.c.b16 %v902, %v901
        %v910 = vpack.c.b16 %v904, %v903
        %vm917 = vcmask 785408
        %v919 = vsel %vm917, %v847, 0
        %v922 = vsel %vm917, %v848, 0
        %v925 = vsel %vm917, %v849, 0
        %v928 = vsel %vm917, %v850, 0
        %v931 = vsel %vm917, %v851, 0
        %v934 = vsel %vm917, %v852, 0
        %v937 = vsel %vm917, %v853, 0
        %v940 = vsel %vm917, %v854, 0
        %942 = vmatprep.subr.bf16.mxu0 0
        %943 = vmatpush1.bf16.msra.mxu0 %v905
        %944 = vmatprep.subr.bf16.mxu0 0
        %945 = vmatpush1.bf16.msra.mxu0 %v906
        %946 = vmatprep.subr.bf16.mxu0 0
        %947 = vmatpush1.bf16.msra.mxu0 %v907
        %948 = vmatprep.subr.bf16.mxu0 0
        %949 = vmatpush1.bf16.msra.mxu0 %v908
        %950 = vmatprep.subr.bf16.mxu0 0
        %951 = vmatpush1.bf16.msra.mxu0 %v909
        %952 = vmatprep.subr.bf16.mxu0 0
        %953 = vmatpush1.bf16.msra.mxu0 %v910
        %954 = vmatprep.subr.bf16.mxu0 0
        %955 = vmatpush1.bf16.msra.mxu0 0
        %956 = vmatprep.subr.bf16.mxu0 0
        %957 = vmatpush1.bf16.msra.mxu0 0
        %958 = vmatprep.subr.bf16.mxu0 0
        %959 = vmatpush1.bf16.msra.mxu0 0
        %960 = vmatprep.subr.bf16.mxu0 0
        %961 = vmatpush1.bf16.msra.mxu0 0
        %962 = vmatprep.subr.bf16.mxu0 0
        %963 = vmatpush1.bf16.msra.mxu0 0
        %964 = vmatprep.subr.bf16.mxu0 0
        %965 = vmatpush1.bf16.msra.mxu0 0
        %966 = vmatprep.subr.bf16.mxu0 0
        %967 = vmatpush1.bf16.msra.mxu0 0
        %968 = vmatprep.subr.bf16.mxu0 0
        %969 = vmatpush1.bf16.msra.mxu0 0
        %970 = vmatprep.subr.bf16.mxu0 0
        %971 = vmatpush1.bf16.msra.mxu0 0
        %972 = vmatprep.subr.bf16.mxu0 0
        %973 = vmatpush1.bf16.msra.mxu0 0
        %974 = vmatprep.mubr.bf16.mxu0 0
        %975 = vmatmul.mubr.bf16.gmra.mrb[0].mxu0 %v919
        %v976 = vpop.f32.mrb[0].mxu0
        %v977 = vadd.f32 0.0, %v976
        %v978 = vpop.f32.mrb[0].mxu0
        %v979 = vpop.f32.mrb[0].mxu0
        %v980 = vadd.f32 0.0, %v979
        %v981 = vpop.f32.mrb[0].mxu0
        %982 = vmatprep.mubr.bf16.mxu0 0
        %983 = vmatmul.mubr.bf16.gmra.mrb[0].mxu0 %v922
        %v984 = vpop.f32.mrb[0].mxu0
        %v985 = vadd.f32 0.0, %v984
        %v986 = vpop.f32.mrb[0].mxu0
        %v987 = vpop.f32.mrb[0].mxu0
        %v988 = vadd.f32 0.0, %v987
        %v989 = vpop.f32.mrb[0].mxu0
        %990 = vmatprep.mubr.bf16.mxu0 0
        %991 = vmatmul.mubr.bf16.gmra.mrb[0].mxu0 %v925
        %v992 = vpop.f32.mrb[0].mxu0
        %v993 = vadd.f32 0.0, %v992
        %v994 = vpop.f32.mrb[0].mxu0
        %v995 = vpop.f32.mrb[0].mxu0
        %v996 = vadd.f32 0.0, %v995
        %v997 = vpop.f32.mrb[0].mxu0
        %998 = vmatprep.mubr.bf16.mxu0 0
        %999 = vmatmul.mubr.bf16.gmra.mrb[0].mxu0 %v928
        %v1000 = vpop.f32.mrb[0].mxu0
        %v1001 = vadd.f32 0.0, %v1000
        %v1002 = vpop.f32.mrb[0].mxu0
        %v1003 = vpop.f32.mrb[0].mxu0
        %v1004 = vadd.f32 0.0, %v1003
        %v1005 = vpop.f32.mrb[0].mxu0
        %1006 = vmatprep.mubr.bf16.mxu0 0
        %1007 = vmatmul.mubr.bf16.gmra.mrb[0].mxu0 %v931
        %v1008 = vpop.f32.mrb[0].mxu0
        %v1009 = vadd.f32 0.0, %v1008
        %v1010 = vpop.f32.mrb[0].mxu0
        %v1011 = vpop.f32.mrb[0].mxu0
        %v1012 = vadd.f32 0.0, %v1011
        %v1013 = vpop.f32.mrb[0].mxu0
        %1014 = vmatprep.mubr.bf16.mxu0 0
        %1015 = vmatmul.mubr.bf16.gmra.mrb[0].mxu0 %v934
        %v1016 = vpop.f32.mrb[0].mxu0
        %v1017 = vadd.f32 0.0, %v1016
        %v1018 = vpop.f32.mrb[0].mxu0
        %v1019 = vpop.f32.mrb[0].mxu0
        %v1020 = vadd.f32 0.0, %v1019
        %v1021 = vpop.f32.mrb[0].mxu0
        %1022 = vmatprep.mubr.bf16.mxu0 0
        %1023 = vmatmul.mubr.bf16.gmra.mrb[0].mxu0 %v937
        %v1024 = vpop.f32.mrb[0].mxu0
        %v1025 = vadd.f32 0.0, %v1024
        %v1026 = vpop.f32.mrb[0].mxu0
        %v1027 = vpop.f32.mrb[0].mxu0
        %v1028 = vadd.f32 0.0, %v1027
        %v1029 = vpop.f32.mrb[0].mxu0
        %1030 = vmatprep.mubr.bf16.mxu0 0
        %1031 = vmatmul.mubr.bf16.gmra.mrb[0].mxu0 %v940
        %v1032 = vpop.f32.mrb[0].mxu0
        %v1033 = vadd.f32 0.0, %v1032
        %v1034 = vpop.f32.mrb[0].mxu0
        %v1035 = vpop.f32.mrb[0].mxu0
        %v1036 = vadd.f32 0.0, %v1035
        %v1037 = vpop.f32.mrb[0].mxu0
        %1038 = vdwg.mxu0
        %v1051 = vunpack.c.l.b16 %v856
        %v1052 = vunpack.c.l.b16 %v857
        %v1053 = vunpack.c.l.b16 %v858
        %v1054 = vunpack.c.l.b16 %v859
        %v1055 = vunpack.c.l.b16 %v860
        %v1056 = vunpack.c.l.b16 %v861
        %v1057 = vunpack.c.l.b16 %v862
        %v1058 = vunpack.c.l.b16 %v863
        %v1059 = vunpack.c.l.b16 %v864
        %v1060 = vunpack.c.l.b16 %v865
        %v1061 = vunpack.c.l.b16 %v866
        %v1062 = vunpack.c.l.b16 %v867
        %v1063 = vpack.c.b16 %v1052, %v1051
        %v1064 = vpack.c.b16 %v1054, %v1053
        %v1065 = vpack.c.b16 %v1056, %v1055
        %v1066 = vpack.c.b16 %v1058, %v1057
        %v1067 = vpack.c.b16 %v1060, %v1059
        %v1068 = vpack.c.b16 %v1062, %v1061
        %v1076 = vsel %vm917, %v846, 0
        %1078 = vmatprep.subr.bf16.mxu0 0
        %1079 = vmatpush1.bf16.msra.mxu0 %v1063
        %1080 = vmatprep.subr.bf16.mxu0 0
        %1081 = vmatpush1.bf16.msra.mxu0 %v1064
        %1082 = vmatprep.subr.bf16.mxu0 0
        %1083 = vmatpush1.bf16.msra.mxu0 %v1065
        %1084 = vmatprep.subr.bf16.mxu0 0
        %1085 = vmatpush1.bf16.msra.mxu0 %v1066
        %1086 = vmatprep.subr.bf16.mxu0 0
        %1087 = vmatpush1.bf16.msra.mxu0 %v1067
        %1088 = vmatprep.subr.bf16.mxu0 0
        %1089 = vmatpush1.bf16.msra.mxu0 %v1068
        %1090 = vmatprep.subr.bf16.mxu0 0
        %1091 = vmatpush1.bf16.msra.mxu0 0
        %1092 = vmatprep.subr.bf16.mxu0 0
        %1093 = vmatpush1.bf16.msra.mxu0 0
        %1094 = vmatprep.subr.bf16.mxu0 0
        %1095 = vmatpush1.bf16.msra.mxu0 0
        %1096 = vmatprep.subr.bf16.mxu0 0
        %1097 = vmatpush1.bf16.msra.mxu0 0
        %1098 = vmatprep.subr.bf16.mxu0 0
        %1099 = vmatpush1.bf16.msra.mxu0 0
        %1100 = vmatprep.subr.bf16.mxu0 0
        %1101 = vmatpush1.bf16.msra.mxu0 0
        %1102 = vmatprep.subr.bf16.mxu0 0
        %1103 = vmatpush1.bf16.msra.mxu0 0
        %1104 = vmatprep.subr.bf16.mxu0 0
        %1105 = vmatpush1.bf16.msra.mxu0 0
        %1106 = vmatprep.subr.bf16.mxu0 0
        %1107 = vmatpush1.bf16.msra.mxu0 0
        %1108 = vmatprep.subr.bf16.mxu0 0
        %1109 = vmatpush1.bf16.msra.mxu0 0
        %1110 = vmatprep.mubr.bf16.mxu0 0
        %1111 = vmatmul.mubr.bf16.gmra.mrb[0].mxu0 %v1076
        %v1112 = vpop.f32.mrb[0].mxu0
        %v1113 = vadd.f32 %v977, %v1112
        %v1114 = vpop.f32.mrb[0].mxu0
        %v1115 = vpop.f32.mrb[0].mxu0
        %v1116 = vadd.f32 %v980, %v1115
        %v1117 = vpop.f32.mrb[0].mxu0
        %1118 = vmatprep.mubr.bf16.mxu0 0
        %1119 = vmatmul.mubr.bf16.gmra.mrb[0].mxu0 %v919
        %v1120 = vpop.f32.mrb[0].mxu0
        %v1121 = vadd.f32 %v985, %v1120
        %v1122 = vpop.f32.mrb[0].mxu0
        %v1123 = vpop.f32.mrb[0].mxu0
        %v1124 = vadd.f32 %v988, %v1123
        %v1125 = vpop.f32.mrb[0].mxu0
        %1126 = vmatprep.mubr.bf16.mxu0 0
        %1127 = vmatmul.mubr.bf16.gmra.mrb[0].mxu0 %v922
        %v1128 = vpop.f32.mrb[0].mxu0
        %v1129 = vadd.f32 %v993, %v1128
        %v1130 = vpop.f32.mrb[0].mxu0
        %v1131 = vpop.f32.mrb[0].mxu0
        %v1132 = vadd.f32 %v996, %v1131
        %v1133 = vpop.f32.mrb[0].mxu0
        %1134 = vmatprep.mubr.bf16.mxu0 0
        %1135 = vmatmul.mubr.bf16.gmra.mrb[0].mxu0 %v925
        %v1136 = vpop.f32.mrb[0].mxu0
        %v1137 = vadd.f32 %v1001, %v1136
        %v1138 = vpop.f32.mrb[0].mxu0
        %v1139 = vpop.f32.mrb[0].mxu0
        %v1140 = vadd.f32 %v1004, %v1139
        %v1141 = vpop.f32.mrb[0].mxu0
        %1142 = vmatprep.mubr.bf16.mxu0 0
        %1143 = vmatmul.mubr.bf16.gmra.mrb[0].mxu0 %v928
        %v1144 = vpop.f32.mrb[0].mxu0
        %v1145 = vadd.f32 %v1009, %v1144
        %v1146 = vpop.f32.mrb[0].mxu0
        %v1147 = vpop.f32.mrb[0].mxu0
        %v1148 = vadd.f32 %v1012, %v1147
        %v1149 = vpop.f32.mrb[0].mxu0
        %1150 = vmatprep.mubr.bf16.mxu0 0
        %1151 = vmatmul.mubr.bf16.gmra.mrb[0].mxu0 %v931
        %v1152 = vpop.f32.mrb[0].mxu0
        %v1153 = vadd.f32 %v1017, %v1152
        %v1154 = vpop.f32.mrb[0].mxu0
        %v1155 = vpop.f32.mrb[0].mxu0
        %v1156 = vadd.f32 %v1020, %v1155
        %v1157 = vpop.f32.mrb[0].mxu0
        %1158 = vmatprep.mubr.bf16.mxu0 0
        %1159 = vmatmul.mubr.bf16.gmra.mrb[0].mxu0 %v934
        %v1160 = vpop.f32.mrb[0].mxu0
        %v1161 = vadd.f32 %v1025, %v1160
        %v1162 = vpop.f32.mrb[0].mxu0
        %v1163 = vpop.f32.mrb[0].mxu0
        %v1164 = vadd.f32 %v1028, %v1163
        %v1165 = vpop.f32.mrb[0].mxu0
        %1166 = vmatprep.mubr.bf16.mxu0 0
        %1167 = vmatmul.mubr.bf16.gmra.mrb[0].mxu0 %v937
        %v1168 = vpop.f32.mrb[0].mxu0
        %v1169 = vadd.f32 %v1033, %v1168
        %v1170 = vpop.f32.mrb[0].mxu0
        %v1171 = vpop.f32.mrb[0].mxu0
        %v1172 = vadd.f32 %v1036, %v1171
        %v1173 = vpop.f32.mrb[0].mxu0
        %1174 = vdwg.mxu0
        %s1175 = scalar_lea.vmem %s5, 96
        %v1176 = vld [vmem:[%s1175] sm:$0xf]
        %v1177 = vld [vmem:[%s1175 + $0x4] sm:$0xf]
        %v1178 = vld [vmem:[%s1175 + $0x8] sm:$0xf]
        %v1179 = vld [vmem:[%s1175 + $0xc] sm:$0xf]
        %v1180 = vld [vmem:[%s1175 + $0x10] sm:$0xf]
        %v1181 = vld [vmem:[%s1175 + $0x14] sm:$0xf]
        %v1182 = vld [vmem:[%s1175 + $0x18] sm:$0xf]
        %v1183 = vld [vmem:[%s1175 + $0x1c] sm:$0xf]
        %v1184 = vld [vmem:[%s1175 + $0x20] sm:$0xf]
        %v1185 = vld [vmem:[%s1175 + $0x24] sm:$0xf]
        %v1186 = vld [vmem:[%s1175 + $0x28] sm:$0xf]
        %v1187 = vld [vmem:[%s1175 + $0x2c] sm:$0xf]
        %v1200 = vunpack.c.l.b16 %v1176
        %v1201 = vunpack.c.l.b16 %v1177
        %v1202 = vunpack.c.l.b16 %v1178
        %v1203 = vunpack.c.l.b16 %v1179
        %v1204 = vunpack.c.l.b16 %v1180
        %v1205 = vunpack.c.l.b16 %v1181
        %v1206 = vunpack.c.l.b16 %v1182
        %v1207 = vunpack.c.l.b16 %v1183
        %v1208 = vunpack.c.l.b16 %v1184
        %v1209 = vunpack.c.l.b16 %v1185
        %v1210 = vunpack.c.l.b16 %v1186
        %v1211 = vunpack.c.l.b16 %v1187
        %v1212 = vpack.c.b16 %v1201, %v1200
        %v1213 = vpack.c.b16 %v1203, %v1202
        %v1214 = vpack.c.b16 %v1205, %v1204
        %v1215 = vpack.c.b16 %v1207, %v1206
        %v1216 = vpack.c.b16 %v1209, %v1208
        %v1217 = vpack.c.b16 %v1211, %v1210
        %v1225 = vsel %vm917, %v855, 0
        %1227 = vmatprep.subr.bf16.mxu0 0
        %1228 = vmatpush1.bf16.msra.mxu0 %v1212
        %1229 = vmatprep.subr.bf16.mxu0 0
        %1230 = vmatpush1.bf16.msra.mxu0 %v1213
        %1231 = vmatprep.subr.bf16.mxu0 0
        %1232 = vmatpush1.bf16.msra.mxu0 %v1214
        %1233 = vmatprep.subr.bf16.mxu0 0
        %1234 = vmatpush1.bf16.msra.mxu0 %v1215
        %1235 = vmatprep.subr.bf16.mxu0 0
        %1236 = vmatpush1.bf16.msra.mxu0 %v1216
        %1237 = vmatprep.subr.bf16.mxu0 0
        %1238 = vmatpush1.bf16.msra.mxu0 %v1217
        %1239 = vmatprep.subr.bf16.mxu0 0
        %1240 = vmatpush1.bf16.msra.mxu0 0
        %1241 = vmatprep.subr.bf16.mxu0 0
        %1242 = vmatpush1.bf16.msra.mxu0 0
        %1243 = vmatprep.subr.bf16.mxu0 0
        %1244 = vmatpush1.bf16.msra.mxu0 0
        %1245 = vmatprep.subr.bf16.mxu0 0
        %1246 = vmatpush1.bf16.msra.mxu0 0
        %1247 = vmatprep.subr.bf16.mxu0 0
        %1248 = vmatpush1.bf16.msra.mxu0 0
        %1249 = vmatprep.subr.bf16.mxu0 0
        %1250 = vmatpush1.bf16.msra.mxu0 0
        %1251 = vmatprep.subr.bf16.mxu0 0
        %1252 = vmatpush1.bf16.msra.mxu0 0
        %1253 = vmatprep.subr.bf16.mxu0 0
        %1254 = vmatpush1.bf16.msra.mxu0 0
        %1255 = vmatprep.subr.bf16.mxu0 0
        %1256 = vmatpush1.bf16.msra.mxu0 0
        %1257 = vmatprep.subr.bf16.mxu0 0
        %1258 = vmatpush1.bf16.msra.mxu0 0
        %1259 = vmatprep.mubr.bf16.mxu0 0
        %1260 = vmatmul.mubr.bf16.gmra.mrb[0].mxu0 %v922
        %v1261 = vpop.f32.mrb[0].mxu0
        %v1262 = vadd.f32 0.0, %v1261
        %v1263 = vpop.f32.mrb[0].mxu0
        %v1264 = vpop.f32.mrb[0].mxu0
        %v1265 = vadd.f32 0.0, %v1264
        %v1266 = vpop.f32.mrb[0].mxu0
        %1267 = vmatprep.mubr.bf16.mxu0 0
        %1268 = vmatmul.mubr.bf16.gmra.mrb[0].mxu0 %v925
        %v1269 = vpop.f32.mrb[0].mxu0
        %v1270 = vadd.f32 0.0, %v1269
        %v1271 = vpop.f32.mrb[0].mxu0
        %v1272 = vpop.f32.mrb[0].mxu0
        %v1273 = vadd.f32 0.0, %v1272
        %v1274 = vpop.f32.mrb[0].mxu0
        %1275 = vmatprep.mubr.bf16.mxu0 0
        %1276 = vmatmul.mubr.bf16.gmra.mrb[0].mxu0 %v928
        %v1277 = vpop.f32.mrb[0].mxu0
        %v1278 = vadd.f32 0.0, %v1277
        %v1279 = vpop.f32.mrb[0].mxu0
        %v1280 = vpop.f32.mrb[0].mxu0
        %v1281 = vadd.f32 0.0, %v1280
        %v1282 = vpop.f32.mrb[0].mxu0
        %1283 = vmatprep.mubr.bf16.mxu0 0
        %1284 = vmatmul.mubr.bf16.gmra.mrb[0].mxu0 %v931
        %v1285 = vpop.f32.mrb[0].mxu0
        %v1286 = vadd.f32 0.0, %v1285
        %v1287 = vpop.f32.mrb[0].mxu0
        %v1288 = vpop.f32.mrb[0].mxu0
        %v1289 = vadd.f32 0.0, %v1288
        %v1290 = vpop.f32.mrb[0].mxu0
        %1291 = vmatprep.mubr.bf16.mxu0 0
        %1292 = vmatmul.mubr.bf16.gmra.mrb[0].mxu0 %v934
        %v1293 = vpop.f32.mrb[0].mxu0
        %v1294 = vadd.f32 0.0, %v1293
        %v1295 = vpop.f32.mrb[0].mxu0
        %v1296 = vpop.f32.mrb[0].mxu0
        %v1297 = vadd.f32 0.0, %v1296
        %v1298 = vpop.f32.mrb[0].mxu0
        %1299 = vmatprep.mubr.bf16.mxu0 0
        %1300 = vmatmul.mubr.bf16.gmra.mrb[0].mxu0 %v937
        %v1301 = vpop.f32.mrb[0].mxu0
        %v1302 = vadd.f32 0.0, %v1301
        %v1303 = vpop.f32.mrb[0].mxu0
        %v1304 = vpop.f32.mrb[0].mxu0
        %v1305 = vadd.f32 0.0, %v1304
        %v1306 = vpop.f32.mrb[0].mxu0
        %1307 = vmatprep.mubr.bf16.mxu0 0
        %1308 = vmatmul.mubr.bf16.gmra.mrb[0].mxu0 %v940
        %v1309 = vpop.f32.mrb[0].mxu0
        %v1310 = vadd.f32 0.0, %v1309
        %v1311 = vpop.f32.mrb[0].mxu0
        %v1312 = vpop.f32.mrb[0].mxu0
        %v1313 = vadd.f32 0.0, %v1312
        %v1314 = vpop.f32.mrb[0].mxu0
        %1315 = vmatprep.mubr.bf16.mxu0 0
        %1316 = vmatmul.mubr.bf16.gmra.mrb[0].mxu0 %v1225
        %v1317 = vpop.f32.mrb[0].mxu0
        %v1318 = vadd.f32 0.0, %v1317
        %v1319 = vpop.f32.mrb[0].mxu0
        %v1320 = vpop.f32.mrb[0].mxu0
        %v1321 = vadd.f32 0.0, %v1320
        %v1322 = vpop.f32.mrb[0].mxu0
        %1323 = vdwg.mxu0
        %v1324 = vadd.f32 %v1113, %v1262
        %v1325 = vadd.f32 %v1116, %v1265
        %v1326 = vadd.f32 %v1121, %v1270
        %v1327 = vadd.f32 %v1124, %v1273
        %v1328 = vadd.f32 %v1129, %v1278
        %v1329 = vadd.f32 %v1132, %v1281
        %v1330 = vadd.f32 %v1137, %v1286
        %v1331 = vadd.f32 %v1140, %v1289
        %v1332 = vadd.f32 %v1145, %v1294
        %v1333 = vadd.f32 %v1148, %v1297
        %v1334 = vadd.f32 %v1153, %v1302
        %v1335 = vadd.f32 %v1156, %v1305
        %v1336 = vadd.f32 %v1161, %v1310
        %v1337 = vadd.f32 %v1164, %v1313
        %v1338 = vadd.f32 %v1169, %v1318
        %v1339 = vadd.f32 %v1172, %v1321
        %v1340 = vld [vmem:[%s6] sm:$0x1]
        %v1342 = vlaneseq
        %v1343 = vshrl.u32 %v1342, 7
        %v1344 = vsub.s32 0, %v1343
        %v1345 = vrot.slane %v1340, %v1344
        %v1347 = vadd.f32 %v1324, %v1345
        %v1348 = vadd.f32 %v1325, %v1345
        %v1349 = vadd.f32 %v1326, %v1345
        %v1350 = vadd.f32 %v1327, %v1345
        %v1351 = vadd.f32 %v1328, %v1345
        %v1352 = vadd.f32 %v1329, %v1345
        %v1353 = vadd.f32 %v1330, %v1345
        %v1354 = vadd.f32 %v1331, %v1345
        %v1355 = vadd.f32 %v1332, %v1345
        %v1356 = vadd.f32 %v1333, %v1345
        %v1357 = vadd.f32 %v1334, %v1345
        %v1358 = vadd.f32 %v1335, %v1345
        %v1359 = vadd.f32 %v1336, %v1345
        %v1360 = vadd.f32 %v1337, %v1345
        %v1361 = vadd.f32 %v1338, %v1345
        %v1362 = vadd.f32 %v1339, %v1345
        %v1363 = vmax.f32 %v1347, 0.0
        %v1364 = vmax.f32 %v1348, 0.0
        %v1365 = vmax.f32 %v1349, 0.0
        %v1366 = vmax.f32 %v1350, 0.0
        %v1367 = vmax.f32 %v1351, 0.0
        %v1368 = vmax.f32 %v1352, 0.0
        %v1369 = vmax.f32 %v1353, 0.0
        %v1370 = vmax.f32 %v1354, 0.0
        %v1371 = vmax.f32 %v1355, 0.0
        %v1372 = vmax.f32 %v1356, 0.0
        %v1373 = vmax.f32 %v1357, 0.0
        %v1374 = vmax.f32 %v1358, 0.0
        %v1375 = vmax.f32 %v1359, 0.0
        %v1376 = vmax.f32 %v1360, 0.0
        %v1377 = vmax.f32 %v1361, 0.0
        %v1378 = vmax.f32 %v1362, 0.0
        %v1379 = vld [vmem:[%s529] sm:$0xf]
        %v1380 = vld [vmem:[%s529 + $0x4] sm:$0xf]
        %v1381 = vld [vmem:[%s529 + $0x8] sm:$0xf]
        %v1382 = vld [vmem:[%s529 + $0xc] sm:$0xf]
        %v1383 = vld [vmem:[%s529 + $0x10] sm:$0xf]
        %v1384 = vld [vmem:[%s529 + $0x14] sm:$0xf]
        %v1385 = vld [vmem:[%s529 + $0x18] sm:$0xf]
        %v1386 = vld [vmem:[%s529 + $0x1c] sm:$0xf]
        %v1387 = vld [vmem:[%s529 + $0x20] sm:$0xf]
        %v1388 = vld [vmem:[%s529 + $0x24] sm:$0xf]
        %v1389 = vld [vmem:[%s529 + $0x28] sm:$0xf]
        %v1390 = vld [vmem:[%s529 + $0x2c] sm:$0xf]
        %v1391 = vld [vmem:[%s529 + $0x30] sm:$0xf]
        %v1392 = vld [vmem:[%s529 + $0x34] sm:$0xf]
        %v1393 = vld [vmem:[%s529 + $0x38] sm:$0xf]
        %v1394 = vld [vmem:[%s529 + $0x3c] sm:$0xf]
        %s1395 = scalar_lea.vmem %s529, 64 [#allocation2]
        %v1396 = vld [vmem:[%s1395] sm:$0xf]
        %v1397 = vld [vmem:[%s1395 + $0x4] sm:$0xf]
        %v1398 = vld [vmem:[%s1395 + $0x8] sm:$0xf]
        %v1399 = vld [vmem:[%s1395 + $0xc] sm:$0xf]
        %v1400 = vld [vmem:[%s1395 + $0x10] sm:$0xf]
        %v1401 = vld [vmem:[%s1395 + $0x14] sm:$0xf]
        %v1402 = vld [vmem:[%s1395 + $0x18] sm:$0xf]
        %v1403 = vld [vmem:[%s1395 + $0x1c] sm:$0xf]
        %v1404 = vld [vmem:[%s1395 + $0x20] sm:$0xf]
        %v1405 = vld [vmem:[%s1395 + $0x24] sm:$0xf]
        %v1406 = vld [vmem:[%s1395 + $0x28] sm:$0xf]
        %v1407 = vld [vmem:[%s1395 + $0x2c] sm:$0xf]
        %v1408 = vld [vmem:[%s1395 + $0x30] sm:$0xf]
        %v1409 = vld [vmem:[%s1395 + $0x34] sm:$0xf]
        %v1410 = vld [vmem:[%s1395 + $0x38] sm:$0xf]
        %v1411 = vld [vmem:[%s1395 + $0x3c] sm:$0xf]
        %v1428 = vunpack.c.l.b16 %v1379
        %v1429 = vunpack.c.l.b16 %v1380
        %v1430 = vunpack.c.l.b16 %v1381
        %v1431 = vunpack.c.l.b16 %v1382
        %v1432 = vunpack.c.l.b16 %v1383
        %v1433 = vunpack.c.l.b16 %v1384
        %v1434 = vunpack.c.l.b16 %v1385
        %v1435 = vunpack.c.l.b16 %v1386
        %v1436 = vunpack.c.l.b16 %v1387
        %v1437 = vunpack.c.l.b16 %v1388
        %v1438 = vunpack.c.l.b16 %v1389
        %v1439 = vunpack.c.l.b16 %v1390
        %v1440 = vunpack.c.l.b16 %v1391
        %v1441 = vunpack.c.l.b16 %v1392
        %v1442 = vunpack.c.l.b16 %v1393
        %v1443 = vunpack.c.l.b16 %v1394
        %v1444 = vpack.c.b16 %v1429, %v1428
        %v1445 = vpack.c.b16 %v1431, %v1430
        %v1446 = vpack.c.b16 %v1433, %v1432
        %v1447 = vpack.c.b16 %v1435, %v1434
        %v1448 = vpack.c.b16 %v1437, %v1436
        %v1449 = vpack.c.b16 %v1439, %v1438
        %v1450 = vpack.c.b16 %v1441, %v1440
        %v1451 = vpack.c.b16 %v1443, %v1442
        %v1468 = vunpack.c.l.b16 %v1396
        %v1469 = vunpack.c.l.b16 %v1397
        %v1470 = vunpack.c.l.b16 %v1398
        %v1471 = vunpack.c.l.b16 %v1399
        %v1472 = vunpack.c.l.b16 %v1400
        %v1473 = vunpack.c.l.b16 %v1401
        %v1474 = vunpack.c.l.b16 %v1402
        %v1475 = vunpack.c.l.b16 %v1403
        %v1476 = vunpack.c.l.b16 %v1404
        %v1477 = vunpack.c.l.b16 %v1405
        %v1478 = vunpack.c.l.b16 %v1406
        %v1479 = vunpack.c.l.b16 %v1407
        %v1480 = vunpack.c.l.b16 %v1408
        %v1481 = vunpack.c.l.b16 %v1409
        %v1482 = vunpack.c.l.b16 %v1410
        %v1483 = vunpack.c.l.b16 %v1411
        %v1484 = vpack.c.b16 %v1469, %v1468
        %v1485 = vpack.c.b16 %v1471, %v1470
        %v1486 = vpack.c.b16 %v1473, %v1472
        %v1487 = vpack.c.b16 %v1475, %v1474
        %v1488 = vpack.c.b16 %v1477, %v1476
        %v1489 = vpack.c.b16 %v1479, %v1478
        %v1490 = vpack.c.b16 %v1481, %v1480
        %v1491 = vpack.c.b16 %v1483, %v1482
        %1492 = vrot.lane.b32.xlu0 %v1484, 32
        %v1493 = vpop.permute.xlu0 %1492
        %1494 = vrot.lane.b32.xlu0 %v1485, 32
        %v1495 = vpop.permute.xlu0 %1494
        %1496 = vrot.lane.b32.xlu0 %v1486, 32
        %v1497 = vpop.permute.xlu0 %1496
        %1498 = vrot.lane.b32.xlu0 %v1487, 32
        %v1499 = vpop.permute.xlu0 %1498
        %1500 = vrot.lane.b32.xlu0 %v1488, 32
        %v1501 = vpop.permute.xlu0 %1500
        %1502 = vrot.lane.b32.xlu0 %v1489, 32
        %v1503 = vpop.permute.xlu0 %1502
        %1504 = vrot.lane.b32.xlu0 %v1490, 32
        %v1505 = vpop.permute.xlu0 %1504
        %1506 = vrot.lane.b32.xlu0 %v1491, 32
        %v1507 = vpop.permute.xlu0 %1506
        %vm1508 = vcmask 261120
        %v1511 = vsel %vm1508, %v1444, %v1493
        %v1515 = vsel %vm1508, %v1445, %v1495
        %v1519 = vsel %vm1508, %v1446, %v1497
        %v1523 = vsel %vm1508, %v1447, %v1499
        %v1527 = vsel %vm1508, %v1448, %v1501
        %v1531 = vsel %vm1508, %v1449, %v1503
        %v1535 = vsel %vm1508, %v1450, %v1505
        %v1539 = vsel %vm1508, %v1451, %v1507
        %v1541 = vunpack.c.l.bf16 %v1511
        %v1542 = vunpack.c.h.bf16 %v1511
        %v1543 = vunpack.c.l.bf16 %v1515
        %v1544 = vunpack.c.h.bf16 %v1515
        %v1545 = vunpack.c.l.bf16 %v1519
        %v1546 = vunpack.c.h.bf16 %v1519
        %v1547 = vunpack.c.l.bf16 %v1523
        %v1548 = vunpack.c.h.bf16 %v1523
        %v1549 = vunpack.c.l.bf16 %v1527
        %v1550 = vunpack.c.h.bf16 %v1527
        %v1551 = vunpack.c.l.bf16 %v1531
        %v1552 = vunpack.c.h.bf16 %v1531
        %v1553 = vunpack.c.l.bf16 %v1535
        %v1554 = vunpack.c.h.bf16 %v1535
        %v1555 = vunpack.c.l.bf16 %v1539
        %v1556 = vunpack.c.h.bf16 %v1539
        %v1557 = vadd.f32 %v1363, %v1541
        %v1558 = vadd.f32 %v1364, %v1542
        %v1559 = vadd.f32 %v1365, %v1543
        %v1560 = vadd.f32 %v1366, %v1544
        %v1561 = vadd.f32 %v1367, %v1545
        %v1562 = vadd.f32 %v1368, %v1546
        %v1563 = vadd.f32 %v1369, %v1547
        %v1564 = vadd.f32 %v1370, %v1548
        %v1565 = vadd.f32 %v1371, %v1549
        %v1566 = vadd.f32 %v1372, %v1550
        %v1567 = vadd.f32 %v1373, %v1551
        %v1568 = vadd.f32 %v1374, %v1552
        %v1569 = vadd.f32 %v1375, %v1553
        %v1570 = vadd.f32 %v1376, %v1554
        %v1571 = vadd.f32 %v1377, %v1555
        %v1572 = vadd.f32 %v1378, %v1556
        %v1573 = vpack.c.bf16 %v1558, %v1557
        %v1574 = vpack.c.bf16 %v1560, %v1559
        %v1575 = vpack.c.bf16 %v1562, %v1561
        %v1576 = vpack.c.bf16 %v1564, %v1563
        %v1577 = vpack.c.bf16 %v1566, %v1565
        %v1578 = vpack.c.bf16 %v1568, %v1567
        %v1579 = vpack.c.bf16 %v1570, %v1569
        %v1580 = vpack.c.bf16 %v1572, %v1571
        %v1589 = vunpack.c.l.b16 %v1573
        %v1590 = vunpack.c.h.b16 %v1573
        %v1591 = vunpack.c.l.b16 %v1574
        %v1592 = vunpack.c.h.b16 %v1574
        %v1593 = vunpack.c.l.b16 %v1575
        %v1594 = vunpack.c.h.b16 %v1575
        %v1595 = vunpack.c.l.b16 %v1576
        %v1596 = vunpack.c.h.b16 %v1576
        %v1597 = vunpack.c.l.b16 %v1577
        %v1598 = vunpack.c.h.b16 %v1577
        %v1599 = vunpack.c.l.b16 %v1578
        %v1600 = vunpack.c.h.b16 %v1578
        %v1601 = vunpack.c.l.b16 %v1579
        %v1602 = vunpack.c.h.b16 %v1579
        %v1603 = vunpack.c.l.b16 %v1580
        %v1604 = vunpack.c.h.b16 %v1580
        %v1605 = vpack.c.b16 %v1589, %v1589
        %v1606 = vpack.c.b16 %v1590, %v1590
        %v1607 = vpack.c.b16 %v1591, %v1591
        %v1608 = vpack.c.b16 %v1592, %v1592
        %v1609 = vpack.c.b16 %v1593, %v1593
        %v1610 = vpack.c.b16 %v1594, %v1594
        %v1611 = vpack.c.b16 %v1595, %v1595
        %v1612 = vpack.c.b16 %v1596, %v1596
        %v1613 = vpack.c.b16 %v1597, %v1597
        %v1614 = vpack.c.b16 %v1598, %v1598
        %v1615 = vpack.c.b16 %v1599, %v1599
        %v1616 = vpack.c.b16 %v1600, %v1600
        %v1617 = vpack.c.b16 %v1601, %v1601
        %v1618 = vpack.c.b16 %v1602, %v1602
        %v1619 = vpack.c.b16 %v1603, %v1603
        %v1620 = vpack.c.b16 %v1604, %v1604
        %vm1637 = vcmask 519168
        %1638 = vst.msk [vmem:[%s683] sm:$0xf] %vm1637, %v1605
        %1639 = vst.msk [vmem:[%s683 + $0x4] sm:$0xf] %vm1637, %v1606
        %1640 = vst.msk [vmem:[%s683 + $0x8] sm:$0xf] %vm1637, %v1607
        %1641 = vst.msk [vmem:[%s683 + $0xc] sm:$0xf] %vm1637, %v1608
        %1642 = vst.msk [vmem:[%s683 + $0x10] sm:$0xf] %vm1637, %v1609
        %1643 = vst.msk [vmem:[%s683 + $0x14] sm:$0xf] %vm1637, %v1610
        %1644 = vst.msk [vmem:[%s683 + $0x18] sm:$0xf] %vm1637, %v1611
        %1645 = vst.msk [vmem:[%s683 + $0x1c] sm:$0xf] %vm1637, %v1612
        %1646 = vst.msk [vmem:[%s683 + $0x20] sm:$0xf] %vm1637, %v1613
        %1647 = vst.msk [vmem:[%s683 + $0x24] sm:$0xf] %vm1637, %v1614
        %1648 = vst.msk [vmem:[%s683 + $0x28] sm:$0xf] %vm1637, %v1615
        %1649 = vst.msk [vmem:[%s683 + $0x2c] sm:$0xf] %vm1637, %v1616
        %1650 = vst.msk [vmem:[%s683 + $0x30] sm:$0xf] %vm1637, %v1617
        %1651 = vst.msk [vmem:[%s683 + $0x34] sm:$0xf] %vm1637, %v1618
        %1652 = vst.msk [vmem:[%s683 + $0x38] sm:$0xf] %vm1637, %v1619
        %1653 = vst.msk [vmem:[%s683 + $0x3c] sm:$0xf] %vm1637, %v1620
        %s1654 = smul.u32 16, %s23
        %p1655 = scmp.lt.s32.totalorder %s22, 1
        %s1656 = scalar_select %p1655, %s22, 1
        %p1657 = scmp.lt.s32.totalorder %s1654, 31
        %s1658 = scalar_select %p1657, %s1654, 31
        %s1659 = smul.addr %s1656, 32
        %s1660 = sadd.s32 %s1658, %s1659
        %s1661 = smul.addr %s1660, 4
        %s1662 = scalar_lea.vmem %s7, %s1661
        // Predicated region
        $region90: #{sea_forward.7} parent=84 // pred_check
          %p1663 = pneg %p240
        $region91: #{sea_forward.7} parent=84 // pred_check_branch
          %1665 = sbr.rel (%p1663) target = $region93
        $region92: #{sea_forward.7} parent=84 // pred_region
          %s1666 = smul.u32 16, %s23
        $region93: #{sea_forward.7} parent=84 // pred_fallthru
          _
      $region85: #{sea_forward.7} parent=5 // pred_fallthru
        _
      %p1667 = scmp.le.s32.totalorder 2, %s13
      // Predicated region
      $region94: #{sea_forward.7} parent=5 // pred_check
        %p1668 = pneg %p1667
      $region95: #{sea_forward.7} parent=5 // pred_check_branch
        %1670 = sbr.rel (%p1668) target = $region97
      $region96: #{sea_forward.7} parent=5 // pred_region
        %s1671 = ssub.s32 %s13, 2
        // Predicated region
        $region98: #{sea_forward.7} parent=96 // pred_check
          %p1672 = pneg %p246
        $region99: #{sea_forward.7} parent=96 // pred_check_branch
          %1674 = sbr.rel (%p1672) target = $region101
        $region100: #{sea_forward.7} parent=96 // pred_region
          %s1675 = smul.u32 16, %s25
          %p1676 = scmp.lt.s32.totalorder %s24, 1
          %s1677 = scalar_select %p1676, %s24, 1
          %p1678 = scmp.lt.s32.totalorder %s1675, 31
          %s1679 = scalar_select %p1678, %s1675, 31
          %s1680 = smul.addr %s1677, 32
          %s1681 = sadd.s32 %s1679, %s1680
          %s1682 = smul.addr %s1681, 4
          %s1683 = scalar_lea.vmem %s7, %s1682
        $region101: #{sea_forward.7} parent=96 // pred_fallthru
          _
      $region97: #{sea_forward.7} parent=5 // pred_fallthru
        _
    $region6: #{sea_forward.7} parent=1 // loop_footer
      %s17 = sadd.s32 1, %s13
    $region7: #{sea_forward.7} parent=1 // loop_footer_branch
      %12 = sbr.rel target = $region3
    $region8: #{sea_forward.7} parent=1 // loop_exit
      _

// kernel: sea_forward.8
$region0: #{sea_forward.8}
  #allocation0 [shape = 'u32[]', space=smem, size = 0x4, offset = 0x4, fixed_abs, tag = 'smem constant byte address 0x4 - core index']
  #allocation1 [shape = 'u32[144,128]{1,0:T(1,128)}', space=vmem, size = 0x12000, scoped, tag = 'internal scratch']
  %s0 = inlined_call_operand.vmem [shape: bf16[1,2,288,192], index: 0, kind: input, shape index: {}, may-alias: {0,1}]
  %s1 = inlined_call_operand.vmem [shape: bf16[1,2,288,192], index: 1, kind: input, shape index: {}, may-alias: {0,1}]
  %s2 = inlined_call_operand.vmem [shape: bf16[1,3,192,64], index: 2, kind: input, shape index: {}]
  %s3 = inlined_call_operand.vmem [shape: f32[1,1,64], index: 3, kind: input, shape index: {}]
  %s4 = inlined_call_operand.vmem [shape: bf16[1,2,256,64], index: 4, kind: output, shape index: {}]
  %s5 = sld [smem:[#allocation0]]
  $region49: #{sea_forward.8} parent=0
    _
  %s7 = ssub.s32 1, %s5
  %s8 = scalar_select 0, %s7, %s5
  loop: start=0, step=1, limit=6
  $region2: #{sea_forward.8} parent=0 // loop_pre_header
    _
  $region3: #{sea_forward.8} parent=0 // loop_header
    %s10 = sphi 0, %s14
    %p11 = scmp.ge.s32.totalorder %s10, 6
    %s17 = sphi 0, %s36
    %s18 = sphi 0, %s32
    %s19 = sphi 0, %s28
    %s20 = sphi 0, %s17
    %s21 = sphi 0, %s18
    %s22 = sphi 0, %s19
    %s23 = sphi 0, %s20
    %s24 = sphi 0, %s21
    %s25 = sphi 0, %s22
    %s43 = sphi 0, %s45
    %s46 = sphi 0, %s43
    %s47 = sphi 0, %s46
    %s63 = sphi 0, %s47
    %s77 = sphi 0, %s79
    %s80 = sphi 0, %s77
    %s81 = sphi 0, %s80
    %s97 = sphi 0, %s81
    %s103 = sphi 0, %s105
    %s106 = sphi 0, %s103
    %s107 = sphi 0, %s106
    %s123 = sphi 0, %s107
    %s129 = sphi 0, %s131
    %s132 = sphi 0, %s129
    %s133 = sphi 0, %s132
    %s149 = sphi 0, %s133
    %s159 = sphi 0, %s161
    %s162 = sphi 0, %s159
    %s163 = sphi 0, %s162
    %s179 = sphi 0, %s163
  $region4: #{sea_forward.8} parent=0 // loop_header_branch
    %13 = sbr.rel (%p11) target = $region8
  $region5: #{sea_forward.8} parent=0 // loop_body
    %s15 = ssub.s32 %s10, 1
    %s16 = ssub.s32 %s10, 2
    %s26 = sadd.s32 1, %s19
    %p27 = scmp.ge.s32.totalorder %s26, 2
    %s28 = scalar_select %p27, 0, %s26
    %s29 = sadd.s32 1, %s18
    %s30 = scalar_select %p27, %s29, %s18
    %p31 = scmp.ge.s32.totalorder %s30, 2
    %s32 = scalar_select %p31, 0, %s30
    %s33 = sadd.s32 1, %s17
    %s34 = scalar_select %p31, %s33, %s17
    %p35 = scmp.ge.s32.totalorder %s34, 1
    %s36 = scalar_select %p35, 0, %s34
    %s37 = ssub.s32 %s17, %s36
    %s38 = ssub.s32 %s18, %s32
    %s39 = sor.u32 %s37, %s38
    %s40 = ssub.s32 %s19, %s28
    %s41 = sor.u32 %s39, %s40
    %p42 = scmp.eq.s32.totalorder %s41, 0
    %s44 = sadd.s32 %s43, 1
    %s45 = scalar_select %p42, %s43, %s44
    %p48 = pneg %p42
    %p49 = scmp.eq.s32.totalorder %s10, 3
    %p50 = por %p48, %p49
    %p51 = scmp.ne.s32.totalorder %s43, %s46
    %p52 = scmp.eq.s32.totalorder %s10, 0
    %p53 = por %p51, %p52
    %p54 = scmp.ne.s32.totalorder %s43, %s46
    %p55 = scmp.eq.s32.totalorder %s15, 3
    %p56 = por %p54, %p55
    %p57 = scmp.ne.s32.totalorder %s46, %s47
    %p58 = scmp.eq.s32.totalorder %s15, 0
    %p59 = por %p57, %p58
    %p60 = scmp.ne.s32.totalorder %s46, %s47
    %p61 = scmp.eq.s32.totalorder %s16, 3
    %p62 = por %p60, %p61
    %p64 = scmp.ne.s32.totalorder %s47, %s63
    %p65 = scmp.eq.s32.totalorder %s16, 0
    %p66 = por %p64, %p65
    %s67 = sadd.s32 %s19, 1
    %s68 = smul.u32 %s67, 4
    %s69 = sadd.s32 %s28, 1
    %s70 = smul.u32 %s69, 4
    %s71 = ssub.s32 %s17, %s36
    %s72 = ssub.s32 %s18, %s32
    %s73 = sor.u32 %s71, %s72
    %s74 = ssub.s32 %s68, %s70
    %s75 = sor.u32 %s73, %s74
    %p76 = scmp.eq.s32.totalorder %s75, 0
    %s78 = sadd.s32 %s77, 1
    %s79 = scalar_select %p76, %s77, %s78
    %p82 = pneg %p76
    %p83 = scmp.eq.s32.totalorder %s10, 3
    %p84 = por %p82, %p83
    %p85 = scmp.ne.s32.totalorder %s77, %s80
    %p86 = scmp.eq.s32.totalorder %s10, 0
    %p87 = por %p85, %p86
    %p88 = scmp.ne.s32.totalorder %s77, %s80
    %p89 = scmp.eq.s32.totalorder %s15, 3
    %p90 = por %p88, %p89
    %p91 = scmp.ne.s32.totalorder %s80, %s81
    %p92 = scmp.eq.s32.totalorder %s15, 0
    %p93 = por %p91, %p92
    %p94 = scmp.ne.s32.totalorder %s80, %s81
    %p95 = scmp.eq.s32.totalorder %s16, 3
    %p96 = por %p94, %p95
    %p98 = scmp.ne.s32.totalorder %s81, %s97
    %p99 = scmp.eq.s32.totalorder %s16, 0
    %p100 = por %p98, %p99
    %s101 = ssub.s32 %s17, %s36
    %p102 = scmp.eq.s32.totalorder %s101, 0
    %s104 = sadd.s32 %s103, 1
    %s105 = scalar_select %p102, %s103, %s104
    %p108 = pneg %p102
    %p109 = scmp.eq.s32.totalorder %s10, 3
    %p110 = por %p108, %p109
    %p111 = scmp.ne.s32.totalorder %s103, %s106
    %p112 = scmp.eq.s32.totalorder %s10, 0
    %p113 = por %p111, %p112
    %p114 = scmp.ne.s32.totalorder %s103, %s106
    %p115 = scmp.eq.s32.totalorder %s15, 3
    %p116 = por %p114, %p115
    %p117 = scmp.ne.s32.totalorder %s106, %s107
    %p118 = scmp.eq.s32.totalorder %s15, 0
    %p119 = por %p117, %p118
    %p120 = scmp.ne.s32.totalorder %s106, %s107
    %p121 = scmp.eq.s32.totalorder %s16, 3
    %p122 = por %p120, %p121
    %p124 = scmp.ne.s32.totalorder %s107, %s123
    %p125 = scmp.eq.s32.totalorder %s16, 0
    %p126 = por %p124, %p125
    %s127 = ssub.s32 %s17, %s36
    %p128 = scmp.eq.s32.totalorder %s127, 0
    %s130 = sadd.s32 %s129, 1
    %s131 = scalar_select %p128, %s129, %s130
    %p134 = pneg %p128
    %p135 = scmp.eq.s32.totalorder %s10, 3
    %p136 = por %p134, %p135
    %p137 = scmp.ne.s32.totalorder %s129, %s132
    %p138 = scmp.eq.s32.totalorder %s10, 0
    %p139 = por %p137, %p138
    %p140 = scmp.ne.s32.totalorder %s129, %s132
    %p141 = scmp.eq.s32.totalorder %s15, 3
    %p142 = por %p140, %p141
    %p143 = scmp.ne.s32.totalorder %s132, %s133
    %p144 = scmp.eq.s32.totalorder %s15, 0
    %p145 = por %p143, %p144
    %p146 = scmp.ne.s32.totalorder %s132, %s133
    %p147 = scmp.eq.s32.totalorder %s16, 3
    %p148 = por %p146, %p147
    %p150 = scmp.ne.s32.totalorder %s133, %s149
    %p151 = scmp.eq.s32.totalorder %s16, 0
    %p152 = por %p150, %p151
    %s153 = ssub.s32 %s17, %s36
    %s154 = ssub.s32 %s18, %s32
    %s155 = sor.u32 %s153, %s154
    %s156 = ssub.s32 %s19, %s28
    %s157 = sor.u32 %s155, %s156
    %p158 = scmp.eq.s32.totalorder %s157, 0
    %s160 = sadd.s32 %s159, 1
    %s161 = scalar_select %p158, %s159, %s160
    %p164 = pneg %p158
    %p165 = scmp.eq.s32.totalorder %s10, 3
    %p166 = por %p164, %p165
    %p167 = scmp.ne.s32.totalorder %s159, %s162
    %p168 = scmp.eq.s32.totalorder %s10, 0
    %p169 = por %p167, %p168
    %p170 = scmp.ne.s32.totalorder %s159, %s162
    %p171 = scmp.eq.s32.totalorder %s15, 3
    %p172 = por %p170, %p171
    %p173 = scmp.ne.s32.totalorder %s162, %s163
    %p174 = scmp.eq.s32.totalorder %s15, 0
    %p175 = por %p173, %p174
    %p176 = scmp.ne.s32.totalorder %s162, %s163
    %p177 = scmp.eq.s32.totalorder %s16, 3
    %p178 = por %p176, %p177
    %p180 = scmp.ne.s32.totalorder %s163, %s179
    %p181 = scmp.eq.s32.totalorder %s16, 0
    %p182 = por %p180, %p181
    %p183 = scmp.le.s32.totalorder 1, %s10
    %p184 = scmp.lt.s32.totalorder %s10, 5
    %p185 = pnand %p183, %p184
    %p186 = pneg %p185
    // Predicated region
    $region9: #{sea_forward.8} parent=5 // pred_check
      _
    $region10: #{sea_forward.8} parent=5 // pred_check_branch
      %188 = sbr.rel (%p185) target = $region12
    $region11: #{sea_forward.8} parent=5 // pred_region
      %s189 = ssub.s32 %s10, 1
      // Predicated region
      $region13: #{sea_forward.8} parent=11 // pred_check
        %p190 = pneg %p119
      $region14: #{sea_forward.8} parent=11 // pred_check_branch
        %192 = sbr.rel (%p190) target = $region16
      $region15: #{sea_forward.8} parent=11 // pred_region
        %p193 = scmp.lt.s32.totalorder %s20, 0
        %s194 = scalar_select %p193, %s20, 0
        %s195 = smul.addr %s194, 72
        %s196 = smul.addr %s195, 4
        %s197 = scalar_lea.vmem %s2, %s196
      $region16: #{sea_forward.8} parent=11 // pred_fallthru
        _
      // Predicated region
      $region17: #{sea_forward.8} parent=11 // pred_check
        %p198 = pneg %p145
      $region18: #{sea_forward.8} parent=11 // pred_check_branch
        %200 = sbr.rel (%p198) target = $region20
      $region19: #{sea_forward.8} parent=11 // pred_region
        %p201 = scmp.lt.s32.totalorder %s20, 0
        %s202 = scalar_select %p201, %s20, 0
        %s203 = scalar_lea.vmem %s3, %s202
      $region20: #{sea_forward.8} parent=11 // pred_fallthru
        _
    $region12: #{sea_forward.8} parent=5 // pred_fallthru
      _
    %p204 = scmp.lt.s32.totalorder %s10, 4
    // Predicated region
    $region21: #{sea_forward.8} parent=5 // pred_check
      %p205 = pneg %p204
    $region22: #{sea_forward.8} parent=5 // pred_check_branch
      %207 = sbr.rel (%p205) target = $region24
    $region23: #{sea_forward.8} parent=5 // pred_region
      // Predicated region
      $region25: #{sea_forward.8} parent=23 // pred_check
        %p208 = pneg %p53
      $region26: #{sea_forward.8} parent=23 // pred_check_branch
        %210 = sbr.rel (%p208) target = $region28
      $region27: #{sea_forward.8} parent=23 // pred_region
        %s211 = smul.u32 16, %s19
        %s212 = ssub.s32 36, %s211
        %p213 = scmp.lt.s32.totalorder %s212, 16
        %s214 = scalar_select %p213, %s212, 16
        %s215 = smul.u32 64, %s214
        %s216 = smul.u32 %s215, 2
        %p217 = scmp.lt.s32.totalorder %s17, 0
        %s218 = scalar_select %p217, %s17, 0
        %p219 = scmp.lt.s32.totalorder %s18, 1
        %s220 = scalar_select %p219, %s18, 1
        %p221 = scmp.lt.s32.totalorder %s211, 35
        %s222 = scalar_select %p221, %s211, 35
        %s223 = smul.addr %s222, 2
        %s224 = smul.addr %s220, 72
        %s225 = sadd.s32 %s223, %s224
        %s226 = smul.addr %s218, 144
        %s227 = sadd.s32 %s225, %s226
        %s228 = smul.addr %s227, 4
        %s229 = scalar_lea.vmem %s0, %s228
        %s230 = smul.u32 16, %s19
        %s231 = ssub.s32 36, %s230
        %p232 = scmp.lt.s32.totalorder %s231, 16
        %s233 = scalar_select %p232, %s231, 16
        %s234 = smul.u32 64, %s233
        %s235 = smul.u32 %s234, 2
      $region28: #{sea_forward.8} parent=23 // pred_fallthru
        _
      // Predicated region
      $region29: #{sea_forward.8} parent=23 // pred_check
        %p236 = pneg %p87
      $region30: #{sea_forward.8} parent=23 // pred_check_branch
        %238 = sbr.rel (%p236) target = $region32
      $region31: #{sea_forward.8} parent=23 // pred_region
        %s239 = sadd.s32 %s19, 1
        %s240 = smul.u32 %s239, 4
        %s241 = smul.u32 4, %s240
        %p242 = scmp.lt.s32.totalorder %s17, 0
        %s243 = scalar_select %p242, %s17, 0
        %p244 = scmp.lt.s32.totalorder %s18, 1
        %s245 = scalar_select %p244, %s18, 1
        %p246 = scmp.lt.s32.totalorder %s241, 35
        %s247 = scalar_select %p246, %s241, 35
        %s248 = smul.addr %s247, 2
        %s249 = smul.addr %s245, 72
        %s250 = sadd.s32 %s248, %s249
        %s251 = smul.addr %s243, 144
        %s252 = sadd.s32 %s250, %s251
        %s253 = smul.addr %s252, 4
        %s254 = scalar_lea.vmem %s1, %s253
        %s255 = sadd.s32 %s19, 1
        %s256 = smul.u32 %s255, 4
        %s257 = smul.u32 4, %s256
      $region32: #{sea_forward.8} parent=23 // pred_fallthru
        _
    $region24: #{sea_forward.8} parent=5 // pred_fallthru
      _
    %p258 = scmp.le.s32.totalorder 1, %s10
    %p259 = scmp.lt.s32.totalorder %s10, 5
    %p260 = pnand %p258, %p259
    %p261 = pneg %p260
    // Predicated region
    $region33: #{sea_forward.8} parent=5 // pred_check
      _
    $region34: #{sea_forward.8} parent=5 // pred_check_branch
      %263 = sbr.rel (%p260) target = $region36
    $region35: #{sea_forward.8} parent=5 // pred_region
      %s264 = ssub.s32 %s10, 1
      %s265 = smul.u32 16, %s22
      %s266 = ssub.s32 36, %s265
      %p267 = scmp.lt.s32.totalorder %s266, 16
      %s268 = scalar_select %p267, %s266, 16
      %s269 = smul.u32 64, %s268
      %s270 = smul.u32 %s269, 2
      %p271 = scmp.lt.s32.totalorder %s20, 0
      %s272 = scalar_select %p271, %s20, 0
      %p273 = scmp.lt.s32.totalorder %s21, 1
      %s274 = scalar_select %p273, %s21, 1
      %p275 = scmp.lt.s32.totalorder %s265, 35
      %s276 = scalar_select %p275, %s265, 35
      %s277 = smul.addr %s276, 2
      %s278 = smul.addr %s274, 72
      %s279 = sadd.s32 %s277, %s278
      %s280 = smul.addr %s272, 144
      %s281 = sadd.s32 %s279, %s280
      %s282 = smul.addr %s281, 4
      %s283 = scalar_lea.vmem %s0, %s282
      %p284 = pneg %p59
      %p285 = pneg %p56
      %s286 = sadd.s32 %s22, 1
      %s287 = smul.u32 %s286, 4
      %s288 = smul.u32 4, %s287
      %p289 = scmp.lt.s32.totalorder %s20, 0
      %s290 = scalar_select %p289, %s20, 0
      %p291 = scmp.lt.s32.totalorder %s21, 1
      %s292 = scalar_select %p291, %s21, 1
      %p293 = scmp.lt.s32.totalorder %s288, 35
      %s294 = scalar_select %p293, %s288, 35
      %s295 = smul.addr %s294, 2
      %s296 = smul.addr %s292, 72
      %s297 = sadd.s32 %s295, %s296
      %s298 = smul.addr %s290, 144
      %s299 = sadd.s32 %s297, %s298
      %s300 = smul.addr %s299, 4
      %s301 = scalar_lea.vmem %s1, %s300
      %p302 = pneg %p93
      %p303 = pneg %p90
      %p304 = scmp.lt.s32.totalorder %s20, 0
      %s305 = scalar_select %p304, %s20, 0
      %s306 = smul.addr %s305, 72
      %s307 = smul.addr %s306, 4
      %s308 = scalar_lea.vmem %s2, %s307
      %p309 = pneg %p119
      %p310 = pneg %p116
      %p311 = scmp.lt.s32.totalorder %s20, 0
      %s312 = scalar_select %p311, %s20, 0
      %s313 = scalar_lea.vmem %s3, %s312
      %p314 = pneg %p145
      %p315 = pneg %p142
      %p316 = pneg %p175
      %p317 = pneg %p172
      %s318 = smul.u32 16, %s22
      %p319 = scmp.lt.s32.totalorder %s20, 0
      %s320 = scalar_select %p319, %s20, 0
      %p321 = scmp.lt.s32.totalorder %s21, 1
      %s322 = scalar_select %p321, %s21, 1
      %p323 = scmp.lt.s32.totalorder %s318, 31
      %s324 = scalar_select %p323, %s318, 31
      %s325 = smul.addr %s322, 32
      %s326 = sadd.s32 %s324, %s325
      %s327 = smul.addr %s320, 64
      %s328 = sadd.s32 %s326, %s327
      %s329 = smul.addr %s328, 4
      %s330 = scalar_lea.vmem %s4, %s329
      %s331 = smul.u32 16, %s22
      %s332 = ssub.s32 36, %s331
      %p333 = scmp.lt.s32.totalorder %s332, 16
      %s334 = scalar_select %p333, %s332, 16
      %s335 = smul.u32 64, %s334
      %s336 = smul.u32 %s335, 2
      %p337 = scmp.lt.s32.totalorder %s20, 0
      %s338 = scalar_select %p337, %s20, 0
      %p339 = scmp.lt.s32.totalorder %s21, 1
      %s340 = scalar_select %p339, %s21, 1
      %p341 = scmp.lt.s32.totalorder %s331, 35
      %s342 = scalar_select %p341, %s331, 35
      %s343 = smul.addr %s342, 2
      %s344 = smul.addr %s340, 72
      %s345 = sadd.s32 %s343, %s344
      %s346 = smul.addr %s338, 144
      %s347 = sadd.s32 %s345, %s346
      %s348 = smul.addr %s347, 4
      %s349 = scalar_lea.vmem %s0, %s348
      %s350 = smul.u32 16, %s22
      %s351 = ssub.s32 36, %s350
      %p352 = scmp.lt.s32.totalorder %s351, 16
      %s353 = scalar_select %p352, %s351, 16
      %s354 = smul.u32 64, %s353
      %s355 = smul.u32 %s354, 2
      %s356 = sadd.s32 %s22, 1
      %s357 = smul.u32 %s356, 4
      %s358 = smul.u32 4, %s357
      %p359 = scmp.lt.s32.totalorder %s20, 0
      %s360 = scalar_select %p359, %s20, 0
      %p361 = scmp.lt.s32.totalorder %s21, 1
      %s362 = scalar_select %p361, %s21, 1
      %p363 = scmp.lt.s32.totalorder %s358, 35
      %s364 = scalar_select %p363, %s358, 35
      %s365 = smul.addr %s364, 2
      %s366 = smul.addr %s362, 72
      %s367 = sadd.s32 %s365, %s366
      %s368 = smul.addr %s360, 144
      %s369 = sadd.s32 %s367, %s368
      %s370 = smul.addr %s369, 4
      %s371 = scalar_lea.vmem %s1, %s370
      %s372 = sadd.s32 %s22, 1
      %s373 = smul.u32 %s372, 4
      %s374 = smul.u32 4, %s373
      %p375 = scmp.lt.s32.totalorder %s20, 0
      %s376 = scalar_select %p375, %s20, 0
      %s377 = smul.addr %s376, 72
      %s378 = smul.addr %s377, 4
      %s379 = scalar_lea.vmem %s2, %s378
      %p380 = scmp.lt.s32.totalorder %s20, 0
      %s381 = scalar_select %p380, %s20, 0
      %s382 = scalar_lea.vmem %s3, %s381
      %s383 = smul.u32 16, %s22
      %p384 = scmp.lt.s32.totalorder %s20, 0
      %s385 = scalar_select %p384, %s20, 0
      %p386 = scmp.lt.s32.totalorder %s21, 1
      %s387 = scalar_select %p386, %s21, 1
      %p388 = scmp.lt.s32.totalorder %s383, 31
      %s389 = scalar_select %p388, %s383, 31
      %s390 = smul.addr %s387, 32
      %s391 = sadd.s32 %s389, %s390
      %s392 = smul.addr %s385, 64
      %s393 = sadd.s32 %s391, %s392
      %s394 = smul.addr %s393, 4
      %s395 = scalar_lea.vmem %s4, %s394
      %s396 = smul.u32 16, %s22
      %v398 = vld [vmem:[%s349] sm:$0xff]
      %v399 = vld [vmem:[%s349 + $0x8] sm:$0xff]
      %v400 = vld [vmem:[%s349 + $0x10] sm:$0xff]
      %v401 = vld [vmem:[%s349 + $0x18] sm:$0xff]
      %v402 = vld [vmem:[%s349 + $0x20] sm:$0xff]
      %v403 = vld [vmem:[%s349 + $0x28] sm:$0xff]
      %v404 = vld [vmem:[%s349 + $0x30] sm:$0xff]
      %v405 = vld [vmem:[%s349 + $0x38] sm:$0xff]
      %v406 = vld [vmem:[%s349 + $0x40] sm:$0xff]
      %v407 = vld [vmem:[%s349 + $0x48] sm:$0xff]
      %v408 = vld [vmem:[%s349 + $0x50] sm:$0xff]
      %v409 = vld [vmem:[%s349 + $0x58] sm:$0xff]
      %v410 = vld [vmem:[%s349 + $0x60] sm:$0xff]
      %v411 = vld [vmem:[%s349 + $0x68] sm:$0xff]
      %v412 = vld [vmem:[%s349 + $0x70] sm:$0xff]
      %v413 = vld [vmem:[%s349 + $0x78] sm:$0xff]
      %v414 = vld [vmem:[%s371] sm:$0xff]
      %v415 = vld [vmem:[%s371 + $0x8] sm:$0xff]
      %v416 = vld [vmem:[%s371 + $0x10] sm:$0xff]
      %v417 = vld [vmem:[%s371 + $0x18] sm:$0xff]
      %v418 = vld [vmem:[%s379] sm:$0xf]
      %v419 = vld [vmem:[%s379 + $0x4] sm:$0xf]
      %v420 = vld [vmem:[%s379 + $0x8] sm:$0xf]
      %v421 = vld [vmem:[%s379 + $0xc] sm:$0xf]
      %v422 = vld [vmem:[%s379 + $0x10] sm:$0xf]
      %v423 = vld [vmem:[%s379 + $0x14] sm:$0xf]
      %v424 = vld [vmem:[%s379 + $0x18] sm:$0xf]
      %v425 = vld [vmem:[%s379 + $0x1c] sm:$0xf]
      %v426 = vld [vmem:[%s379 + $0x20] sm:$0xf]
      %v427 = vld [vmem:[%s379 + $0x24] sm:$0xf]
      %v428 = vld [vmem:[%s379 + $0x28] sm:$0xf]
      %v429 = vld [vmem:[%s379 + $0x2c] sm:$0xf]
      %v430 = vld [vmem:[%s379 + $0x30] sm:$0xf]
      %v431 = vld [vmem:[%s379 + $0x34] sm:$0xf]
      %v432 = vld [vmem:[%s379 + $0x38] sm:$0xf]
      %v433 = vld [vmem:[%s379 + $0x3c] sm:$0xf]
      %v434 = vld [vmem:[%s379 + $0x40] sm:$0xf]
      %v435 = vld [vmem:[%s379 + $0x44] sm:$0xf]
      %v436 = vld [vmem:[%s379 + $0x48] sm:$0xf]
      %v437 = vld [vmem:[%s379 + $0x4c] sm:$0xf]
      %v438 = vld [vmem:[%s379 + $0x50] sm:$0xf]
      %v439 = vld [vmem:[%s379 + $0x54] sm:$0xf]
      %v440 = vld [vmem:[%s379 + $0x58] sm:$0xf]
      %v441 = vld [vmem:[%s379 + $0x5c] sm:$0xf]
      %v442 = vld [vmem:[%s379 + $0x60] sm:$0xf]
      %v443 = vld [vmem:[%s379 + $0x64] sm:$0xf]
      %v444 = vld [vmem:[%s379 + $0x68] sm:$0xf]
      %v445 = vld [vmem:[%s379 + $0x6c] sm:$0xf]
      %v446 = vld [vmem:[%s379 + $0x70] sm:$0xf]
      %v447 = vld [vmem:[%s379 + $0x74] sm:$0xf]
      %v448 = vld [vmem:[%s379 + $0x78] sm:$0xf]
      %v449 = vld [vmem:[%s379 + $0x7c] sm:$0xf]
      %v450 = vld [vmem:[%s379 + $0x80] sm:$0xf]
      %v451 = vld [vmem:[%s379 + $0x84] sm:$0xf]
      %v452 = vld [vmem:[%s379 + $0x88] sm:$0xf]
      %v453 = vld [vmem:[%s379 + $0x8c] sm:$0xf]
      %v454 = vld [vmem:[%s379 + $0x90] sm:$0xf]
      %v455 = vld [vmem:[%s379 + $0x94] sm:$0xf]
      %v456 = vld [vmem:[%s379 + $0x98] sm:$0xf]
      %v457 = vld [vmem:[%s379 + $0x9c] sm:$0xf]
      %v458 = vld [vmem:[%s379 + $0xa0] sm:$0xf]
      %v459 = vld [vmem:[%s379 + $0xa4] sm:$0xf]
      %v460 = vld [vmem:[%s379 + $0xa8] sm:$0xf]
      %v461 = vld [vmem:[%s379 + $0xac] sm:$0xf]
      %v462 = vld [vmem:[%s379 + $0xb0] sm:$0xf]
      %v463 = vld [vmem:[%s379 + $0xb4] sm:$0xf]
      %v464 = vld [vmem:[%s379 + $0xb8] sm:$0xf]
      %v465 = vld [vmem:[%s379 + $0xbc] sm:$0xf]
      %v466 = vld [vmem:[%s379 + $0xc0] sm:$0xf]
      %v467 = vld [vmem:[%s379 + $0xc4] sm:$0xf]
      %v468 = vld [vmem:[%s379 + $0xc8] sm:$0xf]
      %v469 = vld [vmem:[%s379 + $0xcc] sm:$0xf]
      %v470 = vld [vmem:[%s379 + $0xd0] sm:$0xf]
      %v471 = vld [vmem:[%s379 + $0xd4] sm:$0xf]
      %v472 = vld [vmem:[%s379 + $0xd8] sm:$0xf]
      %v473 = vld [vmem:[%s379 + $0xdc] sm:$0xf]
      %v474 = vld [vmem:[%s379 + $0xe0] sm:$0xf]
      %v475 = vld [vmem:[%s379 + $0xe4] sm:$0xf]
      %v476 = vld [vmem:[%s379 + $0xe8] sm:$0xf]
      %v477 = vld [vmem:[%s379 + $0xec] sm:$0xf]
      %v478 = vld [vmem:[%s379 + $0xf0] sm:$0xf]
      %v479 = vld [vmem:[%s379 + $0xf4] sm:$0xf]
      %v480 = vld [vmem:[%s379 + $0xf8] sm:$0xf]
      %v481 = vld [vmem:[%s379 + $0xfc] sm:$0xf]
      %v482 = vld [vmem:[%s379 + $0x100] sm:$0xf]
      %v483 = vld [vmem:[%s379 + $0x104] sm:$0xf]
      %v484 = vld [vmem:[%s379 + $0x108] sm:$0xf]
      %v485 = vld [vmem:[%s379 + $0x10c] sm:$0xf]
      %v486 = vld [vmem:[%s379 + $0x110] sm:$0xf]
      %v487 = vld [vmem:[%s379 + $0x114] sm:$0xf]
      %v488 = vld [vmem:[%s379 + $0x118] sm:$0xf]
      %v489 = vld [vmem:[%s379 + $0x11c] sm:$0xf]
      %v506 = vunpack.c.l.b16 %v398
      %v507 = vunpack.c.h.b16 %v398
      %v508 = vunpack.c.l.b16 %v399
      %v509 = vunpack.c.h.b16 %v399
      %v510 = vunpack.c.l.b16 %v400
      %v511 = vunpack.c.h.b16 %v400
      %v512 = vunpack.c.l.b16 %v401
      %v513 = vunpack.c.h.b16 %v401
      %v514 = vunpack.c.l.b16 %v402
      %v515 = vunpack.c.h.b16 %v402
      %v516 = vunpack.c.l.b16 %v403
      %v517 = vunpack.c.h.b16 %v403
      %v518 = vunpack.c.l.b16 %v404
      %v519 = vunpack.c.h.b16 %v404
      %v520 = vunpack.c.l.b16 %v405
      %v521 = vunpack.c.h.b16 %v405
      %v522 = vunpack.c.l.b16 %v406
      %v523 = vunpack.c.h.b16 %v406
      %v524 = vunpack.c.l.b16 %v407
      %v525 = vunpack.c.h.b16 %v407
      %v526 = vunpack.c.l.b16 %v408
      %v527 = vunpack.c.h.b16 %v408
      %v528 = vunpack.c.l.b16 %v409
      %v529 = vunpack.c.h.b16 %v409
      %v530 = vunpack.c.l.b16 %v410
      %v531 = vunpack.c.h.b16 %v410
      %v532 = vunpack.c.l.b16 %v411
      %v533 = vunpack.c.h.b16 %v411
      %v534 = vunpack.c.l.b16 %v412
      %v535 = vunpack.c.h.b16 %v412
      %v536 = vunpack.c.l.b16 %v413
      %v537 = vunpack.c.h.b16 %v413
      %v538 = vpack.c.b16 %v508, %v506
      %v539 = vpack.c.b16 %v509, %v507
      %v540 = vpack.c.b16 %v512, %v510
      %v541 = vpack.c.b16 %v513, %v511
      %v542 = vpack.c.b16 %v516, %v514
      %v543 = vpack.c.b16 %v517, %v515
      %v544 = vpack.c.b16 %v520, %v518
      %v545 = vpack.c.b16 %v521, %v519
      %v546 = vpack.c.b16 %v524, %v522
      %v547 = vpack.c.b16 %v525, %v523
      %v548 = vpack.c.b16 %v528, %v526
      %v549 = vpack.c.b16 %v529, %v527
      %v550 = vpack.c.b16 %v532, %v530
      %v551 = vpack.c.b16 %v533, %v531
      %v552 = vpack.c.b16 %v536, %v534
      %v553 = vpack.c.b16 %v537, %v535
      %v566 = vunpack.c.l.b16 %v414
      %v567 = vunpack.c.h.b16 %v414
      %v568 = vunpack.c.l.b16 %v415
      %v569 = vunpack.c.h.b16 %v415
      %v570 = vunpack.c.l.b16 %v416
      %v571 = vunpack.c.h.b16 %v416
      %v572 = vunpack.c.l.b16 %v417
      %v573 = vunpack.c.h.b16 %v417
      %v574 = vpack.c.b16 %v568, %v566
      %v575 = vpack.c.b16 %v569, %v567
      %v576 = vpack.c.b16 %v572, %v570
      %v577 = vpack.c.b16 %v573, %v571
      %v604 = vunpack.c.l.b16 %v442
      %v605 = vunpack.c.l.b16 %v443
      %v606 = vunpack.c.l.b16 %v444
      %v607 = vunpack.c.l.b16 %v445
      %v608 = vunpack.c.l.b16 %v446
      %v609 = vunpack.c.l.b16 %v447
      %v610 = vunpack.c.l.b16 %v448
      %v611 = vunpack.c.l.b16 %v449
      %v612 = vunpack.c.l.b16 %v450
      %v613 = vunpack.c.l.b16 %v451
      %v614 = vunpack.c.l.b16 %v452
      %v615 = vunpack.c.l.b16 %v453
      %v616 = vunpack.c.l.b16 %v454
      %v617 = vunpack.c.l.b16 %v455
      %v618 = vunpack.c.l.b16 %v456
      %v619 = vunpack.c.l.b16 %v457
      %v620 = vunpack.c.l.b16 %v458
      %v621 = vunpack.c.l.b16 %v459
      %v622 = vunpack.c.l.b16 %v460
      %v623 = vunpack.c.l.b16 %v461
      %v624 = vunpack.c.l.b16 %v462
      %v625 = vunpack.c.l.b16 %v463
      %v626 = vunpack.c.l.b16 %v464
      %v627 = vunpack.c.l.b16 %v465
      %v628 = vpack.c.b16 %v605, %v604
      %v629 = vpack.c.b16 %v607, %v606
      %v630 = vpack.c.b16 %v609, %v608
      %v631 = vpack.c.b16 %v611, %v610
      %v632 = vpack.c.b16 %v613, %v612
      %v633 = vpack.c.b16 %v615, %v614
      %v634 = vpack.c.b16 %v617, %v616
      %v635 = vpack.c.b16 %v619, %v618
      %v636 = vpack.c.b16 %v621, %v620
      %v637 = vpack.c.b16 %v623, %v622
      %v638 = vpack.c.b16 %v625, %v624
      %v639 = vpack.c.b16 %v627, %v626
      %vm652 = vcmask 523264
      %v654 = vsel %vm652, %v541, 0
      %v657 = vsel %vm652, %v543, 0
      %v660 = vsel %vm652, %v545, 0
      %v663 = vsel %vm652, %v547, 0
      %v666 = vsel %vm652, %v549, 0
      %v669 = vsel %vm652, %v551, 0
      %v672 = vsel %vm652, %v553, 0
      %v675 = vsel %vm652, %v575, 0
      %677 = vmatprep.subr.bf16.mxu0 0
      %678 = vmatpush1.bf16.msra.mxu0 %v628
      %679 = vmatprep.subr.bf16.mxu0 0
      %680 = vmatpush1.bf16.msra.mxu0 %v629
      %681 = vmatprep.subr.bf16.mxu0 0
      %682 = vmatpush1.bf16.msra.mxu0 %v630
      %683 = vmatprep.subr.bf16.mxu0 0
      %684 = vmatpush1.bf16.msra.mxu0 %v631
      %685 = vmatprep.subr.bf16.mxu0 0
      %686 = vmatpush1.bf16.msra.mxu0 %v632
      %687 = vmatprep.subr.bf16.mxu0 0
      %688 = vmatpush1.bf16.msra.mxu0 %v633
      %689 = vmatprep.subr.bf16.mxu0 0
      %690 = vmatpush1.bf16.msra.mxu0 %v634
      %691 = vmatprep.subr.bf16.mxu0 0
      %692 = vmatpush1.bf16.msra.mxu0 %v635
      %693 = vmatprep.subr.bf16.mxu0 0
      %694 = vmatpush1.bf16.msra.mxu0 %v636
      %695 = vmatprep.subr.bf16.mxu0 0
      %696 = vmatpush1.bf16.msra.mxu0 %v637
      %697 = vmatprep.subr.bf16.mxu0 0
      %698 = vmatpush1.bf16.msra.mxu0 %v638
      %699 = vmatprep.subr.bf16.mxu0 0
      %700 = vmatpush1.bf16.msra.mxu0 %v639
      %701 = vmatprep.subr.bf16.mxu0 0
      %702 = vmatpush1.bf16.msra.mxu0 0
      %703 = vmatprep.subr.bf16.mxu0 0
      %704 = vmatpush1.bf16.msra.mxu0 0
      %705 = vmatprep.subr.bf16.mxu0 0
      %706 = vmatpush1.bf16.msra.mxu0 0
      %707 = vmatprep.subr.bf16.mxu0 0
      %708 = vmatpush1.bf16.msra.mxu0 0
      %709 = vmatprep.mubr.bf16.mxu0 %v654
      %710 = vmatmul.mubr.bf16.gmra.mrb[0].mxu0 %v540
      %v711 = vpop.f32.mrb[0].mxu0
      %v712 = vadd.f32 0.0, %v711
      %v713 = vpop.f32.mrb[0].mxu0
      %v714 = vpop.f32.mrb[0].mxu0
      %v715 = vadd.f32 0.0, %v714
      %v716 = vpop.f32.mrb[0].mxu0
      %717 = vmatprep.mubr.bf16.mxu0 %v657
      %718 = vmatmul.mubr.bf16.gmra.mrb[0].mxu0 %v542
      %v719 = vpop.f32.mrb[0].mxu0
      %v720 = vadd.f32 0.0, %v719
      %v721 = vpop.f32.mrb[0].mxu0
      %v722 = vpop.f32.mrb[0].mxu0
      %v723 = vadd.f32 0.0, %v722
      %v724 = vpop.f32.mrb[0].mxu0
      %725 = vmatprep.mubr.bf16.mxu0 %v660
      %726 = vmatmul.mubr.bf16.gmra.mrb[0].mxu0 %v544
      %v727 = vpop.f32.mrb[0].mxu0
      %v728 = vadd.f32 0.0, %v727
      %v729 = vpop.f32.mrb[0].mxu0
      %v730 = vpop.f32.mrb[0].mxu0
      %v731 = vadd.f32 0.0, %v730
      %v732 = vpop.f32.mrb[0].mxu0
      %733 = vmatprep.mubr.bf16.mxu0 %v663
      %734 = vmatmul.mubr.bf16.gmra.mrb[0].mxu0 %v546
      %v735 = vpop.f32.mrb[0].mxu0
      %v736 = vadd.f32 0.0, %v735
      %v737 = vpop.f32.mrb[0].mxu0
      %v738 = vpop.f32.mrb[0].mxu0
      %v739 = vadd.f32 0.0, %v738
      %v740 = vpop.f32.mrb[0].mxu0
      %741 = vmatprep.mubr.bf16.mxu0 %v666
      %742 = vmatmul.mubr.bf16.gmra.mrb[0].mxu0 %v548
      %v743 = vpop.f32.mrb[0].mxu0
      %v744 = vadd.f32 0.0, %v743
      %v745 = vpop.f32.mrb[0].mxu0
      %v746 = vpop.f32.mrb[0].mxu0
      %v747 = vadd.f32 0.0, %v746
      %v748 = vpop.f32.mrb[0].mxu0
      %749 = vmatprep.mubr.bf16.mxu0 %v669
      %750 = vmatmul.mubr.bf16.gmra.mrb[0].mxu0 %v550
      %v751 = vpop.f32.mrb[0].mxu0
      %v752 = vadd.f32 0.0, %v751
      %v753 = vpop.f32.mrb[0].mxu0
      %v754 = vpop.f32.mrb[0].mxu0
      %v755 = vadd.f32 0.0, %v754
      %v756 = vpop.f32.mrb[0].mxu0
      %757 = vmatprep.mubr.bf16.mxu0 %v672
      %758 = vmatmul.mubr.bf16.gmra.mrb[0].mxu0 %v552
      %v759 = vpop.f32.mrb[0].mxu0
      %v760 = vadd.f32 0.0, %v759
      %v761 = vpop.f32.mrb[0].mxu0
      %v762 = vpop.f32.mrb[0].mxu0
      %v763 = vadd.f32 0.0, %v762
      %v764 = vpop.f32.mrb[0].mxu0
      %765 = vmatprep.mubr.bf16.mxu0 %v675
      %766 = vmatmul.mubr.bf16.gmra.mrb[0].mxu0 %v574
      %v767 = vpop.f32.mrb[0].mxu0
      %v768 = vadd.f32 0.0, %v767
      %v769 = vpop.f32.mrb[0].mxu0
      %v770 = vpop.f32.mrb[0].mxu0
      %v771 = vadd.f32 0.0, %v770
      %v772 = vpop.f32.mrb[0].mxu0
      %773 = vdwg.mxu0
      %v798 = vunpack.c.l.b16 %v418
      %v799 = vunpack.c.l.b16 %v419
      %v800 = vunpack.c.l.b16 %v420
      %v801 = vunpack.c.l.b16 %v421
      %v802 = vunpack.c.l.b16 %v422
      %v803 = vunpack.c.l.b16 %v423
      %v804 = vunpack.c.l.b16 %v424
      %v805 = vunpack.c.l.b16 %v425
      %v806 = vunpack.c.l.b16 %v426
      %v807 = vunpack.c.l.b16 %v427
      %v808 = vunpack.c.l.b16 %v428
      %v809 = vunpack.c.l.b16 %v429
      %v810 = vunpack.c.l.b16 %v430
      %v811 = vunpack.c.l.b16 %v431
      %v812 = vunpack.c.l.b16 %v432
      %v813 = vunpack.c.l.b16 %v433
      %v814 = vunpack.c.l.b16 %v434
      %v815 = vunpack.c.l.b16 %v435
      %v816 = vunpack.c.l.b16 %v436
      %v817 = vunpack.c.l.b16 %v437
      %v818 = vunpack.c.l.b16 %v438
      %v819 = vunpack.c.l.b16 %v439
      %v820 = vunpack.c.l.b16 %v440
      %v821 = vunpack.c.l.b16 %v441
      %v822 = vpack.c.b16 %v799, %v798
      %v823 = vpack.c.b16 %v801, %v800
      %v824 = vpack.c.b16 %v803, %v802
      %v825 = vpack.c.b16 %v805, %v804
      %v826 = vpack.c.b16 %v807, %v806
      %v827 = vpack.c.b16 %v809, %v808
      %v828 = vpack.c.b16 %v811, %v810
      %v829 = vpack.c.b16 %v813, %v812
      %v830 = vpack.c.b16 %v815, %v814
      %v831 = vpack.c.b16 %v817, %v816
      %v832 = vpack.c.b16 %v819, %v818
      %v833 = vpack.c.b16 %v821, %v820
      %v847 = vsel %vm652, %v539, 0
      %849 = vmatprep.subr.bf16.mxu0 0
      %850 = vmatpush1.bf16.msra.mxu0 %v822
      %851 = vmatprep.subr.bf16.mxu0 0
      %852 = vmatpush1.bf16.msra.mxu0 %v823
      %853 = vmatprep.subr.bf16.mxu0 0
      %854 = vmatpush1.bf16.msra.mxu0 %v824
      %855 = vmatprep.subr.bf16.mxu0 0
      %856 = vmatpush1.bf16.msra.mxu0 %v825
      %857 = vmatprep.subr.bf16.mxu0 0
      %858 = vmatpush1.bf16.msra.mxu0 %v826
      %859 = vmatprep.subr.bf16.mxu0 0
      %860 = vmatpush1.bf16.msra.mxu0 %v827
      %861 = vmatprep.subr.bf16.mxu0 0
      %862 = vmatpush1.bf16.msra.mxu0 %v828
      %863 = vmatprep.subr.bf16.mxu0 0
      %864 = vmatpush1.bf16.msra.mxu0 %v829
      %865 = vmatprep.subr.bf16.mxu0 0
      %866 = vmatpush1.bf16.msra.mxu0 %v830
      %867 = vmatprep.subr.bf16.mxu0 0
      %868 = vmatpush1.bf16.msra.mxu0 %v831
      %869 = vmatprep.subr.bf16.mxu0 0
      %870 = vmatpush1.bf16.msra.mxu0 %v832
      %871 = vmatprep.subr.bf16.mxu0 0
      %872 = vmatpush1.bf16.msra.mxu0 %v833
      %873 = vmatprep.subr.bf16.mxu0 0
      %874 = vmatpush1.bf16.msra.mxu0 0
      %875 = vmatprep.subr.bf16.mxu0 0
      %876 = vmatpush1.bf16.msra.mxu0 0
      %877 = vmatprep.subr.bf16.mxu0 0
      %878 = vmatpush1.bf16.msra.mxu0 0
      %879 = vmatprep.subr.bf16.mxu0 0
      %880 = vmatpush1.bf16.msra.mxu0 0
      %881 = vmatprep.mubr.bf16.mxu0 %v847
      %882 = vmatmul.mubr.bf16.gmra.mrb[0].mxu0 %v538
      %v883 = vpop.f32.mrb[0].mxu0
      %v884 = vadd.f32 %v712, %v883
      %v885 = vpop.f32.mrb[0].mxu0
      %v886 = vpop.f32.mrb[0].mxu0
      %v887 = vadd.f32 %v715, %v886
      %v888 = vpop.f32.mrb[0].mxu0
      %889 = vmatprep.mubr.bf16.mxu0 %v654
      %890 = vmatmul.mubr.bf16.gmra.mrb[0].mxu0 %v540
      %v891 = vpop.f32.mrb[0].mxu0
      %v892 = vadd.f32 %v720, %v891
      %v893 = vpop.f32.mrb[0].mxu0
      %v894 = vpop.f32.mrb[0].mxu0
      %v895 = vadd.f32 %v723, %v894
      %v896 = vpop.f32.mrb[0].mxu0
      %897 = vmatprep.mubr.bf16.mxu0 %v657
      %898 = vmatmul.mubr.bf16.gmra.mrb[0].mxu0 %v542
      %v899 = vpop.f32.mrb[0].mxu0
      %v900 = vadd.f32 %v728, %v899
      %v901 = vpop.f32.mrb[0].mxu0
      %v902 = vpop.f32.mrb[0].mxu0
      %v903 = vadd.f32 %v731, %v902
      %v904 = vpop.f32.mrb[0].mxu0
      %905 = vmatprep.mubr.bf16.mxu0 %v660
      %906 = vmatmul.mubr.bf16.gmra.mrb[0].mxu0 %v544
      %v907 = vpop.f32.mrb[0].mxu0
      %v908 = vadd.f32 %v736, %v907
      %v909 = vpop.f32.mrb[0].mxu0
      %v910 = vpop.f32.mrb[0].mxu0
      %v911 = vadd.f32 %v739, %v910
      %v912 = vpop.f32.mrb[0].mxu0
      %913 = vmatprep.mubr.bf16.mxu0 %v663
      %914 = vmatmul.mubr.bf16.gmra.mrb[0].mxu0 %v546
      %v915 = vpop.f32.mrb[0].mxu0
      %v916 = vadd.f32 %v744, %v915
      %v917 = vpop.f32.mrb[0].mxu0
      %v918 = vpop.f32.mrb[0].mxu0
      %v919 = vadd.f32 %v747, %v918
      %v920 = vpop.f32.mrb[0].mxu0
      %921 = vmatprep.mubr.bf16.mxu0 %v666
      %922 = vmatmul.mubr.bf16.gmra.mrb[0].mxu0 %v548
      %v923 = vpop.f32.mrb[0].mxu0
      %v924 = vadd.f32 %v752, %v923
      %v925 = vpop.f32.mrb[0].mxu0
      %v926 = vpop.f32.mrb[0].mxu0
      %v927 = vadd.f32 %v755, %v926
      %v928 = vpop.f32.mrb[0].mxu0
      %929 = vmatprep.mubr.bf16.mxu0 %v669
      %930 = vmatmul.mubr.bf16.gmra.mrb[0].mxu0 %v550
      %v931 = vpop.f32.mrb[0].mxu0
      %v932 = vadd.f32 %v760, %v931
      %v933 = vpop.f32.mrb[0].mxu0
      %v934 = vpop.f32.mrb[0].mxu0
      %v935 = vadd.f32 %v763, %v934
      %v936 = vpop.f32.mrb[0].mxu0
      %937 = vmatprep.mubr.bf16.mxu0 %v672
      %938 = vmatmul.mubr.bf16.gmra.mrb[0].mxu0 %v552
      %v939 = vpop.f32.mrb[0].mxu0
      %v940 = vadd.f32 %v768, %v939
      %v941 = vpop.f32.mrb[0].mxu0
      %v942 = vpop.f32.mrb[0].mxu0
      %v943 = vadd.f32 %v771, %v942
      %v944 = vpop.f32.mrb[0].mxu0
      %945 = vdwg.mxu0
      %v970 = vunpack.c.l.b16 %v466
      %v971 = vunpack.c.l.b16 %v467
      %v972 = vunpack.c.l.b16 %v468
      %v973 = vunpack.c.l.b16 %v469
      %v974 = vunpack.c.l.b16 %v470
      %v975 = vunpack.c.l.b16 %v471
      %v976 = vunpack.c.l.b16 %v472
      %v977 = vunpack.c.l.b16 %v473
      %v978 = vunpack.c.l.b16 %v474
      %v979 = vunpack.c.l.b16 %v475
      %v980 = vunpack.c.l.b16 %v476
      %v981 = vunpack.c.l.b16 %v477
      %v982 = vunpack.c.l.b16 %v478
      %v983 = vunpack.c.l.b16 %v479
      %v984 = vunpack.c.l.b16 %v480
      %v985 = vunpack.c.l.b16 %v481
      %v986 = vunpack.c.l.b16 %v482
      %v987 = vunpack.c.l.b16 %v483
      %v988 = vunpack.c.l.b16 %v484
      %v989 = vunpack.c.l.b16 %v485
      %v990 = vunpack.c.l.b16 %v486
      %v991 = vunpack.c.l.b16 %v487
      %v992 = vunpack.c.l.b16 %v488
      %v993 = vunpack.c.l.b16 %v489
      %v994 = vpack.c.b16 %v971, %v970
      %v995 = vpack.c.b16 %v973, %v972
      %v996 = vpack.c.b16 %v975, %v974
      %v997 = vpack.c.b16 %v977, %v976
      %v998 = vpack.c.b16 %v979, %v978
      %v999 = vpack.c.b16 %v981, %v980
      %v1000 = vpack.c.b16 %v983, %v982
      %v1001 = vpack.c.b16 %v985, %v984
      %v1002 = vpack.c.b16 %v987, %v986
      %v1003 = vpack.c.b16 %v989, %v988
      %v1004 = vpack.c.b16 %v991, %v990
      %v1005 = vpack.c.b16 %v993, %v992
      %v1019 = vsel %vm652, %v577, 0
      %1021 = vmatprep.subr.bf16.mxu0 0
      %1022 = vmatpush1.bf16.msra.mxu0 %v994
      %1023 = vmatprep.subr.bf16.mxu0 0
      %1024 = vmatpush1.bf16.msra.mxu0 %v995
      %1025 = vmatprep.subr.bf16.mxu0 0
      %1026 = vmatpush1.bf16.msra.mxu0 %v996
      %1027 = vmatprep.subr.bf16.mxu0 0
      %1028 = vmatpush1.bf16.msra.mxu0 %v997
      %1029 = vmatprep.subr.bf16.mxu0 0
      %1030 = vmatpush1.bf16.msra.mxu0 %v998
      %1031 = vmatprep.subr.bf16.mxu0 0
      %1032 = vmatpush1.bf16.msra.mxu0 %v999
      %1033 = vmatprep.subr.bf16.mxu0 0
      %1034 = vmatpush1.bf16.msra.mxu0 %v1000
      %1035 = vmatprep.subr.bf16.mxu0 0
      %1036 = vmatpush1.bf16.msra.mxu0 %v1001
      %1037 = vmatprep.subr.bf16.mxu0 0
      %1038 = vmatpush1.bf16.msra.mxu0 %v1002
      %1039 = vmatprep.subr.bf16.mxu0 0
      %1040 = vmatpush1.bf16.msra.mxu0 %v1003
      %1041 = vmatprep.subr.bf16.mxu0 0
      %1042 = vmatpush1.bf16.msra.mxu0 %v1004
      %1043 = vmatprep.subr.bf16.mxu0 0
      %1044 = vmatpush1.bf16.msra.mxu0 %v1005
      %1045 = vmatprep.subr.bf16.mxu0 0
      %1046 = vmatpush1.bf16.msra.mxu0 0
      %1047 = vmatprep.subr.bf16.mxu0 0
      %1048 = vmatpush1.bf16.msra.mxu0 0
      %1049 = vmatprep.subr.bf16.mxu0 0
      %1050 = vmatpush1.bf16.msra.mxu0 0
      %1051 = vmatprep.subr.bf16.mxu0 0
      %1052 = vmatpush1.bf16.msra.mxu0 0
      %1053 = vmatprep.mubr.bf16.mxu0 %v657
      %1054 = vmatmul.mubr.bf16.gmra.mrb[0].mxu0 %v542
      %v1055 = vpop.f32.mrb[0].mxu0
      %v1056 = vadd.f32 0.0, %v1055
      %v1057 = vpop.f32.mrb[0].mxu0
      %v1058 = vpop.f32.mrb[0].mxu0
      %v1059 = vadd.f32 0.0, %v1058
      %v1060 = vpop.f32.mrb[0].mxu0
      %1061 = vmatprep.mubr.bf16.mxu0 %v660
      %1062 = vmatmul.mubr.bf16.gmra.mrb[0].mxu0 %v544
      %v1063 = vpop.f32.mrb[0].mxu0
      %v1064 = vadd.f32 0.0, %v1063
      %v1065 = vpop.f32.mrb[0].mxu0
      %v1066 = vpop.f32.mrb[0].mxu0
      %v1067 = vadd.f32 0.0, %v1066
      %v1068 = vpop.f32.mrb[0].mxu0
      %1069 = vmatprep.mubr.bf16.mxu0 %v663
      %1070 = vmatmul.mubr.bf16.gmra.mrb[0].mxu0 %v546
      %v1071 = vpop.f32.mrb[0].mxu0
      %v1072 = vadd.f32 0.0, %v1071
      %v1073 = vpop.f32.mrb[0].mxu0
      %v1074 = vpop.f32.mrb[0].mxu0
      %v1075 = vadd.f32 0.0, %v1074
      %v1076 = vpop.f32.mrb[0].mxu0
      %1077 = vmatprep.mubr.bf16.mxu0 %v666
      %1078 = vmatmul.mubr.bf16.gmra.mrb[0].mxu0 %v548
      %v1079 = vpop.f32.mrb[0].mxu0
      %v1080 = vadd.f32 0.0, %v1079
      %v1081 = vpop.f32.mrb[0].mxu0
      %v1082 = vpop.f32.mrb[0].mxu0
      %v1083 = vadd.f32 0.0, %v1082
      %v1084 = vpop.f32.mrb[0].mxu0
      %1085 = vmatprep.mubr.bf16.mxu0 %v669
      %1086 = vmatmul.mubr.bf16.gmra.mrb[0].mxu0 %v550
      %v1087 = vpop.f32.mrb[0].mxu0
      %v1088 = vadd.f32 0.0, %v1087
      %v1089 = vpop.f32.mrb[0].mxu0
      %v1090 = vpop.f32.mrb[0].mxu0
      %v1091 = vadd.f32 0.0, %v1090
      %v1092 = vpop.f32.mrb[0].mxu0
      %1093 = vmatprep.mubr.bf16.mxu0 %v672
      %1094 = vmatmul.mubr.bf16.gmra.mrb[0].mxu0 %v552
      %v1095 = vpop.f32.mrb[0].mxu0
      %v1096 = vadd.f32 0.0, %v1095
      %v1097 = vpop.f32.mrb[0].mxu0
      %v1098 = vpop.f32.mrb[0].mxu0
      %v1099 = vadd.f32 0.0, %v1098
      %v1100 = vpop.f32.mrb[0].mxu0
      %1101 = vmatprep.mubr.bf16.mxu0 %v675
      %1102 = vmatmul.mubr.bf16.gmra.mrb[0].mxu0 %v574
      %v1103 = vpop.f32.mrb[0].mxu0
      %v1104 = vadd.f32 0.0, %v1103
      %v1105 = vpop.f32.mrb[0].mxu0
      %v1106 = vpop.f32.mrb[0].mxu0
      %v1107 = vadd.f32 0.0, %v1106
      %v1108 = vpop.f32.mrb[0].mxu0
      %1109 = vmatprep.mubr.bf16.mxu0 %v1019
      %1110 = vmatmul.mubr.bf16.gmra.mrb[0].mxu0 %v576
      %v1111 = vpop.f32.mrb[0].mxu0
      %v1112 = vadd.f32 0.0, %v1111
      %v1113 = vpop.f32.mrb[0].mxu0
      %v1114 = vpop.f32.mrb[0].mxu0
      %v1115 = vadd.f32 0.0, %v1114
      %v1116 = vpop.f32.mrb[0].mxu0
      %1117 = vdwg.mxu0
      %v1118 = vadd.f32 %v884, %v1056
      %v1119 = vadd.f32 %v887, %v1059
      %v1120 = vadd.f32 %v892, %v1064
      %v1121 = vadd.f32 %v895, %v1067
      %v1122 = vadd.f32 %v900, %v1072
      %v1123 = vadd.f32 %v903, %v1075
      %v1124 = vadd.f32 %v908, %v1080
      %v1125 = vadd.f32 %v911, %v1083
      %v1126 = vadd.f32 %v916, %v1088
      %v1127 = vadd.f32 %v919, %v1091
      %v1128 = vadd.f32 %v924, %v1096
      %v1129 = vadd.f32 %v927, %v1099
      %v1130 = vadd.f32 %v932, %v1104
      %v1131 = vadd.f32 %v935, %v1107
      %v1132 = vadd.f32 %v940, %v1112
      %v1133 = vadd.f32 %v943, %v1115
      %v1134 = vld [vmem:[%s382] sm:$0x1]
      %v1136 = vlaneseq
      %v1137 = vshrl.u32 %v1136, 7
      %v1138 = vsub.s32 0, %v1137
      %v1139 = vrot.slane %v1134, %v1138
      %v1141 = vadd.f32 %v1118, %v1139
      %v1142 = vadd.f32 %v1119, %v1139
      %v1143 = vadd.f32 %v1120, %v1139
      %v1144 = vadd.f32 %v1121, %v1139
      %v1145 = vadd.f32 %v1122, %v1139
      %v1146 = vadd.f32 %v1123, %v1139
      %v1147 = vadd.f32 %v1124, %v1139
      %v1148 = vadd.f32 %v1125, %v1139
      %v1149 = vadd.f32 %v1126, %v1139
      %v1150 = vadd.f32 %v1127, %v1139
      %v1151 = vadd.f32 %v1128, %v1139
      %v1152 = vadd.f32 %v1129, %v1139
      %v1153 = vadd.f32 %v1130, %v1139
      %v1154 = vadd.f32 %v1131, %v1139
      %v1155 = vadd.f32 %v1132, %v1139
      %v1156 = vadd.f32 %v1133, %v1139
      %v1157 = vmax.f32 %v1141, 0.0
      %v1158 = vmax.f32 %v1142, 0.0
      %v1159 = vmax.f32 %v1143, 0.0
      %v1160 = vmax.f32 %v1144, 0.0
      %v1161 = vmax.f32 %v1145, 0.0
      %v1162 = vmax.f32 %v1146, 0.0
      %v1163 = vmax.f32 %v1147, 0.0
      %v1164 = vmax.f32 %v1148, 0.0
      %v1165 = vmax.f32 %v1149, 0.0
      %v1166 = vmax.f32 %v1150, 0.0
      %v1167 = vmax.f32 %v1151, 0.0
      %v1168 = vmax.f32 %v1152, 0.0
      %v1169 = vmax.f32 %v1153, 0.0
      %v1170 = vmax.f32 %v1154, 0.0
      %v1171 = vmax.f32 %v1155, 0.0
      %v1172 = vmax.f32 %v1156, 0.0
      %v1173 = vpack.c.bf16 %v1158, %v1157
      %v1174 = vpack.c.bf16 %v1160, %v1159
      %v1175 = vpack.c.bf16 %v1162, %v1161
      %v1176 = vpack.c.bf16 %v1164, %v1163
      %v1177 = vpack.c.bf16 %v1166, %v1165
      %v1178 = vpack.c.bf16 %v1168, %v1167
      %v1179 = vpack.c.bf16 %v1170, %v1169
      %v1180 = vpack.c.bf16 %v1172, %v1171
      %v1189 = vunpack.c.l.b16 %v1173
      %v1190 = vunpack.c.h.b16 %v1173
      %v1191 = vunpack.c.l.b16 %v1174
      %v1192 = vunpack.c.h.b16 %v1174
      %v1193 = vunpack.c.l.b16 %v1175
      %v1194 = vunpack.c.h.b16 %v1175
      %v1195 = vunpack.c.l.b16 %v1176
      %v1196 = vunpack.c.h.b16 %v1176
      %v1197 = vunpack.c.l.b16 %v1177
      %v1198 = vunpack.c.h.b16 %v1177
      %v1199 = vunpack.c.l.b16 %v1178
      %v1200 = vunpack.c.h.b16 %v1178
      %v1201 = vunpack.c.l.b16 %v1179
      %v1202 = vunpack.c.h.b16 %v1179
      %v1203 = vunpack.c.l.b16 %v1180
      %v1204 = vunpack.c.h.b16 %v1180
      %v1205 = vpack.c.b16 %v1189, %v1189
      %v1206 = vpack.c.b16 %v1190, %v1190
      %v1207 = vpack.c.b16 %v1191, %v1191
      %v1208 = vpack.c.b16 %v1192, %v1192
      %v1209 = vpack.c.b16 %v1193, %v1193
      %v1210 = vpack.c.b16 %v1194, %v1194
      %v1211 = vpack.c.b16 %v1195, %v1195
      %v1212 = vpack.c.b16 %v1196, %v1196
      %v1213 = vpack.c.b16 %v1197, %v1197
      %v1214 = vpack.c.b16 %v1198, %v1198
      %v1215 = vpack.c.b16 %v1199, %v1199
      %v1216 = vpack.c.b16 %v1200, %v1200
      %v1217 = vpack.c.b16 %v1201, %v1201
      %v1218 = vpack.c.b16 %v1202, %v1202
      %v1219 = vpack.c.b16 %v1203, %v1203
      %v1220 = vpack.c.b16 %v1204, %v1204
      %vm1237 = vcmask 519168
      %1238 = vst.msk [vmem:[%s395] sm:$0xf] %vm1237, %v1205
      %1239 = vst.msk [vmem:[%s395 + $0x4] sm:$0xf] %vm1237, %v1206
      %1240 = vst.msk [vmem:[%s395 + $0x8] sm:$0xf] %vm1237, %v1207
      %1241 = vst.msk [vmem:[%s395 + $0xc] sm:$0xf] %vm1237, %v1208
      %1242 = vst.msk [vmem:[%s395 + $0x10] sm:$0xf] %vm1237, %v1209
      %1243 = vst.msk [vmem:[%s395 + $0x14] sm:$0xf] %vm1237, %v1210
      %1244 = vst.msk [vmem:[%s395 + $0x18] sm:$0xf] %vm1237, %v1211
      %1245 = vst.msk [vmem:[%s395 + $0x1c] sm:$0xf] %vm1237, %v1212
      %1246 = vst.msk [vmem:[%s395 + $0x20] sm:$0xf] %vm1237, %v1213
      %1247 = vst.msk [vmem:[%s395 + $0x24] sm:$0xf] %vm1237, %v1214
      %1248 = vst.msk [vmem:[%s395 + $0x28] sm:$0xf] %vm1237, %v1215
      %1249 = vst.msk [vmem:[%s395 + $0x2c] sm:$0xf] %vm1237, %v1216
      %1250 = vst.msk [vmem:[%s395 + $0x30] sm:$0xf] %vm1237, %v1217
      %1251 = vst.msk [vmem:[%s395 + $0x34] sm:$0xf] %vm1237, %v1218
      %1252 = vst.msk [vmem:[%s395 + $0x38] sm:$0xf] %vm1237, %v1219
      %1253 = vst.msk [vmem:[%s395 + $0x3c] sm:$0xf] %vm1237, %v1220
      %s1254 = smul.u32 16, %s22
      %p1255 = scmp.lt.s32.totalorder %s20, 0
      %s1256 = scalar_select %p1255, %s20, 0
      %p1257 = scmp.lt.s32.totalorder %s21, 1
      %s1258 = scalar_select %p1257, %s21, 1
      %p1259 = scmp.lt.s32.totalorder %s1254, 31
      %s1260 = scalar_select %p1259, %s1254, 31
      %s1261 = smul.addr %s1258, 32
      %s1262 = sadd.s32 %s1260, %s1261
      %s1263 = smul.addr %s1256, 64
      %s1264 = sadd.s32 %s1262, %s1263
      %s1265 = smul.addr %s1264, 4
      %s1266 = scalar_lea.vmem %s4, %s1265
      // Predicated region
      $region37: #{sea_forward.8} parent=35 // pred_check
        %p1267 = pneg %p172
      $region38: #{sea_forward.8} parent=35 // pred_check_branch
        %1269 = sbr.rel (%p1267) target = $region40
      $region39: #{sea_forward.8} parent=35 // pred_region
        %s1270 = smul.u32 16, %s22
      $region40: #{sea_forward.8} parent=35 // pred_fallthru
        _
    $region36: #{sea_forward.8} parent=5 // pred_fallthru
      _
    %p1271 = scmp.le.s32.totalorder 2, %s10
    // Predicated region
    $region41: #{sea_forward.8} parent=5 // pred_check
      %p1272 = pneg %p1271
    $region42: #{sea_forward.8} parent=5 // pred_check_branch
      %1274 = sbr.rel (%p1272) target = $region44
    $region43: #{sea_forward.8} parent=5 // pred_region
      %s1275 = ssub.s32 %s10, 2
      // Predicated region
      $region45: #{sea_forward.8} parent=43 // pred_check
        %p1276 = pneg %p178
      $region46: #{sea_forward.8} parent=43 // pred_check_branch
        %1278 = sbr.rel (%p1276) target = $region48
      $region47: #{sea_forward.8} parent=43 // pred_region
        %s1279 = smul.u32 16, %s25
        %p1280 = scmp.lt.s32.totalorder %s23, 0
        %s1281 = scalar_select %p1280, %s23, 0
        %p1282 = scmp.lt.s32.totalorder %s24, 1
        %s1283 = scalar_select %p1282, %s24, 1
        %p1284 = scmp.lt.s32.totalorder %s1279, 31
        %s1285 = scalar_select %p1284, %s1279, 31
        %s1286 = smul.addr %s1283, 32
        %s1287 = sadd.s32 %s1285, %s1286
        %s1288 = smul.addr %s1281, 64
        %s1289 = sadd.s32 %s1287, %s1288
        %s1290 = smul.addr %s1289, 4
        %s1291 = scalar_lea.vmem %s4, %s1290
      $region48: #{sea_forward.8} parent=43 // pred_fallthru
        _
    $region44: #{sea_forward.8} parent=5 // pred_fallthru
      _
  $region6: #{sea_forward.8} parent=0 // loop_footer
    %s14 = sadd.s32 1, %s10
  $region7: #{sea_forward.8} parent=0 // loop_footer_branch
    %9 = sbr.rel target = $region3
  $region8: #{sea_forward.8} parent=0 // loop_exit
    _

// kernel: sea_forward.9
$region0: #{sea_forward.9}
  #allocation0 [shape = 'u32[]', space=smem, size = 0x4, offset = 0x4, fixed_abs, tag = 'smem constant byte address 0x4 - core index']
  #allocation1 [shape = 'u32[144,128]{1,0:T(1,128)}', space=vmem, size = 0x12000, scoped, tag = 'internal scratch']
  #allocation2 [shape = 'f32[1,1]{1,0:T(1,128)S(1)}', space=vmem, size = 0x200, scoped, tag = 'scoped memory for sea_forward.9']
  %s0 = inlined_call_operand.vmem [shape: bf16[2,288,192], index: 0, kind: input, shape index: {}, may-alias: {0,1}]
  %s1 = inlined_call_operand.vmem [shape: bf16[2,288,192], index: 1, kind: input, shape index: {}, may-alias: {0,1}]
  %s2 = inlined_call_operand.vmem [shape: bf16[3,192,32], index: 2, kind: input, shape index: {}]
  %s3 = inlined_call_operand.vmem [shape: f32[1,1,32], index: 3, kind: input, shape index: {}]
  %s4 = inlined_call_operand.vmem [shape: f32[1,32], index: 4, kind: input, shape index: {}]
  %s5 = inlined_call_operand.<no memory space> [shape: f32[1,1], index: 5, kind: input, shape index: {}]
  %s6 = inlined_call_operand.vmem [shape: f32[2,256,1], index: 6, kind: output, shape index: {}]
  %s7 = sld [smem:[#allocation0]]
  $region57: #{sea_forward.9} parent=0
    _
  %s9 = ssub.s32 1, %s7
  %s10 = scalar_select 0, %s9, %s7
  %v11 = vstv %s5
  %12 = vst [vmem:[#allocation2] sm:$0x1] %v11
  loop: start=0, step=1, limit=6
  $region2: #{sea_forward.9} parent=0 // loop_pre_header
    _
  $region3: #{sea_forward.9} parent=0 // loop_header
    %s14 = sphi 0, %s18
    %p15 = scmp.ge.s32.totalorder %s14, 6
    %s21 = sphi 0, %s33
    %s22 = sphi 0, %s29
    %s23 = sphi 0, %s21
    %s24 = sphi 0, %s22
    %s25 = sphi 0, %s23
    %s26 = sphi 0, %s24
    %s38 = sphi 0, %s40
    %s41 = sphi 0, %s38
    %s42 = sphi 0, %s41
    %s58 = sphi 0, %s42
    %s70 = sphi 0, %s72
    %s73 = sphi 0, %s70
    %s74 = sphi 0, %s73
    %s90 = sphi 0, %s74
    %s94 = sphi 0, %s94
    %s96 = sphi 0, %s94
    %s97 = sphi 0, %s96
    %s111 = sphi 0, %s97
    %s115 = sphi 0, %s115
    %s117 = sphi 0, %s115
    %s118 = sphi 0, %s117
    %s132 = sphi 0, %s118
    %s136 = sphi 0, %s136
    %s138 = sphi 0, %s136
    %s139 = sphi 0, %s138
    %s153 = sphi 0, %s139
    %s157 = sphi 0, %s157
    %s159 = sphi 0, %s157
    %s160 = sphi 0, %s159
    %s174 = sphi 0, %s160
    %s182 = sphi 0, %s184
    %s185 = sphi 0, %s182
    %s186 = sphi 0, %s185
    %s202 = sphi 0, %s186
  $region4: #{sea_forward.9} parent=0 // loop_header_branch
    %17 = sbr.rel (%p15) target = $region8
  $region5: #{sea_forward.9} parent=0 // loop_body
    %s19 = ssub.s32 %s14, 1
    %s20 = ssub.s32 %s14, 2
    %s27 = sadd.s32 1, %s22
    %p28 = scmp.ge.s32.totalorder %s27, 2
    %s29 = scalar_select %p28, 0, %s27
    %s30 = sadd.s32 1, %s21
    %s31 = scalar_select %p28, %s30, %s21
    %p32 = scmp.ge.s32.totalorder %s31, 2
    %s33 = scalar_select %p32, 0, %s31
    %s34 = ssub.s32 %s21, %s33
    %s35 = ssub.s32 %s22, %s29
    %s36 = sor.u32 %s34, %s35
    %p37 = scmp.eq.s32.totalorder %s36, 0
    %s39 = sadd.s32 %s38, 1
    %s40 = scalar_select %p37, %s38, %s39
    %p43 = pneg %p37
    %p44 = scmp.eq.s32.totalorder %s14, 3
    %p45 = por %p43, %p44
    %p46 = scmp.ne.s32.totalorder %s38, %s41
    %p47 = scmp.eq.s32.totalorder %s14, 0
    %p48 = por %p46, %p47
    %p49 = scmp.ne.s32.totalorder %s38, %s41
    %p50 = scmp.eq.s32.totalorder %s19, 3
    %p51 = por %p49, %p50
    %p52 = scmp.ne.s32.totalorder %s41, %s42
    %p53 = scmp.eq.s32.totalorder %s19, 0
    %p54 = por %p52, %p53
    %p55 = scmp.ne.s32.totalorder %s41, %s42
    %p56 = scmp.eq.s32.totalorder %s20, 3
    %p57 = por %p55, %p56
    %p59 = scmp.ne.s32.totalorder %s42, %s58
    %p60 = scmp.eq.s32.totalorder %s20, 0
    %p61 = por %p59, %p60
    %s62 = sadd.s32 %s22, 1
    %s63 = smul.u32 %s62, 4
    %s64 = sadd.s32 %s29, 1
    %s65 = smul.u32 %s64, 4
    %s66 = ssub.s32 %s21, %s33
    %s67 = ssub.s32 %s63, %s65
    %s68 = sor.u32 %s66, %s67
    %p69 = scmp.eq.s32.totalorder %s68, 0
    %s71 = sadd.s32 %s70, 1
    %s72 = scalar_select %p69, %s70, %s71
    %p75 = pneg %p69
    %p76 = scmp.eq.s32.totalorder %s14, 3
    %p77 = por %p75, %p76
    %p78 = scmp.ne.s32.totalorder %s70, %s73
    %p79 = scmp.eq.s32.totalorder %s14, 0
    %p80 = por %p78, %p79
    %p81 = scmp.ne.s32.totalorder %s70, %s73
    %p82 = scmp.eq.s32.totalorder %s19, 3
    %p83 = por %p81, %p82
    %p84 = scmp.ne.s32.totalorder %s73, %s74
    %p85 = scmp.eq.s32.totalorder %s19, 0
    %p86 = por %p84, %p85
    %p87 = scmp.ne.s32.totalorder %s73, %s74
    %p88 = scmp.eq.s32.totalorder %s20, 3
    %p89 = por %p87, %p88
    %p91 = scmp.ne.s32.totalorder %s74, %s90
    %p92 = scmp.eq.s32.totalorder %s20, 0
    %p93 = por %p91, %p92
    %s95 = sadd.s32 %s94, 1
    %p98 = scmp.eq.s32.totalorder %s14, 3
    %p99 = scmp.ne.s32.totalorder %s94, %s96
    %p100 = scmp.eq.s32.totalorder %s14, 0
    %p101 = por %p99, %p100
    %p102 = scmp.ne.s32.totalorder %s94, %s96
    %p103 = scmp.eq.s32.totalorder %s19, 3
    %p104 = por %p102, %p103
    %p105 = scmp.ne.s32.totalorder %s96, %s97
    %p106 = scmp.eq.s32.totalorder %s19, 0
    %p107 = por %p105, %p106
    %p108 = scmp.ne.s32.totalorder %s96, %s97
    %p109 = scmp.eq.s32.totalorder %s20, 3
    %p110 = por %p108, %p109
    %p112 = scmp.ne.s32.totalorder %s97, %s111
    %p113 = scmp.eq.s32.totalorder %s20, 0
    %p114 = por %p112, %p113
    %s116 = sadd.s32 %s115, 1
    %p119 = scmp.eq.s32.totalorder %s14, 3
    %p120 = scmp.ne.s32.totalorder %s115, %s117
    %p121 = scmp.eq.s32.totalorder %s14, 0
    %p122 = por %p120, %p121
    %p123 = scmp.ne.s32.totalorder %s115, %s117
    %p124 = scmp.eq.s32.totalorder %s19, 3
    %p125 = por %p123, %p124
    %p126 = scmp.ne.s32.totalorder %s117, %s118
    %p127 = scmp.eq.s32.totalorder %s19, 0
    %p128 = por %p126, %p127
    %p129 = scmp.ne.s32.totalorder %s117, %s118
    %p130 = scmp.eq.s32.totalorder %s20, 3
    %p131 = por %p129, %p130
    %p133 = scmp.ne.s32.totalorder %s118, %s132
    %p134 = scmp.eq.s32.totalorder %s20, 0
    %p135 = por %p133, %p134
    %s137 = sadd.s32 %s136, 1
    %p140 = scmp.eq.s32.totalorder %s14, 3
    %p141 = scmp.ne.s32.totalorder %s136, %s138
    %p142 = scmp.eq.s32.totalorder %s14, 0
    %p143 = por %p141, %p142
    %p144 = scmp.ne.s32.totalorder %s136, %s138
    %p145 = scmp.eq.s32.totalorder %s19, 3
    %p146 = por %p144, %p145
    %p147 = scmp.ne.s32.totalorder %s138, %s139
    %p148 = scmp.eq.s32.totalorder %s19, 0
    %p149 = por %p147, %p148
    %p150 = scmp.ne.s32.totalorder %s138, %s139
    %p151 = scmp.eq.s32.totalorder %s20, 3
    %p152 = por %p150, %p151
    %p154 = scmp.ne.s32.totalorder %s139, %s153
    %p155 = scmp.eq.s32.totalorder %s20, 0
    %p156 = por %p154, %p155
    %s158 = sadd.s32 %s157, 1
    %p161 = scmp.eq.s32.totalorder %s14, 3
    %p162 = scmp.ne.s32.totalorder %s157, %s159
    %p163 = scmp.eq.s32.totalorder %s14, 0
    %p164 = por %p162, %p163
    %p165 = scmp.ne.s32.totalorder %s157, %s159
    %p166 = scmp.eq.s32.totalorder %s19, 3
    %p167 = por %p165, %p166
    %p168 = scmp.ne.s32.totalorder %s159, %s160
    %p169 = scmp.eq.s32.totalorder %s19, 0
    %p170 = por %p168, %p169
    %p171 = scmp.ne.s32.totalorder %s159, %s160
    %p172 = scmp.eq.s32.totalorder %s20, 3
    %p173 = por %p171, %p172
    %p175 = scmp.ne.s32.totalorder %s160, %s174
    %p176 = scmp.eq.s32.totalorder %s20, 0
    %p177 = por %p175, %p176
    %s178 = ssub.s32 %s21, %s33
    %s179 = ssub.s32 %s22, %s29
    %s180 = sor.u32 %s178, %s179
    %p181 = scmp.eq.s32.totalorder %s180, 0
    %s183 = sadd.s32 %s182, 1
    %s184 = scalar_select %p181, %s182, %s183
    %p187 = pneg %p181
    %p188 = scmp.eq.s32.totalorder %s14, 3
    %p189 = por %p187, %p188
    %p190 = scmp.ne.s32.totalorder %s182, %s185
    %p191 = scmp.eq.s32.totalorder %s14, 0
    %p192 = por %p190, %p191
    %p193 = scmp.ne.s32.totalorder %s182, %s185
    %p194 = scmp.eq.s32.totalorder %s19, 3
    %p195 = por %p193, %p194
    %p196 = scmp.ne.s32.totalorder %s185, %s186
    %p197 = scmp.eq.s32.totalorder %s19, 0
    %p198 = por %p196, %p197
    %p199 = scmp.ne.s32.totalorder %s185, %s186
    %p200 = scmp.eq.s32.totalorder %s20, 3
    %p201 = por %p199, %p200
    %p203 = scmp.ne.s32.totalorder %s186, %s202
    %p204 = scmp.eq.s32.totalorder %s20, 0
    %p205 = por %p203, %p204
    %p206 = scmp.le.s32.totalorder 1, %s14
    %p207 = scmp.lt.s32.totalorder %s14, 5
    %p208 = pnand %p206, %p207
    %p209 = pneg %p208
    // Predicated region
    $region9: #{sea_forward.9} parent=5 // pred_check
      _
    $region10: #{sea_forward.9} parent=5 // pred_check_branch
      %211 = sbr.rel (%p208) target = $region12
    $region11: #{sea_forward.9} parent=5 // pred_region
      %s212 = ssub.s32 %s14, 1
      // Predicated region
      $region13: #{sea_forward.9} parent=11 // pred_check
        %p213 = pneg %p107
      $region14: #{sea_forward.9} parent=11 // pred_check_branch
        %215 = sbr.rel (%p213) target = $region16
      $region15: #{sea_forward.9} parent=11 // pred_region
        _
      $region16: #{sea_forward.9} parent=11 // pred_fallthru
        _
      // Predicated region
      $region17: #{sea_forward.9} parent=11 // pred_check
        %p216 = pneg %p128
      $region18: #{sea_forward.9} parent=11 // pred_check_branch
        %218 = sbr.rel (%p216) target = $region20
      $region19: #{sea_forward.9} parent=11 // pred_region
        _
      $region20: #{sea_forward.9} parent=11 // pred_fallthru
        _
      // Predicated region
      $region21: #{sea_forward.9} parent=11 // pred_check
        %p219 = pneg %p149
      $region22: #{sea_forward.9} parent=11 // pred_check_branch
        %221 = sbr.rel (%p219) target = $region24
      $region23: #{sea_forward.9} parent=11 // pred_region
        _
      $region24: #{sea_forward.9} parent=11 // pred_fallthru
        _
      // Predicated region
      $region25: #{sea_forward.9} parent=11 // pred_check
        %p222 = pneg %p170
      $region26: #{sea_forward.9} parent=11 // pred_check_branch
        %224 = sbr.rel (%p222) target = $region28
      $region27: #{sea_forward.9} parent=11 // pred_region
        _
      $region28: #{sea_forward.9} parent=11 // pred_fallthru
        _
    $region12: #{sea_forward.9} parent=5 // pred_fallthru
      _
    %p225 = scmp.lt.s32.totalorder %s14, 4
    // Predicated region
    $region29: #{sea_forward.9} parent=5 // pred_check
      %p226 = pneg %p225
    $region30: #{sea_forward.9} parent=5 // pred_check_branch
      %228 = sbr.rel (%p226) target = $region32
    $region31: #{sea_forward.9} parent=5 // pred_region
      // Predicated region
      $region33: #{sea_forward.9} parent=31 // pred_check
        %p229 = pneg %p48
      $region34: #{sea_forward.9} parent=31 // pred_check_branch
        %231 = sbr.rel (%p229) target = $region36
      $region35: #{sea_forward.9} parent=31 // pred_region
        %s232 = smul.u32 16, %s22
        %s233 = ssub.s32 36, %s232
        %p234 = scmp.lt.s32.totalorder %s233, 16
        %s235 = scalar_select %p234, %s233, 16
        %s236 = smul.u32 64, %s235
        %s237 = smul.u32 %s236, 2
        %p238 = scmp.lt.s32.totalorder %s21, 1
        %s239 = scalar_select %p238, %s21, 1
        %p240 = scmp.lt.s32.totalorder %s232, 35
        %s241 = scalar_select %p240, %s232, 35
        %s242 = smul.addr %s241, 2
        %s243 = smul.addr %s239, 72
        %s244 = sadd.s32 %s242, %s243
        %s245 = smul.addr %s244, 4
        %s246 = scalar_lea.vmem %s0, %s245
        %s247 = smul.u32 16, %s22
        %s248 = ssub.s32 36, %s247
        %p249 = scmp.lt.s32.totalorder %s248, 16
        %s250 = scalar_select %p249, %s248, 16
        %s251 = smul.u32 64, %s250
        %s252 = smul.u32 %s251, 2
      $region36: #{sea_forward.9} parent=31 // pred_fallthru
        _
      // Predicated region
      $region37: #{sea_forward.9} parent=31 // pred_check
        %p253 = pneg %p80
      $region38: #{sea_forward.9} parent=31 // pred_check_branch
        %255 = sbr.rel (%p253) target = $region40
      $region39: #{sea_forward.9} parent=31 // pred_region
        %s256 = sadd.s32 %s22, 1
        %s257 = smul.u32 %s256, 4
        %s258 = smul.u32 4, %s257
        %p259 = scmp.lt.s32.totalorder %s21, 1
        %s260 = scalar_select %p259, %s21, 1
        %p261 = scmp.lt.s32.totalorder %s258, 35
        %s262 = scalar_select %p261, %s258, 35
        %s263 = smul.addr %s262, 2
        %s264 = smul.addr %s260, 72
        %s265 = sadd.s32 %s263, %s264
        %s266 = smul.addr %s265, 4
        %s267 = scalar_lea.vmem %s1, %s266
        %s268 = sadd.s32 %s22, 1
        %s269 = smul.u32 %s268, 4
        %s270 = smul.u32 4, %s269
      $region40: #{sea_forward.9} parent=31 // pred_fallthru
        _
    $region32: #{sea_forward.9} parent=5 // pred_fallthru
      _
    %p271 = scmp.le.s32.totalorder 1, %s14
    %p272 = scmp.lt.s32.totalorder %s14, 5
    %p273 = pnand %p271, %p272
    %p274 = pneg %p273
    // Predicated region
    $region41: #{sea_forward.9} parent=5 // pred_check
      _
    $region42: #{sea_forward.9} parent=5 // pred_check_branch
      %276 = sbr.rel (%p273) target = $region44
    $region43: #{sea_forward.9} parent=5 // pred_region
      %s277 = ssub.s32 %s14, 1
      %s278 = smul.u32 16, %s24
      %s279 = ssub.s32 36, %s278
      %p280 = scmp.lt.s32.totalorder %s279, 16
      %s281 = scalar_select %p280, %s279, 16
      %s282 = smul.u32 64, %s281
      %s283 = smul.u32 %s282, 2
      %p284 = scmp.lt.s32.totalorder %s23, 1
      %s285 = scalar_select %p284, %s23, 1
      %p286 = scmp.lt.s32.totalorder %s278, 35
      %s287 = scalar_select %p286, %s278, 35
      %s288 = smul.addr %s287, 2
      %s289 = smul.addr %s285, 72
      %s290 = sadd.s32 %s288, %s289
      %s291 = smul.addr %s290, 4
      %s292 = scalar_lea.vmem %s0, %s291
      %p293 = pneg %p54
      %p294 = pneg %p51
      %s295 = sadd.s32 %s24, 1
      %s296 = smul.u32 %s295, 4
      %s297 = smul.u32 4, %s296
      %p298 = scmp.lt.s32.totalorder %s23, 1
      %s299 = scalar_select %p298, %s23, 1
      %p300 = scmp.lt.s32.totalorder %s297, 35
      %s301 = scalar_select %p300, %s297, 35
      %s302 = smul.addr %s301, 2
      %s303 = smul.addr %s299, 72
      %s304 = sadd.s32 %s302, %s303
      %s305 = smul.addr %s304, 4
      %s306 = scalar_lea.vmem %s1, %s305
      %p307 = pneg %p86
      %p308 = pneg %p83
      %p309 = pneg %p107
      %p310 = pneg %p104
      %p311 = pneg %p128
      %p312 = pneg %p125
      %p313 = pneg %p149
      %p314 = pneg %p146
      %p315 = pneg %p170
      %p316 = pneg %p167
      %p317 = pneg %p198
      %p318 = pneg %p195
      %s319 = smul.u32 16, %s24
      %p320 = scmp.lt.s32.totalorder %s23, 1
      %s321 = scalar_select %p320, %s23, 1
      %p322 = scmp.lt.s32.totalorder %s319, 31
      %s323 = scalar_select %p322, %s319, 31
      %s324 = smul.addr %s321, 32
      %s325 = sadd.s32 %s323, %s324
      %s326 = smul.addr %s325, 8
      %s327 = scalar_lea.vmem %s6, %s326
      %s328 = smul.u32 16, %s24
      %s329 = ssub.s32 36, %s328
      %p330 = scmp.lt.s32.totalorder %s329, 16
      %s331 = scalar_select %p330, %s329, 16
      %s332 = smul.u32 64, %s331
      %s333 = smul.u32 %s332, 2
      %p334 = scmp.lt.s32.totalorder %s23, 1
      %s335 = scalar_select %p334, %s23, 1
      %p336 = scmp.lt.s32.totalorder %s328, 35
      %s337 = scalar_select %p336, %s328, 35
      %s338 = smul.addr %s337, 2
      %s339 = smul.addr %s335, 72
      %s340 = sadd.s32 %s338, %s339
      %s341 = smul.addr %s340, 4
      %s342 = scalar_lea.vmem %s0, %s341
      %s343 = smul.u32 16, %s24
      %s344 = ssub.s32 36, %s343
      %p345 = scmp.lt.s32.totalorder %s344, 16
      %s346 = scalar_select %p345, %s344, 16
      %s347 = smul.u32 64, %s346
      %s348 = smul.u32 %s347, 2
      %s349 = sadd.s32 %s24, 1
      %s350 = smul.u32 %s349, 4
      %s351 = smul.u32 4, %s350
      %p352 = scmp.lt.s32.totalorder %s23, 1
      %s353 = scalar_select %p352, %s23, 1
      %p354 = scmp.lt.s32.totalorder %s351, 35
      %s355 = scalar_select %p354, %s351, 35
      %s356 = smul.addr %s355, 2
      %s357 = smul.addr %s353, 72
      %s358 = sadd.s32 %s356, %s357
      %s359 = smul.addr %s358, 4
      %s360 = scalar_lea.vmem %s1, %s359
      %s361 = sadd.s32 %s24, 1
      %s362 = smul.u32 %s361, 4
      %s363 = smul.u32 4, %s362
      %s364 = smul.u32 16, %s24
      %p365 = scmp.lt.s32.totalorder %s23, 1
      %s366 = scalar_select %p365, %s23, 1
      %p367 = scmp.lt.s32.totalorder %s364, 31
      %s368 = scalar_select %p367, %s364, 31
      %s369 = smul.addr %s366, 32
      %s370 = sadd.s32 %s368, %s369
      %s371 = smul.addr %s370, 8
      %s372 = scalar_lea.vmem %s6, %s371
      %s373 = smul.u32 16, %s24
      %v375 = vld [vmem:[%s342] sm:$0xff]
      %v376 = vld [vmem:[%s342 + $0x8] sm:$0xff]
      %v377 = vld [vmem:[%s342 + $0x10] sm:$0xff]
      %v378 = vld [vmem:[%s342 + $0x18] sm:$0xff]
      %v379 = vld [vmem:[%s342 + $0x20] sm:$0xff]
      %v380 = vld [vmem:[%s342 + $0x28] sm:$0xff]
      %v381 = vld [vmem:[%s342 + $0x30] sm:$0xff]
      %v382 = vld [vmem:[%s342 + $0x38] sm:$0xff]
      %v383 = vld [vmem:[%s342 + $0x40] sm:$0xff]
      %v384 = vld [vmem:[%s342 + $0x48] sm:$0xff]
      %v385 = vld [vmem:[%s342 + $0x50] sm:$0xff]
      %v386 = vld [vmem:[%s342 + $0x58] sm:$0xff]
      %v387 = vld [vmem:[%s342 + $0x60] sm:$0xff]
      %v388 = vld [vmem:[%s342 + $0x68] sm:$0xff]
      %v389 = vld [vmem:[%s342 + $0x70] sm:$0xff]
      %v390 = vld [vmem:[%s342 + $0x78] sm:$0xff]
      %v391 = vld [vmem:[%s360] sm:$0xff]
      %v392 = vld [vmem:[%s360 + $0x8] sm:$0xff]
      %v393 = vld [vmem:[%s360 + $0x10] sm:$0xff]
      %v394 = vld [vmem:[%s360 + $0x18] sm:$0xff]
      %v411 = vunpack.c.l.b16 %v375
      %v412 = vunpack.c.h.b16 %v375
      %v413 = vunpack.c.l.b16 %v376
      %v414 = vunpack.c.h.b16 %v376
      %v415 = vunpack.c.l.b16 %v377
      %v416 = vunpack.c.h.b16 %v377
      %v417 = vunpack.c.l.b16 %v378
      %v418 = vunpack.c.h.b16 %v378
      %v419 = vunpack.c.l.b16 %v379
      %v420 = vunpack.c.h.b16 %v379
      %v421 = vunpack.c.l.b16 %v380
      %v422 = vunpack.c.h.b16 %v380
      %v423 = vunpack.c.l.b16 %v381
      %v424 = vunpack.c.h.b16 %v381
      %v425 = vunpack.c.l.b16 %v382
      %v426 = vunpack.c.h.b16 %v382
      %v427 = vunpack.c.l.b16 %v383
      %v428 = vunpack.c.h.b16 %v383
      %v429 = vunpack.c.l.b16 %v384
      %v430 = vunpack.c.h.b16 %v384
      %v431 = vunpack.c.l.b16 %v385
      %v432 = vunpack.c.h.b16 %v385
      %v433 = vunpack.c.l.b16 %v386
      %v434 = vunpack.c.h.b16 %v386
      %v435 = vunpack.c.l.b16 %v387
      %v436 = vunpack.c.h.b16 %v387
      %v437 = vunpack.c.l.b16 %v388
      %v438 = vunpack.c.h.b16 %v388
      %v439 = vunpack.c.l.b16 %v389
      %v440 = vunpack.c.h.b16 %v389
      %v441 = vunpack.c.l.b16 %v390
      %v442 = vunpack.c.h.b16 %v390
      %v443 = vpack.c.b16 %v413, %v411
      %v444 = vpack.c.b16 %v414, %v412
      %v445 = vpack.c.b16 %v417, %v415
      %v446 = vpack.c.b16 %v418, %v416
      %v447 = vpack.c.b16 %v421, %v419
      %v448 = vpack.c.b16 %v422, %v420
      %v449 = vpack.c.b16 %v425, %v423
      %v450 = vpack.c.b16 %v426, %v424
      %v451 = vpack.c.b16 %v429, %v427
      %v452 = vpack.c.b16 %v430, %v428
      %v453 = vpack.c.b16 %v433, %v431
      %v454 = vpack.c.b16 %v434, %v432
      %v455 = vpack.c.b16 %v437, %v435
      %v456 = vpack.c.b16 %v438, %v436
      %v457 = vpack.c.b16 %v441, %v439
      %v458 = vpack.c.b16 %v442, %v440
      %v471 = vunpack.c.l.b16 %v391
      %v472 = vunpack.c.h.b16 %v391
      %v473 = vunpack.c.l.b16 %v392
      %v474 = vunpack.c.h.b16 %v392
      %v475 = vunpack.c.l.b16 %v393
      %v476 = vunpack.c.h.b16 %v393
      %v477 = vunpack.c.l.b16 %v394
      %v478 = vunpack.c.h.b16 %v394
      %v479 = vpack.c.b16 %v473, %v471
      %v480 = vpack.c.b16 %v474, %v472
      %v481 = vpack.c.b16 %v477, %v475
      %v482 = vpack.c.b16 %v478, %v476
      %v485 = vld [vmem:[%s2] sm:$0xf]
      %v486 = vld [vmem:[%s2 + $0x4] sm:$0xf]
      %v487 = vld [vmem:[%s2 + $0x8] sm:$0xf]
      %v488 = vld [vmem:[%s2 + $0xc] sm:$0xf]
      %v489 = vld [vmem:[%s2 + $0x10] sm:$0xf]
      %v490 = vld [vmem:[%s2 + $0x14] sm:$0xf]
      %v491 = vld [vmem:[%s2 + $0x18] sm:$0xf]
      %v492 = vld [vmem:[%s2 + $0x1c] sm:$0xf]
      %v493 = vld [vmem:[%s2 + $0x20] sm:$0xf]
      %v494 = vld [vmem:[%s2 + $0x24] sm:$0xf]
      %v495 = vld [vmem:[%s2 + $0x28] sm:$0xf]
      %v496 = vld [vmem:[%s2 + $0x2c] sm:$0xf]
      %v497 = vld [vmem:[%s2 + $0x30] sm:$0xf]
      %v498 = vld [vmem:[%s2 + $0x34] sm:$0xf]
      %v499 = vld [vmem:[%s2 + $0x38] sm:$0xf]
      %v500 = vld [vmem:[%s2 + $0x3c] sm:$0xf]
      %v501 = vld [vmem:[%s2 + $0x40] sm:$0xf]
      %v502 = vld [vmem:[%s2 + $0x44] sm:$0xf]
      %v503 = vld [vmem:[%s2 + $0x48] sm:$0xf]
      %v504 = vld [vmem:[%s2 + $0x4c] sm:$0xf]
      %v505 = vld [vmem:[%s2 + $0x50] sm:$0xf]
      %v506 = vld [vmem:[%s2 + $0x54] sm:$0xf]
      %v507 = vld [vmem:[%s2 + $0x58] sm:$0xf]
      %v508 = vld [vmem:[%s2 + $0x5c] sm:$0xf]
      %s509 = scalar_lea.vmem %s2, 96
      %v510 = vld [vmem:[%s509] sm:$0xf]
      %v511 = vld [vmem:[%s509 + $0x4] sm:$0xf]
      %v512 = vld [vmem:[%s509 + $0x8] sm:$0xf]
      %v513 = vld [vmem:[%s509 + $0xc] sm:$0xf]
      %v514 = vld [vmem:[%s509 + $0x10] sm:$0xf]
      %v515 = vld [vmem:[%s509 + $0x14] sm:$0xf]
      %v516 = vld [vmem:[%s509 + $0x18] sm:$0xf]
      %v517 = vld [vmem:[%s509 + $0x1c] sm:$0xf]
      %v518 = vld [vmem:[%s509 + $0x20] sm:$0xf]
      %v519 = vld [vmem:[%s509 + $0x24] sm:$0xf]
      %v520 = vld [vmem:[%s509 + $0x28] sm:$0xf]
      %v521 = vld [vmem:[%s509 + $0x2c] sm:$0xf]
      %v522 = vld [vmem:[%s509 + $0x30] sm:$0xf]
      %v523 = vld [vmem:[%s509 + $0x34] sm:$0xf]
      %v524 = vld [vmem:[%s509 + $0x38] sm:$0xf]
      %v525 = vld [vmem:[%s509 + $0x3c] sm:$0xf]
      %v526 = vld [vmem:[%s509 + $0x40] sm:$0xf]
      %v527 = vld [vmem:[%s509 + $0x44] sm:$0xf]
      %v528 = vld [vmem:[%s509 + $0x48] sm:$0xf]
      %v529 = vld [vmem:[%s509 + $0x4c] sm:$0xf]
      %v530 = vld [vmem:[%s509 + $0x50] sm:$0xf]
      %v531 = vld [vmem:[%s509 + $0x54] sm:$0xf]
      %v532 = vld [vmem:[%s509 + $0x58] sm:$0xf]
      %v533 = vld [vmem:[%s509 + $0x5c] sm:$0xf]
      %v558 = vunpack.c.l.b16 %v510
      %v559 = vunpack.c.l.b16 %v511
      %v560 = vunpack.c.l.b16 %v512
      %v561 = vunpack.c.l.b16 %v513
      %v562 = vunpack.c.l.b16 %v514
      %v563 = vunpack.c.l.b16 %v515
      %v564 = vunpack.c.l.b16 %v516
      %v565 = vunpack.c.l.b16 %v517
      %v566 = vunpack.c.l.b16 %v518
      %v567 = vunpack.c.l.b16 %v519
      %v568 = vunpack.c.l.b16 %v520
      %v569 = vunpack.c.l.b16 %v521
      %v570 = vunpack.c.l.b16 %v522
      %v571 = vunpack.c.l.b16 %v523
      %v572 = vunpack.c.l.b16 %v524
      %v573 = vunpack.c.l.b16 %v525
      %v574 = vunpack.c.l.b16 %v526
      %v575 = vunpack.c.l.b16 %v527
      %v576 = vunpack.c.l.b16 %v528
      %v577 = vunpack.c.l.b16 %v529
      %v578 = vunpack.c.l.b16 %v530
      %v579 = vunpack.c.l.b16 %v531
      %v580 = vunpack.c.l.b16 %v532
      %v581 = vunpack.c.l.b16 %v533
      %v582 = vpack.c.b16 %v559, %v558
      %v583 = vpack.c.b16 %v561, %v560
      %v584 = vpack.c.b16 %v563, %v562
      %v585 = vpack.c.b16 %v565, %v564
      %v586 = vpack.c.b16 %v567, %v566
      %v587 = vpack.c.b16 %v569, %v568
      %v588 = vpack.c.b16 %v571, %v570
      %v589 = vpack.c.b16 %v573, %v572
      %v590 = vpack.c.b16 %v575, %v574
      %v591 = vpack.c.b16 %v577, %v576
      %v592 = vpack.c.b16 %v579, %v578
      %v593 = vpack.c.b16 %v581, %v580
      %vm606 = vcmask 523264
      %v608 = vsel %vm606, %v446, 0
      %v611 = vsel %vm606, %v448, 0
      %v614 = vsel %vm606, %v450, 0
      %v617 = vsel %vm606, %v452, 0
      %v620 = vsel %vm606, %v454, 0
      %v623 = vsel %vm606, %v456, 0
      %v626 = vsel %vm606, %v458, 0
      %v629 = vsel %vm606, %v480, 0
      %631 = vmatprep.subr.bf16.mxu0 0
      %632 = vmatpush1.bf16.msra.mxu0 %v582
      %633 = vmatprep.subr.bf16.mxu0 0
      %634 = vmatpush1.bf16.msra.mxu0 %v583
      %635 = vmatprep.subr.bf16.mxu0 0
      %636 = vmatpush1.bf16.msra.mxu0 %v584
      %637 = vmatprep.subr.bf16.mxu0 0
      %638 = vmatpush1.bf16.msra.mxu0 %v585
      %639 = vmatprep.subr.bf16.mxu0 0
      %640 = vmatpush1.bf16.msra.mxu0 %v586
      %641 = vmatprep.subr.bf16.mxu0 0
      %642 = vmatpush1.bf16.msra.mxu0 %v587
      %643 = vmatprep.subr.bf16.mxu0 0
      %644 = vmatpush1.bf16.msra.mxu0 %v588
      %645 = vmatprep.subr.bf16.mxu0 0
      %646 = vmatpush1.bf16.msra.mxu0 %v589
      %647 = vmatprep.subr.bf16.mxu0 0
      %648 = vmatpush1.bf16.msra.mxu0 %v590
      %649 = vmatprep.subr.bf16.mxu0 0
      %650 = vmatpush1.bf16.msra.mxu0 %v591
      %651 = vmatprep.subr.bf16.mxu0 0
      %652 = vmatpush1.bf16.msra.mxu0 %v592
      %653 = vmatprep.subr.bf16.mxu0 0
      %654 = vmatpush1.bf16.msra.mxu0 %v593
      %655 = vmatprep.subr.bf16.mxu0 0
      %656 = vmatpush1.bf16.msra.mxu0 0
      %657 = vmatprep.subr.bf16.mxu0 0
      %658 = vmatpush1.bf16.msra.mxu0 0
      %659 = vmatprep.subr.bf16.mxu0 0
      %660 = vmatpush1.bf16.msra.mxu0 0
      %661 = vmatprep.subr.bf16.mxu0 0
      %662 = vmatpush1.bf16.msra.mxu0 0
      %663 = vmatprep.mubr.bf16.mxu0 %v608
      %664 = vmatmul.mubr.bf16.gmra.mrb[0].mxu0 %v445
      %v665 = vpop.f32.mrb[0].mxu0
      %v666 = vadd.f32 0.0, %v665
      %v667 = vpop.f32.mrb[0].mxu0
      %v668 = vpop.f32.mrb[0].mxu0
      %v669 = vadd.f32 0.0, %v668
      %v670 = vpop.f32.mrb[0].mxu0
      %671 = vmatprep.mubr.bf16.mxu0 %v611
      %672 = vmatmul.mubr.bf16.gmra.mrb[0].mxu0 %v447
      %v673 = vpop.f32.mrb[0].mxu0
      %v674 = vadd.f32 0.0, %v673
      %v675 = vpop.f32.mrb[0].mxu0
      %v676 = vpop.f32.mrb[0].mxu0
      %v677 = vadd.f32 0.0, %v676
      %v678 = vpop.f32.mrb[0].mxu0
      %679 = vmatprep.mubr.bf16.mxu0 %v614
      %680 = vmatmul.mubr.bf16.gmra.mrb[0].mxu0 %v449
      %v681 = vpop.f32.mrb[0].mxu0
      %v682 = vadd.f32 0.0, %v681
      %v683 = vpop.f32.mrb[0].mxu0
      %v684 = vpop.f32.mrb[0].mxu0
      %v685 = vadd.f32 0.0, %v684
      %v686 = vpop.f32.mrb[0].mxu0
      %687 = vmatprep.mubr.bf16.mxu0 %v617
      %688 = vmatmul.mubr.bf16.gmra.mrb[0].mxu0 %v451
      %v689 = vpop.f32.mrb[0].mxu0
      %v690 = vadd.f32 0.0, %v689
      %v691 = vpop.f32.mrb[0].mxu0
      %v692 = vpop.f32.mrb[0].mxu0
      %v693 = vadd.f32 0.0, %v692
      %v694 = vpop.f32.mrb[0].mxu0
      %695 = vmatprep.mubr.bf16.mxu0 %v620
      %696 = vmatmul.mubr.bf16.gmra.mrb[0].mxu0 %v453
      %v697 = vpop.f32.mrb[0].mxu0
      %v698 = vadd.f32 0.0, %v697
      %v699 = vpop.f32.mrb[0].mxu0
      %v700 = vpop.f32.mrb[0].mxu0
      %v701 = vadd.f32 0.0, %v700
      %v702 = vpop.f32.mrb[0].mxu0
      %703 = vmatprep.mubr.bf16.mxu0 %v623
      %704 = vmatmul.mubr.bf16.gmra.mrb[0].mxu0 %v455
      %v705 = vpop.f32.mrb[0].mxu0
      %v706 = vadd.f32 0.0, %v705
      %v707 = vpop.f32.mrb[0].mxu0
      %v708 = vpop.f32.mrb[0].mxu0
      %v709 = vadd.f32 0.0, %v708
      %v710 = vpop.f32.mrb[0].mxu0
      %711 = vmatprep.mubr.bf16.mxu0 %v626
      %712 = vmatmul.mubr.bf16.gmra.mrb[0].mxu0 %v457
      %v713 = vpop.f32.mrb[0].mxu0
      %v714 = vadd.f32 0.0, %v713
      %v715 = vpop.f32.mrb[0].mxu0
      %v716 = vpop.f32.mrb[0].mxu0
      %v717 = vadd.f32 0.0, %v716
      %v718 = vpop.f32.mrb[0].mxu0
      %719 = vmatprep.mubr.bf16.mxu0 %v629
      %720 = vmatmul.mubr.bf16.gmra.mrb[0].mxu0 %v479
      %v721 = vpop.f32.mrb[0].mxu0
      %v722 = vadd.f32 0.0, %v721
      %v723 = vpop.f32.mrb[0].mxu0
      %v724 = vpop.f32.mrb[0].mxu0
      %v725 = vadd.f32 0.0, %v724
      %v726 = vpop.f32.mrb[0].mxu0
      %727 = vdwg.mxu0
      %v752 = vunpack.c.l.b16 %v485
      %v753 = vunpack.c.l.b16 %v486
      %v754 = vunpack.c.l.b16 %v487
      %v755 = vunpack.c.l.b16 %v488
      %v756 = vunpack.c.l.b16 %v489
      %v757 = vunpack.c.l.b16 %v490
      %v758 = vunpack.c.l.b16 %v491
      %v759 = vunpack.c.l.b16 %v492
      %v760 = vunpack.c.l.b16 %v493
      %v761 = vunpack.c.l.b16 %v494
      %v762 = vunpack.c.l.b16 %v495
      %v763 = vunpack.c.l.b16 %v496
      %v764 = vunpack.c.l.b16 %v497
      %v765 = vunpack.c.l.b16 %v498
      %v766 = vunpack.c.l.b16 %v499
      %v767 = vunpack.c.l.b16 %v500
      %v768 = vunpack.c.l.b16 %v501
      %v769 = vunpack.c.l.b16 %v502
      %v770 = vunpack.c.l.b16 %v503
      %v771 = vunpack.c.l.b16 %v504
      %v772 = vunpack.c.l.b16 %v505
      %v773 = vunpack.c.l.b16 %v506
      %v774 = vunpack.c.l.b16 %v507
      %v775 = vunpack.c.l.b16 %v508
      %v776 = vpack.c.b16 %v753, %v752
      %v777 = vpack.c.b16 %v755, %v754
      %v778 = vpack.c.b16 %v757, %v756
      %v779 = vpack.c.b16 %v759, %v758
      %v780 = vpack.c.b16 %v761, %v760
      %v781 = vpack.c.b16 %v763, %v762
      %v782 = vpack.c.b16 %v765, %v764
      %v783 = vpack.c.b16 %v767, %v766
      %v784 = vpack.c.b16 %v769, %v768
      %v785 = vpack.c.b16 %v771, %v770
      %v786 = vpack.c.b16 %v773, %v772
      %v787 = vpack.c.b16 %v775, %v774
      %v801 = vsel %vm606, %v444, 0
      %803 = vmatprep.subr.bf16.mxu0 0
      %804 = vmatpush1.bf16.msra.mxu0 %v776
      %805 = vmatprep.subr.bf16.mxu0 0
      %806 = vmatpush1.bf16.msra.mxu0 %v777
      %807 = vmatprep.subr.bf16.mxu0 0
      %808 = vmatpush1.bf16.msra.mxu0 %v778
      %809 = vmatprep.subr.bf16.mxu0 0
      %810 = vmatpush1.bf16.msra.mxu0 %v779
      %811 = vmatprep.subr.bf16.mxu0 0
      %812 = vmatpush1.bf16.msra.mxu0 %v780
      %813 = vmatprep.subr.bf16.mxu0 0
      %814 = vmatpush1.bf16.msra.mxu0 %v781
      %815 = vmatprep.subr.bf16.mxu0 0
      %816 = vmatpush1.bf16.msra.mxu0 %v782
      %817 = vmatprep.subr.bf16.mxu0 0
      %818 = vmatpush1.bf16.msra.mxu0 %v783
      %819 = vmatprep.subr.bf16.mxu0 0
      %820 = vmatpush1.bf16.msra.mxu0 %v784
      %821 = vmatprep.subr.bf16.mxu0 0
      %822 = vmatpush1.bf16.msra.mxu0 %v785
      %823 = vmatprep.subr.bf16.mxu0 0
      %824 = vmatpush1.bf16.msra.mxu0 %v786
      %825 = vmatprep.subr.bf16.mxu0 0
      %826 = vmatpush1.bf16.msra.mxu0 %v787
      %827 = vmatprep.subr.bf16.mxu0 0
      %828 = vmatpush1.bf16.msra.mxu0 0
      %829 = vmatprep.subr.bf16.mxu0 0
      %830 = vmatpush1.bf16.msra.mxu0 0
      %831 = vmatprep.subr.bf16.mxu0 0
      %832 = vmatpush1.bf16.msra.mxu0 0
      %833 = vmatprep.subr.bf16.mxu0 0
      %834 = vmatpush1.bf16.msra.mxu0 0
      %835 = vmatprep.mubr.bf16.mxu0 %v801
      %836 = vmatmul.mubr.bf16.gmra.mrb[0].mxu0 %v443
      %v837 = vpop.f32.mrb[0].mxu0
      %v838 = vadd.f32 %v666, %v837
      %v839 = vpop.f32.mrb[0].mxu0
      %v840 = vpop.f32.mrb[0].mxu0
      %v841 = vadd.f32 %v669, %v840
      %v842 = vpop.f32.mrb[0].mxu0
      %843 = vmatprep.mubr.bf16.mxu0 %v608
      %844 = vmatmul.mubr.bf16.gmra.mrb[0].mxu0 %v445
      %v845 = vpop.f32.mrb[0].mxu0
      %v846 = vadd.f32 %v674, %v845
      %v847 = vpop.f32.mrb[0].mxu0
      %v848 = vpop.f32.mrb[0].mxu0
      %v849 = vadd.f32 %v677, %v848
      %v850 = vpop.f32.mrb[0].mxu0
      %851 = vmatprep.mubr.bf16.mxu0 %v611
      %852 = vmatmul.mubr.bf16.gmra.mrb[0].mxu0 %v447
      %v853 = vpop.f32.mrb[0].mxu0
      %v854 = vadd.f32 %v682, %v853
      %v855 = vpop.f32.mrb[0].mxu0
      %v856 = vpop.f32.mrb[0].mxu0
      %v857 = vadd.f32 %v685, %v856
      %v858 = vpop.f32.mrb[0].mxu0
      %859 = vmatprep.mubr.bf16.mxu0 %v614
      %860 = vmatmul.mubr.bf16.gmra.mrb[0].mxu0 %v449
      %v861 = vpop.f32.mrb[0].mxu0
      %v862 = vadd.f32 %v690, %v861
      %v863 = vpop.f32.mrb[0].mxu0
      %v864 = vpop.f32.mrb[0].mxu0
      %v865 = vadd.f32 %v693, %v864
      %v866 = vpop.f32.mrb[0].mxu0
      %867 = vmatprep.mubr.bf16.mxu0 %v617
      %868 = vmatmul.mubr.bf16.gmra.mrb[0].mxu0 %v451
      %v869 = vpop.f32.mrb[0].mxu0
      %v870 = vadd.f32 %v698, %v869
      %v871 = vpop.f32.mrb[0].mxu0
      %v872 = vpop.f32.mrb[0].mxu0
      %v873 = vadd.f32 %v701, %v872
      %v874 = vpop.f32.mrb[0].mxu0
      %875 = vmatprep.mubr.bf16.mxu0 %v620
      %876 = vmatmul.mubr.bf16.gmra.mrb[0].mxu0 %v453
      %v877 = vpop.f32.mrb[0].mxu0
      %v878 = vadd.f32 %v706, %v877
      %v879 = vpop.f32.mrb[0].mxu0
      %v880 = vpop.f32.mrb[0].mxu0
      %v881 = vadd.f32 %v709, %v880
      %v882 = vpop.f32.mrb[0].mxu0
      %883 = vmatprep.mubr.bf16.mxu0 %v623
      %884 = vmatmul.mubr.bf16.gmra.mrb[0].mxu0 %v455
      %v885 = vpop.f32.mrb[0].mxu0
      %v886 = vadd.f32 %v714, %v885
      %v887 = vpop.f32.mrb[0].mxu0
      %v888 = vpop.f32.mrb[0].mxu0
      %v889 = vadd.f32 %v717, %v888
      %v890 = vpop.f32.mrb[0].mxu0
      %891 = vmatprep.mubr.bf16.mxu0 %v626
      %892 = vmatmul.mubr.bf16.gmra.mrb[0].mxu0 %v457
      %v893 = vpop.f32.mrb[0].mxu0
      %v894 = vadd.f32 %v722, %v893
      %v895 = vpop.f32.mrb[0].mxu0
      %v896 = vpop.f32.mrb[0].mxu0
      %v897 = vadd.f32 %v725, %v896
      %v898 = vpop.f32.mrb[0].mxu0
      %899 = vdwg.mxu0
      %s900 = scalar_lea.vmem %s2, 192
      %v901 = vld [vmem:[%s900] sm:$0xf]
      %v902 = vld [vmem:[%s900 + $0x4] sm:$0xf]
      %v903 = vld [vmem:[%s900 + $0x8] sm:$0xf]
      %v904 = vld [vmem:[%s900 + $0xc] sm:$0xf]
      %v905 = vld [vmem:[%s900 + $0x10] sm:$0xf]
      %v906 = vld [vmem:[%s900 + $0x14] sm:$0xf]
      %v907 = vld [vmem:[%s900 + $0x18] sm:$0xf]
      %v908 = vld [vmem:[%s900 + $0x1c] sm:$0xf]
      %v909 = vld [vmem:[%s900 + $0x20] sm:$0xf]
      %v910 = vld [vmem:[%s900 + $0x24] sm:$0xf]
      %v911 = vld [vmem:[%s900 + $0x28] sm:$0xf]
      %v912 = vld [vmem:[%s900 + $0x2c] sm:$0xf]
      %v913 = vld [vmem:[%s900 + $0x30] sm:$0xf]
      %v914 = vld [vmem:[%s900 + $0x34] sm:$0xf]
      %v915 = vld [vmem:[%s900 + $0x38] sm:$0xf]
      %v916 = vld [vmem:[%s900 + $0x3c] sm:$0xf]
      %v917 = vld [vmem:[%s900 + $0x40] sm:$0xf]
      %v918 = vld [vmem:[%s900 + $0x44] sm:$0xf]
      %v919 = vld [vmem:[%s900 + $0x48] sm:$0xf]
      %v920 = vld [vmem:[%s900 + $0x4c] sm:$0xf]
      %v921 = vld [vmem:[%s900 + $0x50] sm:$0xf]
      %v922 = vld [vmem:[%s900 + $0x54] sm:$0xf]
      %v923 = vld [vmem:[%s900 + $0x58] sm:$0xf]
      %v924 = vld [vmem:[%s900 + $0x5c] sm:$0xf]
      %v949 = vunpack.c.l.b16 %v901
      %v950 = vunpack.c.l.b16 %v902
      %v951 = vunpack.c.l.b16 %v903
      %v952 = vunpack.c.l.b16 %v904
      %v953 = vunpack.c.l.b16 %v905
      %v954 = vunpack.c.l.b16 %v906
      %v955 = vunpack.c.l.b16 %v907
      %v956 = vunpack.c.l.b16 %v908
      %v957 = vunpack.c.l.b16 %v909
      %v958 = vunpack.c.l.b16 %v910
      %v959 = vunpack.c.l.b16 %v911
      %v960 = vunpack.c.l.b16 %v912
      %v961 = vunpack.c.l.b16 %v913
      %v962 = vunpack.c.l.b16 %v914
      %v963 = vunpack.c.l.b16 %v915
      %v964 = vunpack.c.l.b16 %v916
      %v965 = vunpack.c.l.b16 %v917
      %v966 = vunpack.c.l.b16 %v918
      %v967 = vunpack.c.l.b16 %v919
      %v968 = vunpack.c.l.b16 %v920
      %v969 = vunpack.c.l.b16 %v921
      %v970 = vunpack.c.l.b16 %v922
      %v971 = vunpack.c.l.b16 %v923
      %v972 = vunpack.c.l.b16 %v924
      %v973 = vpack.c.b16 %v950, %v949
      %v974 = vpack.c.b16 %v952, %v951
      %v975 = vpack.c.b16 %v954, %v953
      %v976 = vpack.c.b16 %v956, %v955
      %v977 = vpack.c.b16 %v958, %v957
      %v978 = vpack.c.b16 %v960, %v959
      %v979 = vpack.c.b16 %v962, %v961
      %v980 = vpack.c.b16 %v964, %v963
      %v981 = vpack.c.b16 %v966, %v965
      %v982 = vpack.c.b16 %v968, %v967
      %v983 = vpack.c.b16 %v970, %v969
      %v984 = vpack.c.b16 %v972, %v971
      %v998 = vsel %vm606, %v482, 0
      %1000 = vmatprep.subr.bf16.mxu0 0
      %1001 = vmatpush1.bf16.msra.mxu0 %v973
      %1002 = vmatprep.subr.bf16.mxu0 0
      %1003 = vmatpush1.bf16.msra.mxu0 %v974
      %1004 = vmatprep.subr.bf16.mxu0 0
      %1005 = vmatpush1.bf16.msra.mxu0 %v975
      %1006 = vmatprep.subr.bf16.mxu0 0
      %1007 = vmatpush1.bf16.msra.mxu0 %v976
      %1008 = vmatprep.subr.bf16.mxu0 0
      %1009 = vmatpush1.bf16.msra.mxu0 %v977
      %1010 = vmatprep.subr.bf16.mxu0 0
      %1011 = vmatpush1.bf16.msra.mxu0 %v978
      %1012 = vmatprep.subr.bf16.mxu0 0
      %1013 = vmatpush1.bf16.msra.mxu0 %v979
      %1014 = vmatprep.subr.bf16.mxu0 0
      %1015 = vmatpush1.bf16.msra.mxu0 %v980
      %1016 = vmatprep.subr.bf16.mxu0 0
      %1017 = vmatpush1.bf16.msra.mxu0 %v981
      %1018 = vmatprep.subr.bf16.mxu0 0
      %1019 = vmatpush1.bf16.msra.mxu0 %v982
      %1020 = vmatprep.subr.bf16.mxu0 0
      %1021 = vmatpush1.bf16.msra.mxu0 %v983
      %1022 = vmatprep.subr.bf16.mxu0 0
      %1023 = vmatpush1.bf16.msra.mxu0 %v984
      %1024 = vmatprep.subr.bf16.mxu0 0
      %1025 = vmatpush1.bf16.msra.mxu0 0
      %1026 = vmatprep.subr.bf16.mxu0 0
      %1027 = vmatpush1.bf16.msra.mxu0 0
      %1028 = vmatprep.subr.bf16.mxu0 0
      %1029 = vmatpush1.bf16.msra.mxu0 0
      %1030 = vmatprep.subr.bf16.mxu0 0
      %1031 = vmatpush1.bf16.msra.mxu0 0
      %1032 = vmatprep.mubr.bf16.mxu0 %v611
      %1033 = vmatmul.mubr.bf16.gmra.mrb[0].mxu0 %v447
      %v1034 = vpop.f32.mrb[0].mxu0
      %v1035 = vadd.f32 0.0, %v1034
      %v1036 = vpop.f32.mrb[0].mxu0
      %v1037 = vpop.f32.mrb[0].mxu0
      %v1038 = vadd.f32 0.0, %v1037
      %v1039 = vpop.f32.mrb[0].mxu0
      %1040 = vmatprep.mubr.bf16.mxu0 %v614
      %1041 = vmatmul.mubr.bf16.gmra.mrb[0].mxu0 %v449
      %v1042 = vpop.f32.mrb[0].mxu0
      %v1043 = vadd.f32 0.0, %v1042
      %v1044 = vpop.f32.mrb[0].mxu0
      %v1045 = vpop.f32.mrb[0].mxu0
      %v1046 = vadd.f32 0.0, %v1045
      %v1047 = vpop.f32.mrb[0].mxu0
      %1048 = vmatprep.mubr.bf16.mxu0 %v617
      %1049 = vmatmul.mubr.bf16.gmra.mrb[0].mxu0 %v451
      %v1050 = vpop.f32.mrb[0].mxu0
      %v1051 = vadd.f32 0.0, %v1050
      %v1052 = vpop.f32.mrb[0].mxu0
      %v1053 = vpop.f32.mrb[0].mxu0
      %v1054 = vadd.f32 0.0, %v1053
      %v1055 = vpop.f32.mrb[0].mxu0
      %1056 = vmatprep.mubr.bf16.mxu0 %v620
      %1057 = vmatmul.mubr.bf16.gmra.mrb[0].mxu0 %v453
      %v1058 = vpop.f32.mrb[0].mxu0
      %v1059 = vadd.f32 0.0, %v1058
      %v1060 = vpop.f32.mrb[0].mxu0
      %v1061 = vpop.f32.mrb[0].mxu0
      %v1062 = vadd.f32 0.0, %v1061
      %v1063 = vpop.f32.mrb[0].mxu0
      %1064 = vmatprep.mubr.bf16.mxu0 %v623
      %1065 = vmatmul.mubr.bf16.gmra.mrb[0].mxu0 %v455
      %v1066 = vpop.f32.mrb[0].mxu0
      %v1067 = vadd.f32 0.0, %v1066
      %v1068 = vpop.f32.mrb[0].mxu0
      %v1069 = vpop.f32.mrb[0].mxu0
      %v1070 = vadd.f32 0.0, %v1069
      %v1071 = vpop.f32.mrb[0].mxu0
      %1072 = vmatprep.mubr.bf16.mxu0 %v626
      %1073 = vmatmul.mubr.bf16.gmra.mrb[0].mxu0 %v457
      %v1074 = vpop.f32.mrb[0].mxu0
      %v1075 = vadd.f32 0.0, %v1074
      %v1076 = vpop.f32.mrb[0].mxu0
      %v1077 = vpop.f32.mrb[0].mxu0
      %v1078 = vadd.f32 0.0, %v1077
      %v1079 = vpop.f32.mrb[0].mxu0
      %1080 = vmatprep.mubr.bf16.mxu0 %v629
      %1081 = vmatmul.mubr.bf16.gmra.mrb[0].mxu0 %v479
      %v1082 = vpop.f32.mrb[0].mxu0
      %v1083 = vadd.f32 0.0, %v1082
      %v1084 = vpop.f32.mrb[0].mxu0
      %v1085 = vpop.f32.mrb[0].mxu0
      %v1086 = vadd.f32 0.0, %v1085
      %v1087 = vpop.f32.mrb[0].mxu0
      %1088 = vmatprep.mubr.bf16.mxu0 %v998
      %1089 = vmatmul.mubr.bf16.gmra.mrb[0].mxu0 %v481
      %v1090 = vpop.f32.mrb[0].mxu0
      %v1091 = vadd.f32 0.0, %v1090
      %v1092 = vpop.f32.mrb[0].mxu0
      %v1093 = vpop.f32.mrb[0].mxu0
      %v1094 = vadd.f32 0.0, %v1093
      %v1095 = vpop.f32.mrb[0].mxu0
      %1096 = vdwg.mxu0
      %v1097 = vadd.f32 %v838, %v1035
      %v1098 = vadd.f32 %v841, %v1038
      %v1099 = vadd.f32 %v846, %v1043
      %v1100 = vadd.f32 %v849, %v1046
      %v1101 = vadd.f32 %v854, %v1051
      %v1102 = vadd.f32 %v857, %v1054
      %v1103 = vadd.f32 %v862, %v1059
      %v1104 = vadd.f32 %v865, %v1062
      %v1105 = vadd.f32 %v870, %v1067
      %v1106 = vadd.f32 %v873, %v1070
      %v1107 = vadd.f32 %v878, %v1075
      %v1108 = vadd.f32 %v881, %v1078
      %v1109 = vadd.f32 %v886, %v1083
      %v1110 = vadd.f32 %v889, %v1086
      %v1111 = vadd.f32 %v894, %v1091
      %v1112 = vadd.f32 %v897, %v1094
      %v1113 = vld [vmem:[%s3] sm:$0x1]
      %v1115 = vlaneseq
      %v1116 = vshrl.u32 %v1115, 7
      %v1117 = vsub.s32 0, %v1116
      %v1118 = vrot.slane %v1113, %v1117
      %v1120 = vadd.f32 %v1097, %v1118
      %v1121 = vadd.f32 %v1098, %v1118
      %v1122 = vadd.f32 %v1099, %v1118
      %v1123 = vadd.f32 %v1100, %v1118
      %v1124 = vadd.f32 %v1101, %v1118
      %v1125 = vadd.f32 %v1102, %v1118
      %v1126 = vadd.f32 %v1103, %v1118
      %v1127 = vadd.f32 %v1104, %v1118
      %v1128 = vadd.f32 %v1105, %v1118
      %v1129 = vadd.f32 %v1106, %v1118
      %v1130 = vadd.f32 %v1107, %v1118
      %v1131 = vadd.f32 %v1108, %v1118
      %v1132 = vadd.f32 %v1109, %v1118
      %v1133 = vadd.f32 %v1110, %v1118
      %v1134 = vadd.f32 %v1111, %v1118
      %v1135 = vadd.f32 %v1112, %v1118
      %v1136 = vld [vmem:[%s4] sm:$0x1]
      %v1138 = vlaneseq
      %v1139 = vshrl.u32 %v1138, 7
      %v1140 = vsub.s32 0, %v1139
      %v1141 = vrot.slane %v1136, %v1140
      %v1143 = vmul.f32 %v1120, %v1141
      %v1144 = vmul.f32 %v1121, %v1141
      %v1145 = vmul.f32 %v1122, %v1141
      %v1146 = vmul.f32 %v1123, %v1141
      %v1147 = vmul.f32 %v1124, %v1141
      %v1148 = vmul.f32 %v1125, %v1141
      %v1149 = vmul.f32 %v1126, %v1141
      %v1150 = vmul.f32 %v1127, %v1141
      %v1151 = vmul.f32 %v1128, %v1141
      %v1152 = vmul.f32 %v1129, %v1141
      %v1153 = vmul.f32 %v1130, %v1141
      %v1154 = vmul.f32 %v1131, %v1141
      %v1155 = vmul.f32 %v1132, %v1141
      %v1156 = vmul.f32 %v1133, %v1141
      %v1157 = vmul.f32 %v1134, %v1141
      %v1158 = vmul.f32 %v1135, %v1141
      %vm1159 = vcmask 261120
      %v1160 = vsel %vm1159, %v1143, 0.0
      %1161 = vadd.xlane.f32.xlu0 %v1160
      %v1162 = vpop.xlane.xlu0 %1161
      %v1163 = vsel %vm1159, %v1144, 0.0
      %1164 = vadd.xlane.f32.xlu0 %v1163
      %v1165 = vpop.xlane.xlu0 %1164
      %v1166 = vsel %vm1159, %v1145, 0.0
      %1167 = vadd.xlane.f32.xlu0 %v1166
      %v1168 = vpop.xlane.xlu0 %1167
      %v1169 = vsel %vm1159, %v1146, 0.0
      %1170 = vadd.xlane.f32.xlu0 %v1169
      %v1171 = vpop.xlane.xlu0 %1170
      %v1172 = vsel %vm1159, %v1147, 0.0
      %1173 = vadd.xlane.f32.xlu0 %v1172
      %v1174 = vpop.xlane.xlu0 %1173
      %v1175 = vsel %vm1159, %v1148, 0.0
      %1176 = vadd.xlane.f32.xlu0 %v1175
      %v1177 = vpop.xlane.xlu0 %1176
      %v1178 = vsel %vm1159, %v1149, 0.0
      %1179 = vadd.xlane.f32.xlu0 %v1178
      %v1180 = vpop.xlane.xlu0 %1179
      %v1181 = vsel %vm1159, %v1150, 0.0
      %1182 = vadd.xlane.f32.xlu0 %v1181
      %v1183 = vpop.xlane.xlu0 %1182
      %v1184 = vsel %vm1159, %v1151, 0.0
      %1185 = vadd.xlane.f32.xlu0 %v1184
      %v1186 = vpop.xlane.xlu0 %1185
      %v1187 = vsel %vm1159, %v1152, 0.0
      %1188 = vadd.xlane.f32.xlu0 %v1187
      %v1189 = vpop.xlane.xlu0 %1188
      %v1190 = vsel %vm1159, %v1153, 0.0
      %1191 = vadd.xlane.f32.xlu0 %v1190
      %v1192 = vpop.xlane.xlu0 %1191
      %v1193 = vsel %vm1159, %v1154, 0.0
      %1194 = vadd.xlane.f32.xlu0 %v1193
      %v1195 = vpop.xlane.xlu0 %1194
      %v1196 = vsel %vm1159, %v1155, 0.0
      %1197 = vadd.xlane.f32.xlu0 %v1196
      %v1198 = vpop.xlane.xlu0 %1197
      %v1199 = vsel %vm1159, %v1156, 0.0
      %1200 = vadd.xlane.f32.xlu0 %v1199
      %v1201 = vpop.xlane.xlu0 %1200
      %v1202 = vsel %vm1159, %v1157, 0.0
      %1203 = vadd.xlane.f32.xlu0 %v1202
      %v1204 = vpop.xlane.xlu0 %1203
      %v1205 = vsel %vm1159, %v1158, 0.0
      %1206 = vadd.xlane.f32.xlu0 %v1205
      %v1207 = vpop.xlane.xlu0 %1206
      %v1208 = vld [vmem:[#allocation2] sm:$0x1]
      %v1210 = vlaneseq
      %v1211 = vshrl.u32 %v1210, 7
      %v1212 = vsub.s32 0, %v1211
      %v1213 = vrot.slane %v1208, %v1212
      %v1215 = vadd.f32 %v1162, %v1213
      %v1216 = vadd.f32 %v1165, %v1213
      %v1217 = vadd.f32 %v1168, %v1213
      %v1218 = vadd.f32 %v1171, %v1213
      %v1219 = vadd.f32 %v1174, %v1213
      %v1220 = vadd.f32 %v1177, %v1213
      %v1221 = vadd.f32 %v1180, %v1213
      %v1222 = vadd.f32 %v1183, %v1213
      %v1223 = vadd.f32 %v1186, %v1213
      %v1224 = vadd.f32 %v1189, %v1213
      %v1225 = vadd.f32 %v1192, %v1213
      %v1226 = vadd.f32 %v1195, %v1213
      %v1227 = vadd.f32 %v1198, %v1213
      %v1228 = vadd.f32 %v1201, %v1213
      %v1229 = vadd.f32 %v1204, %v1213
      %v1230 = vadd.f32 %v1207, %v1213
      %vm1231 = vcmask 7168
      %1232 = vst.msk [vmem:[%s372] sm:$0xff] %vm1231, %v1215
      %1233 = vst.msk [vmem:[%s372 + $0x8] sm:$0xff] %vm1231, %v1216
      %1234 = vst.msk [vmem:[%s372 + $0x10] sm:$0xff] %vm1231, %v1217
      %1235 = vst.msk [vmem:[%s372 + $0x18] sm:$0xff] %vm1231, %v1218
      %1236 = vst.msk [vmem:[%s372 + $0x20] sm:$0xff] %vm1231, %v1219
      %1237 = vst.msk [vmem:[%s372 + $0x28] sm:$0xff] %vm1231, %v1220
      %1238 = vst.msk [vmem:[%s372 + $0x30] sm:$0xff] %vm1231, %v1221
      %1239 = vst.msk [vmem:[%s372 + $0x38] sm:$0xff] %vm1231, %v1222
      %1240 = vst.msk [vmem:[%s372 + $0x40] sm:$0xff] %vm1231, %v1223
      %1241 = vst.msk [vmem:[%s372 + $0x48] sm:$0xff] %vm1231, %v1224
      %1242 = vst.msk [vmem:[%s372 + $0x50] sm:$0xff] %vm1231, %v1225
      %1243 = vst.msk [vmem:[%s372 + $0x58] sm:$0xff] %vm1231, %v1226
      %1244 = vst.msk [vmem:[%s372 + $0x60] sm:$0xff] %vm1231, %v1227
      %1245 = vst.msk [vmem:[%s372 + $0x68] sm:$0xff] %vm1231, %v1228
      %1246 = vst.msk [vmem:[%s372 + $0x70] sm:$0xff] %vm1231, %v1229
      %1247 = vst.msk [vmem:[%s372 + $0x78] sm:$0xff] %vm1231, %v1230
      %s1248 = smul.u32 16, %s24
      %p1249 = scmp.lt.s32.totalorder %s23, 1
      %s1250 = scalar_select %p1249, %s23, 1
      %p1251 = scmp.lt.s32.totalorder %s1248, 31
      %s1252 = scalar_select %p1251, %s1248, 31
      %s1253 = smul.addr %s1250, 32
      %s1254 = sadd.s32 %s1252, %s1253
      %s1255 = smul.addr %s1254, 8
      %s1256 = scalar_lea.vmem %s6, %s1255
      // Predicated region
      $region45: #{sea_forward.9} parent=43 // pred_check
        %p1257 = pneg %p195
      $region46: #{sea_forward.9} parent=43 // pred_check_branch
        %1259 = sbr.rel (%p1257) target = $region48
      $region47: #{sea_forward.9} parent=43 // pred_region
        %s1260 = smul.u32 16, %s24
      $region48: #{sea_forward.9} parent=43 // pred_fallthru
        _
    $region44: #{sea_forward.9} parent=5 // pred_fallthru
      _
    %p1261 = scmp.le.s32.totalorder 2, %s14
    // Predicated region
    $region49: #{sea_forward.9} parent=5 // pred_check
      %p1262 = pneg %p1261
    $region50: #{sea_forward.9} parent=5 // pred_check_branch
      %1264 = sbr.rel (%p1262) target = $region52
    $region51: #{sea_forward.9} parent=5 // pred_region
      %s1265 = ssub.s32 %s14, 2
      // Predicated region
      $region53: #{sea_forward.9} parent=51 // pred_check
        %p1266 = pneg %p201
      $region54: #{sea_forward.9} parent=51 // pred_check_branch
        %1268 = sbr.rel (%p1266) target = $region56
      $region55: #{sea_forward.9} parent=51 // pred_region
        %s1269 = smul.u32 16, %s26
        %p1270 = scmp.lt.s32.totalorder %s25, 1
        %s1271 = scalar_select %p1270, %s25, 1
        %p1272 = scmp.lt.s32.totalorder %s1269, 31
        %s1273 = scalar_select %p1272, %s1269, 31
        %s1274 = smul.addr %s1271, 32
        %s1275 = sadd.s32 %s1273, %s1274
        %s1276 = smul.addr %s1275, 8
        %s1277 = scalar_lea.vmem %s6, %s1276
      $region56: #{sea_forward.9} parent=51 // pred_fallthru
        _
    $region52: #{sea_forward.9} parent=5 // pred_fallthru
      _
  $region6: #{sea_forward.9} parent=0 // loop_footer
    %s18 = sadd.s32 1, %s14
  $region7: #{sea_forward.9} parent=0 // loop_footer_branch
    %13 = sbr.rel target = $region3
  $region8: #{sea_forward.9} parent=0 // loop_exit
    _

</llo_original>
